<compile_context>
chip_gen: v7x
topology: tpu7x:2x2x1
jax: 0.10.0
libtpu: 0.0.40
codegen_flags: <defaults>
</compile_context>

<pallas_src>
import functools

import jax
import jax.numpy as jnp
import numpy as np
from jax import lax
from jax.experimental import pallas as pl
from jax.experimental.pallas import tpu as pltpu


# ---------------------------------------------------------------------------
# Stages 1 & 3: batched row matmul + bias,  out = x @ w + b
# Weight-stationary grid: weight tile on the OUTER axis (reused across the
# inner row-tile sweep), activations stream.
# ---------------------------------------------------------------------------
def _matmul_bias_kernel(x_ref, w_ref, b_ref, o_ref):
    o_ref[...] = (jnp.dot(x_ref[...], w_ref[...],
                          preferred_element_type=jnp.float32)
                  + b_ref[...]).astype(o_ref.dtype)


def _matmul_bias(x, w, b, *, out_dtype=jnp.float32, tm=512, tn=1024,
                 vmem_budget=12 * 1024 * 1024):
    """x: (M, K), w: (K, N), b: (N,) -> (M, N) out_dtype. bf16 x/w recommended."""
    M, K = x.shape
    K2, N = w.shape
    assert K == K2
    bx = jnp.dtype(x.dtype).itemsize
    bw = jnp.dtype(w.dtype).itemsize
    bo = jnp.dtype(out_dtype).itemsize

    tm = min(tm, M)                      # full dim or a multiple of 8
    tn = min(tn, N)                      # full dim or a multiple of 128

    def fits(tm_, tn_):
        # double-buffered x, w, bias, out tiles
        return 2 * (tm_ * K * bx + K * tn_ * bw + tn_ * 4 + tm_ * tn_ * bo) \
            <= vmem_budget

    while not fits(tm, tn) and tn > 128:
        tn = max(128, tn // 2)
    while not fits(tm, tn) and tm > 8 and tm % 16 == 0:
        tm //= 2

    # j (weight/vocab tile) outer, i (row tile) inner -> weight tile stays
    # resident in VMEM across the whole inner sweep; activations stream.
    grid = (pl.cdiv(N, tn), pl.cdiv(M, tm))
    return pl.pallas_call(
        _matmul_bias_kernel,
        out_shape=jax.ShapeDtypeStruct((M, N), out_dtype),
        grid_spec=pltpu.PrefetchScalarGridSpec(
            num_scalar_prefetch=0,
            grid=grid,
            in_specs=[
                pl.BlockSpec((tm, K), lambda j, i: (i, 0)),   # activations
                pl.BlockSpec((K, tn), lambda j, i: (0, j)),   # weights (stationary per j)
                pl.BlockSpec((1, tn), lambda j, i: (0, j)),   # bias
            ],
            out_specs=pl.BlockSpec((tm, tn), lambda j, i: (i, j)),
        ),
        compiler_params=pltpu.CompilerParams(
            dimension_semantics=("parallel", "parallel"),
            vmem_limit_bytes=32 * 1024 * 1024),
    )(x, w, b.reshape(1, N).astype(jnp.float32))


# ---------------------------------------------------------------------------
# Stage 2: LSTM recurrence, batch-first, time-chunked.  Per grid step, `chunk`
# timesteps run in an unrolled fori_loop; only the h-recurrence matmul and the
# gate nonlinearities are on the serial path.  Gate order is [i, f, o | g].
# ---------------------------------------------------------------------------
def _lstm_recurrent_kernel(gx_ref, h0_ref, c0_ref, whh_ref,
                           hseq_ref, hN_ref, cN_ref,
                           h_sc, c_sc, *, hidden, chunk):
    t_step = pl.program_id(1)
    H = hidden

    @pl.when(t_step == 0)
    def _init():
        h_sc[...] = h0_ref[...].astype(jnp.float32)
        c_sc[...] = c0_ref[...].astype(jnp.float32)

    whh = whh_ref[...]                                   # (H, 4H) bf16, once per chunk

    def body(t, carry):
        h_prev, c_prev = carry
        # precomputed input projection (includes both biases), bf16 -> f32
        gx_t = gx_ref[:, pl.ds(t, 1), :][:, 0, :].astype(jnp.float32)   # (Bb, 4H)
        gates = gx_t + jnp.dot(h_prev.astype(jnp.bfloat16), whh,
                               preferred_element_type=jnp.float32)
        # one wide sigmoid over [i | f | o], one tanh over [g]
        sig = jax.nn.sigmoid(gates[:, :3 * H])
        i_g = sig[:, 0 * H:1 * H]
        f_g = sig[:, 1 * H:2 * H]
        o_g = sig[:, 2 * H:3 * H]
        g_g = jnp.tanh(gates[:, 3 * H:4 * H])
        c_new = f_g * c_prev + i_g * g_g
        h_new = o_g * jnp.tanh(c_new)
        hseq_ref[:, pl.ds(t, 1), :] = (
            jnp.expand_dims(h_new, 1).astype(hseq_ref.dtype))
        return h_new, c_new

    # h/c carried in vregs across the chunk; VMEM scratch touched once/chunk.
    h_fin, c_fin = lax.fori_loop(0, chunk, body, (h_sc[...], c_sc[...]),
                                 unroll=True)
    h_sc[...] = h_fin
    c_sc[...] = c_fin

    @pl.when(t_step == pl.num_programs(1) - 1)
    def _finalize():
        hN_ref[...] = h_fin.astype(hN_ref.dtype)
        cN_ref[...] = c_fin.astype(cN_ref.dtype)


def _pick_time_chunk(S, B, H, max_time_chunk=32,
                     vmem_budget=12 * 1024 * 1024):
    """Largest layout-legal (multiple of 8 or == S) divisor of S that fits the
    double-buffered bf16 gx/h_seq blocks in the VMEM budget."""
    per_t = 2 * (B * 4 * H + B * H) * 2          # bf16 gx + h_seq per timestep, 2 bufs
    fixed = 2 * (H * 4 * H) * 2 + 6 * B * H * 4  # W_hh^T bufs + h0/c0/hN/cN + scratch
    cap = max(1, (vmem_budget - fixed) // max(per_t, 1))
    cap = min(int(cap), max_time_chunk)
    best = None
    for d in range(1, S + 1):
        if S % d == 0 and d <= cap and (d % 8 == 0 or d == S):
            best = d
    if best is None:
        # TODO(synk): pad S to a multiple of 8 instead of a full-sequence chunk
        # when no layout-legal divisor fits the budget.
        best = S
    return best


def _permute_gates_rows(a, H):
    """PyTorch LSTM packs gates [i, f, g, o] along the leading 4H axis.
    Reorder to [i, f, o, g] so the kernel applies one sigmoid over 3H cols."""
    return jnp.concatenate([a[0 * H:2 * H], a[3 * H:4 * H], a[2 * H:3 * H]],
                           axis=0)


# ---------------------------------------------------------------------------
# Full forward pass (Pallas equivalent of RNNModule.forward)
# ---------------------------------------------------------------------------
def rnn_module_forward(tokens, prev_state, params, *, max_time_chunk=32):
    """tokens: int32 (B, S); prev_state: (h0, c0) each (1, B, H).
    Returns logits (B, S, V) float32 and (h_N, c_N) each (1, B, H) float32."""
    emb_table = params["embedding"]          # (V, E)
    w_ih = params["w_ih"]                    # (4H, E)
    w_hh = params["w_hh"]                    # (4H, H)
    b_ih = params["b_ih"]                    # (4H,)
    b_hh = params["b_hh"]                    # (4H,)
    w_d = params["w_dense"]                  # (V, H)
    b_d = params["b_dense"]                  # (V,)

    h0, c0 = prev_state
    B, S = tokens.shape
    V, E = emb_table.shape
    H = w_hh.shape[1]

    # glue: embedding gather, batch-first throughout (no transposes)
    embed = jnp.take(emb_table, tokens, axis=0)                    # (B, S, E)

    # gate reorder [i,f,g,o] -> [i,f,o,g]; bf16 weights, f32 bias
    wih_t = jnp.transpose(_permute_gates_rows(w_ih, H)).astype(jnp.bfloat16)  # (E, 4H)
    whh_t = jnp.transpose(_permute_gates_rows(w_hh, H)).astype(jnp.bfloat16)  # (H, 4H)
    bias = _permute_gates_rows(b_ih + b_hh, H)                                # (4H,) f32
    wd_t = jnp.transpose(w_d).astype(jnp.bfloat16)                            # (H, V)

    # ---- stage 1: hoisted input projection (parallel grid, bf16 out) ------
    gx_rows = _matmul_bias(embed.reshape(B * S, E).astype(jnp.bfloat16),
                           wih_t, bias, out_dtype=jnp.bfloat16)
    gx = gx_rows.reshape(B, S, 4 * H)                              # (B, S, 4H) bf16

    # ---- stage 2: recurrence, batch-parallel x time-chunked ----------------
    T = _pick_time_chunk(S, B, H, max_time_chunk)
    block_b = B // 2 if (B >= 16 and (B // 2) % 8 == 0) else B     # 2 TCs on v7x
    nb = B // block_b
    kernel = functools.partial(_lstm_recurrent_kernel, hidden=H, chunk=T)

    h_seq, hN, cN = pl.pallas_call(
        kernel,
        out_shape=(
            jax.ShapeDtypeStruct((B, S, H), jnp.bfloat16),   # all hidden states
            jax.ShapeDtypeStruct((B, H), jnp.float32),       # h_N
            jax.ShapeDtypeStruct((B, H), jnp.float32),       # c_N
        ),
        grid_spec=pltpu.PrefetchScalarGridSpec(
            num_scalar_prefetch=0,
            grid=(nb, S // T),
            in_specs=[
                pl.BlockSpec((block_b, T, 4 * H), lambda b, s: (b, s, 0)),  # gates_x
                pl.BlockSpec((block_b, H), lambda b, s: (b, 0)),            # h0
                pl.BlockSpec((block_b, H), lambda b, s: (b, 0)),            # c0
                pl.BlockSpec((H, 4 * H), lambda b, s: (0, 0)),              # W_hh^T
            ],
            out_specs=[
                pl.BlockSpec((block_b, T, H), lambda b, s: (b, s, 0)),      # h_seq chunk
                pl.BlockSpec((block_b, H), lambda b, s: (b, 0)),            # h_N (resident)
                pl.BlockSpec((block_b, H), lambda b, s: (b, 0)),            # c_N (resident)
            ],
            scratch_shapes=[
                pltpu.VMEM((block_b, H), jnp.float32),   # h carry across chunks
                pltpu.VMEM((block_b, H), jnp.float32),   # c carry across chunks
            ],
        ),
        compiler_params=pltpu.CompilerParams(
            dimension_semantics=("parallel", "arbitrary"),
            vmem_limit_bytes=32 * 1024 * 1024),
    )(gx, h0[0], c0[0], whh_t)

    # ---- stage 3: hoisted vocab projection (weight-stationary tiles) ------
    logits_rows = _matmul_bias(h_seq.reshape(B * S, H), wd_t, b_d,
                               out_dtype=jnp.float32)
    logits = logits_rows.reshape(B, S, V)                          # batch-first already
    return logits, (hN[None], cN[None])


# ---------------------------------------------------------------------------
# Pure-JAX f32 reference (nn.Embedding -> nn.LSTM -> nn.Linear)
# ---------------------------------------------------------------------------
def _reference_forward(tokens, prev_state, params):
    emb = jnp.take(params["embedding"], tokens, axis=0)       # (B, S, E)
    H = params["w_hh"].shape[1]
    wih_t = params["w_ih"].T
    whh_t = params["w_hh"].T
    bias = params["b_ih"] + params["b_hh"]

    def step(carry, x_t):
        h, c = carry
        gates = x_t @ wih_t + h @ whh_t + bias
        i = jax.nn.sigmoid(gates[:, 0 * H:1 * H])
        f = jax.nn.sigmoid(gates[:, 1 * H:2 * H])
        g = jnp.tanh(gates[:, 2 * H:3 * H])
        o = jax.nn.sigmoid(gates[:, 3 * H:4 * H])
        c_new = f * c + i * g
        h_new = o * jnp.tanh(c_new)
        return (h_new, c_new), h_new

    h0, c0 = prev_state
    (hN, cN), hs = jax.lax.scan(step, (h0[0], c0[0]),
                                jnp.transpose(emb, (1, 0, 2)))
    output = jnp.transpose(hs, (1, 0, 2))                     # (B, S, H)
    logits = output @ params["w_dense"].T + params["b_dense"]
    return logits, (hN[None], cN[None])


def make_params(key, n_vocab, embedding_size, lstm_size):
    ks = jax.random.split(key, 7)
    s = 1.0 / np.sqrt(lstm_size)
    return {
        "embedding": jax.random.normal(ks[0], (n_vocab, embedding_size), jnp.float32),
        "w_ih": jax.random.uniform(ks[1], (4 * lstm_size, embedding_size),
                                   jnp.float32, -s, s),
        "w_hh": jax.random.uniform(ks[2], (4 * lstm_size, lstm_size),
                                   jnp.float32, -s, s),
        "b_ih": jax.random.uniform(ks[3], (4 * lstm_size,), jnp.float32, -s, s),
        "b_hh": jax.random.uniform(ks[4], (4 * lstm_size,), jnp.float32, -s, s),
        "w_dense": jax.random.uniform(ks[5], (n_vocab, lstm_size),
                                      jnp.float32, -s, s),
        "b_dense": jax.random.uniform(ks[6], (n_vocab,), jnp.float32, -s, s),
    }


if __name__ == "__main__":
    n_vocab, seq_size, embedding_size, lstm_size = 256, 8, 128, 128
    batch = 8

    key = jax.random.PRNGKey(0)
    k_params, k_tok = jax.random.split(key)
    params = make_params(k_params, n_vocab, embedding_size, lstm_size)

    tokens = jax.random.randint(k_tok, (batch, seq_size), 0, n_vocab, jnp.int32)
    zero_state = (jnp.zeros((1, batch, lstm_size), jnp.float32),
                  jnp.zeros((1, batch, lstm_size), jnp.float32))

    fwd = jax.jit(rnn_module_forward)
    logits, (hN, cN) = fwd(tokens, zero_state, params)
    jax.block_until_ready(logits)
    jax.block_until_ready(hN)
    jax.block_until_ready(cN)

    ref_logits, (ref_h, ref_c) = _reference_forward(tokens, zero_state, params)
    # bf16 MXU operands + bf16 gx/h_seq -> relaxed tolerance vs. f32 reference.
    np.testing.assert_allclose(np.asarray(logits), np.asarray(ref_logits),
                               rtol=2e-2, atol=2e-2)
    np.testing.assert_allclose(np.asarray(hN), np.asarray(ref_h),
                               rtol=2e-2, atol=2e-2)
    np.testing.assert_allclose(np.asarray(cN), np.asarray(ref_c),
                               rtol=2e-2, atol=2e-2)

    assert logits.shape == (batch, seq_size, n_vocab)
    assert hN.shape == (1, batch, lstm_size) and cN.shape == (1, batch, lstm_size)
    print("KERNEL_OK")
</pallas_src>

<mosaic_0001>
module attributes {stable_mosaic.version = 11 : i64} {
  func.func @_matmul_bias_kernel(%arg0: i32, %arg1: i32, %arg2: memref<64x128xbf16, #tpu.memory_space<vmem>>, %arg3: memref<128x512xbf16, #tpu.memory_space<vmem>>, %arg4: memref<1x512xf32, #tpu.memory_space<vmem>>, %arg5: memref<64x512xbf16, #tpu.memory_space<vmem>>) attributes {dimension_semantics = [#tpu.dimension_semantics<parallel>, #tpu.dimension_semantics<parallel>], iteration_bounds = array<i64: 1, 1>, scalar_prefetch = 0 : i64, scratch_operands = 0 : i64, tpu.core_type = #tpu.core_type<tc>, window_params = [{transform_indices = @transform_0, window_bounds = array<i64: 64, 128>}, {transform_indices = @transform_1, window_bounds = array<i64: 128, 512>}, {transform_indices = @transform_2, window_bounds = array<i64: 1, 512>}, {transform_indices = @transform_3, window_bounds = array<i64: 64, 512>}]} {
    %c0 = arith.constant 0 : index
    %c0_0 = arith.constant 0 : index
    %0 = vector.load %arg2[%c0, %c0_0] : memref<64x128xbf16, #tpu.memory_space<vmem>>, vector<64x128xbf16>
    %c0_1 = arith.constant 0 : index
    %c0_2 = arith.constant 0 : index
    %1 = vector.load %arg3[%c0_1, %c0_2] : memref<128x512xbf16, #tpu.memory_space<vmem>>, vector<128x512xbf16>
    %cst = arith.constant dense<0.000000e+00> : vector<64x512xf32>
    %2 = tpu.matmul %0, %1, %cst {dimension_numbers = #tpu.dot_dimension_numbers<[1], [0], [0], [1], [0, 0, 1, 1], [], []>} : vector<64x128xbf16>, vector<128x512xbf16>, vector<64x512xf32> -> vector<64x512xf32>
    %c0_3 = arith.constant 0 : index
    %c0_4 = arith.constant 0 : index
    %3 = vector.load %arg4[%c0_3, %c0_4] : memref<1x512xf32, #tpu.memory_space<vmem>>, vector<1x512xf32>
    %4 = vector.broadcast %3 : vector<1x512xf32> to vector<64x512xf32>
    %5 = arith.addf %2, %4 : vector<64x512xf32>
    %6 = arith.truncf %5 : vector<64x512xf32> to vector<64x512xbf16>
    %c0_5 = arith.constant 0 : index
    %c0_6 = arith.constant 0 : index
    %7 = vector.load %arg5[%c0_5, %c0_6] : memref<64x512xbf16, #tpu.memory_space<vmem>>, vector<64x512xbf16>
    tpu.vector_store %arg5[%c0_5, %c0_6], %6 {strides = array<i32>} : memref<64x512xbf16, #tpu.memory_space<vmem>>, vector<64x512xbf16>,
    return
  }
  func.func @transform_0(%arg0: i32, %arg1: i32) -> (i32, i32) {
    %c0_i32 = arith.constant 0 : i32
    %c0_i32_0 = arith.constant 0 : i32
    return %arg1, %c0_i32 : i32, i32
  }
  func.func @transform_1(%arg0: i32, %arg1: i32) -> (i32, i32) {
    %c0_i32 = arith.constant 0 : i32
    %c0_i32_0 = arith.constant 0 : i32
    return %c0_i32, %arg0 : i32, i32
  }
  func.func @transform_2(%arg0: i32, %arg1: i32) -> (i32, i32) {
    %c0_i32 = arith.constant 0 : i32
    %c0_i32_0 = arith.constant 0 : i32
    return %c0_i32, %arg0 : i32, i32
  }
  func.func @transform_3(%arg0: i32, %arg1: i32) -> (i32, i32) {
    %c0_i32 = arith.constant 0 : i32
    return %arg1, %arg0 : i32, i32
  }
}

module attributes {stable_mosaic.version = 11 : i64} {
  func.func @_lstm_recurrent_kernel(%arg0: i32, %arg1: i32, %arg2: memref<8x8x512xbf16, #tpu.memory_space<vmem>>, %arg3: memref<8x128xf32, #tpu.memory_space<vmem>>, %arg4: memref<8x128xf32, #tpu.memory_space<vmem>>, %arg5: memref<128x512xbf16, #tpu.memory_space<vmem>>, %arg6: memref<8x8x128xbf16, #tpu.memory_space<vmem>>, %arg7: memref<8x128xf32, #tpu.memory_space<vmem>>, %arg8: memref<8x128xf32, #tpu.memory_space<vmem>>, %arg9: memref<8x128xf32, #tpu.memory_space<vmem>>, %arg10: memref<8x128xf32, #tpu.memory_space<vmem>>) attributes {dimension_semantics = [#tpu.dimension_semantics<parallel>, #tpu.dimension_semantics<arbitrary>], iteration_bounds = array<i64: 1, 1>, scalar_prefetch = 0 : i64, scratch_operands = 2 : i64, tpu.core_type = #tpu.core_type<tc>, window_params = [{transform_indices = @transform_0, window_bounds = array<i64: 8, 8, 512>}, {transform_indices = @transform_1, window_bounds = array<i64: 8, 128>}, {transform_indices = @transform_2, window_bounds = array<i64: 8, 128>}, {pipeline_mode = #tpu.pipeline_mode<synchronous>, transform_indices = @transform_3, window_bounds = array<i64: 128, 512>}, {transform_indices = @transform_4, window_bounds = array<i64: 8, 8, 128>}, {transform_indices = @transform_5, window_bounds = array<i64: 8, 128>}, {transform_indices = @transform_6, window_bounds = array<i64: 8, 128>}]} {
    %c0_i32 = arith.constant 0 : i32
    %0 = arith.cmpi eq, %arg1, %c0_i32 : i32
    %1 = arith.extui %0 : i1 to i32
    %c0_i32_0 = arith.constant 0 : i32
    %2 = arith.cmpi ne, %1, %c0_i32_0 : i32
    scf.if %2 {
      %c0_60 = arith.constant 0 : index
      %c0_61 = arith.constant 0 : index
      %227 = vector.load %arg3[%c0_60, %c0_61] : memref<8x128xf32, #tpu.memory_space<vmem>>, vector<8x128xf32>
      %c0_62 = arith.constant 0 : index
      %c0_63 = arith.constant 0 : index
      %228 = vector.load %arg9[%c0_62, %c0_63] : memref<8x128xf32, #tpu.memory_space<vmem>>, vector<8x128xf32>
      tpu.vector_store %arg9[%c0_62, %c0_63], %227 {strides = array<i32>} : memref<8x128xf32, #tpu.memory_space<vmem>>, vector<8x128xf32>,
      %c0_64 = arith.constant 0 : index
      %c0_65 = arith.constant 0 : index
      %229 = vector.load %arg4[%c0_64, %c0_65] : memref<8x128xf32, #tpu.memory_space<vmem>>, vector<8x128xf32>
      %c0_66 = arith.constant 0 : index
      %c0_67 = arith.constant 0 : index
      %230 = vector.load %arg10[%c0_66, %c0_67] : memref<8x128xf32, #tpu.memory_space<vmem>>, vector<8x128xf32>
      tpu.vector_store %arg10[%c0_66, %c0_67], %229 {strides = array<i32>} : memref<8x128xf32, #tpu.memory_space<vmem>>, vector<8x128xf32>,
    } else {
    }
    %c0 = arith.constant 0 : index
    %c0_1 = arith.constant 0 : index
    %3 = vector.load %arg5[%c0, %c0_1] : memref<128x512xbf16, #tpu.memory_space<vmem>>, vector<128x512xbf16>
    %c0_2 = arith.constant 0 : index
    %c0_3 = arith.constant 0 : index
    %4 = vector.load %arg9[%c0_2, %c0_3] : memref<8x128xf32, #tpu.memory_space<vmem>>, vector<8x128xf32>
    %c0_4 = arith.constant 0 : index
    %c0_5 = arith.constant 0 : index
    %5 = vector.load %arg10[%c0_4, %c0_5] : memref<8x128xf32, #tpu.memory_space<vmem>>, vector<8x128xf32>
    %c0_i32_6 = arith.constant 0 : i32
    %c0_7 = arith.constant 0 : index
    %6 = arith.index_cast %c0_i32_6 : i32 to index
    %c0_8 = arith.constant 0 : index
    %7 = vector.load %arg2[%c0_7, %6, %c0_8] : memref<8x8x512xbf16, #tpu.memory_space<vmem>>, vector<8x1x512xbf16>
    %8 = vector.shape_cast %7 : vector<8x1x512xbf16> to vector<8x512xbf16>
    %9 = arith.extf %8 : vector<8x512xbf16> to vector<8x512xf32>
    %10 = arith.truncf %4 : vector<8x128xf32> to vector<8x128xbf16>
    %cst = arith.constant dense<0.000000e+00> : vector<8x512xf32>
    %11 = tpu.matmul %10, %3, %cst {dimension_numbers = #tpu.dot_dimension_numbers<[1], [0], [0], [1], [0, 0, 1, 1], [], []>} : vector<8x128xbf16>, vector<128x512xbf16>, vector<8x512xf32> -> vector<8x512xf32>
    %12 = arith.addf %9, %11 : vector<8x512xf32>
    %13 = vector.extract_strided_slice %12 {offsets = [0, 0], sizes = [8, 384], strides = [1, 1]} : vector<8x512xf32> to vector<8x384xf32>
    %14 = arith.negf %13 : vector<8x384xf32>
    %15 = math.exp %14 : vector<8x384xf32>
    %cst_9 = arith.constant 1.000000e+00 : f32
    %16 = vector.broadcast %cst_9 : f32 to vector<8x384xf32>
    %17 = arith.addf %16, %15 : vector<8x384xf32>
    %18 = arith.divf %16, %17 : vector<8x384xf32>
    %19 = vector.extract_strided_slice %18 {offsets = [0, 0], sizes = [8, 128], strides = [1, 1]} : vector<8x384xf32> to vector<8x128xf32>
    %20 = vector.extract_strided_slice %18 {offsets = [0, 128], sizes = [8, 128], strides = [1, 1]} : vector<8x384xf32> to vector<8x128xf32>
    %21 = vector.extract_strided_slice %18 {offsets = [0, 256], sizes = [8, 128], strides = [1, 1]} : vector<8x384xf32> to vector<8x128xf32>
    %22 = vector.extract_strided_slice %12 {offsets = [0, 384], sizes = [8, 128], strides = [1, 1]} : vector<8x512xf32> to vector<8x128xf32>
    %23 = math.tanh %22 : vector<8x128xf32>
    %24 = arith.mulf %20, %5 : vector<8x128xf32>
    %25 = arith.mulf %19, %23 : vector<8x128xf32>
    %26 = arith.addf %24, %25 : vector<8x128xf32>
    %27 = math.tanh %26 : vector<8x128xf32>
    %28 = arith.mulf %21, %27 : vector<8x128xf32>
    %29 = vector.shape_cast %28 : vector<8x128xf32> to vector<8x1x128xf32>
    %30 = arith.truncf %29 : vector<8x1x128xf32> to vector<8x1x128xbf16>
    %c0_10 = arith.constant 0 : index
    %31 = arith.index_cast %c0_i32_6 : i32 to index
    %c0_11 = arith.constant 0 : index
    %32 = vector.load %arg6[%c0_10, %31, %c0_11] : memref<8x8x128xbf16, #tpu.memory_space<vmem>>, vector<8x1x128xbf16>
    tpu.vector_store %arg6[%c0_10, %31, %c0_11], %30 {strides = array<i32>} : memref<8x8x128xbf16, #tpu.memory_space<vmem>>, vector<8x1x128xbf16>,
    %c1_i32 = arith.constant 1 : i32
    %c0_12 = arith.constant 0 : index
    %33 = arith.index_cast %c1_i32 : i32 to index
    %c0_13 = arith.constant 0 : index
    %34 = vector.load %arg2[%c0_12, %33, %c0_13] : memref<8x8x512xbf16, #tpu.memory_space<vmem>>, vector<8x1x512xbf16>
    %35 = vector.shape_cast %34 : vector<8x1x512xbf16> to vector<8x512xbf16>
    %36 = arith.extf %35 : vector<8x512xbf16> to vector<8x512xf32>
    %37 = arith.truncf %28 : vector<8x128xf32> to vector<8x128xbf16>
    %cst_14 = arith.constant dense<0.000000e+00> : vector<8x512xf32>
    %38 = tpu.matmul %37, %3, %cst_14 {dimension_numbers = #tpu.dot_dimension_numbers<[1], [0], [0], [1], [0, 0, 1, 1], [], []>} : vector<8x128xbf16>, vector<128x512xbf16>, vector<8x512xf32> -> vector<8x512xf32>
    %39 = arith.addf %36, %38 : vector<8x512xf32>
    %40 = vector.extract_strided_slice %39 {offsets = [0, 0], sizes = [8, 384], strides = [1, 1]} : vector<8x512xf32> to vector<8x384xf32>
    %41 = arith.negf %40 : vector<8x384xf32>
    %42 = math.exp %41 : vector<8x384xf32>
    %cst_15 = arith.constant 1.000000e+00 : f32
    %43 = vector.broadcast %cst_15 : f32 to vector<8x384xf32>
    %44 = arith.addf %43, %42 : vector<8x384xf32>
    %45 = arith.divf %43, %44 : vector<8x384xf32>
    %46 = vector.extract_strided_slice %45 {offsets = [0, 0], sizes = [8, 128], strides = [1, 1]} : vector<8x384xf32> to vector<8x128xf32>
    %47 = vector.extract_strided_slice %45 {offsets = [0, 128], sizes = [8, 128], strides = [1, 1]} : vector<8x384xf32> to vector<8x128xf32>
    %48 = vector.extract_strided_slice %45 {offsets = [0, 256], sizes = [8, 128], strides = [1, 1]} : vector<8x384xf32> to vector<8x128xf32>
    %49 = vector.extract_strided_slice %39 {offsets = [0, 384], sizes = [8, 128], strides = [1, 1]} : vector<8x512xf32> to vector<8x128xf32>
    %50 = math.tanh %49 : vector<8x128xf32>
    %51 = arith.mulf %47, %26 : vector<8x128xf32>
    %52 = arith.mulf %46, %50 : vector<8x128xf32>
    %53 = arith.addf %51, %52 : vector<8x128xf32>
    %54 = math.tanh %53 : vector<8x128xf32>
    %55 = arith.mulf %48, %54 : vector<8x128xf32>
    %56 = vector.shape_cast %55 : vector<8x128xf32> to vector<8x1x128xf32>
    %57 = arith.truncf %56 : vector<8x1x128xf32> to vector<8x1x128xbf16>
    %c0_16 = arith.constant 0 : index
    %58 = arith.index_cast %c1_i32 : i32 to index
    %c0_17 = arith.constant 0 : index
    %59 = vector.load %arg6[%c0_16, %58, %c0_17] : memref<8x8x128xbf16, #tpu.memory_space<vmem>>, vector<8x1x128xbf16>
    tpu.vector_store %arg6[%c0_16, %58, %c0_17], %57 {strides = array<i32>} : memref<8x8x128xbf16, #tpu.memory_space<vmem>>, vector<8x1x128xbf16>,
    %c2_i32 = arith.constant 2 : i32
    %c0_18 = arith.constant 0 : index
    %60 = arith.index_cast %c2_i32 : i32 to index
    %c0_19 = arith.constant 0 : index
    %61 = vector.load %arg2[%c0_18, %60, %c0_19] : memref<8x8x512xbf16, #tpu.memory_space<vmem>>, vector<8x1x512xbf16>
    %62 = vector.shape_cast %61 : vector<8x1x512xbf16> to vector<8x512xbf16>
    %63 = arith.extf %62 : vector<8x512xbf16> to vector<8x512xf32>
    %64 = arith.truncf %55 : vector<8x128xf32> to vector<8x128xbf16>
    %cst_20 = arith.constant dense<0.000000e+00> : vector<8x512xf32>
    %65 = tpu.matmul %64, %3, %cst_20 {dimension_numbers = #tpu.dot_dimension_numbers<[1], [0], [0], [1], [0, 0, 1, 1], [], []>} : vector<8x128xbf16>, vector<128x512xbf16>, vector<8x512xf32> -> vector<8x512xf32>
    %66 = arith.addf %63, %65 : vector<8x512xf32>
    %67 = vector.extract_strided_slice %66 {offsets = [0, 0], sizes = [8, 384], strides = [1, 1]} : vector<8x512xf32> to vector<8x384xf32>
    %68 = arith.negf %67 : vector<8x384xf32>
    %69 = math.exp %68 : vector<8x384xf32>
    %cst_21 = arith.constant 1.000000e+00 : f32
    %70 = vector.broadcast %cst_21 : f32 to vector<8x384xf32>
    %71 = arith.addf %70, %69 : vector<8x384xf32>
    %72 = arith.divf %70, %71 : vector<8x384xf32>
    %73 = vector.extract_strided_slice %72 {offsets = [0, 0], sizes = [8, 128], strides = [1, 1]} : vector<8x384xf32> to vector<8x128xf32>
    %74 = vector.extract_strided_slice %72 {offsets = [0, 128], sizes = [8, 128], strides = [1, 1]} : vector<8x384xf32> to vector<8x128xf32>
    %75 = vector.extract_strided_slice %72 {offsets = [0, 256], sizes = [8, 128], strides = [1, 1]} : vector<8x384xf32> to vector<8x128xf32>
    %76 = vector.extract_strided_slice %66 {offsets = [0, 384], sizes = [8, 128], strides = [1, 1]} : vector<8x512xf32> to vector<8x128xf32>
    %77 = math.tanh %76 : vector<8x128xf32>
    %78 = arith.mulf %74, %53 : vector<8x128xf32>
    %79 = arith.mulf %73, %77 : vector<8x128xf32>
    %80 = arith.addf %78, %79 : vector<8x128xf32>
    %81 = math.tanh %80 : vector<8x128xf32>
    %82 = arith.mulf %75, %81 : vector<8x128xf32>
    %83 = vector.shape_cast %82 : vector<8x128xf32> to vector<8x1x128xf32>
    %84 = arith.truncf %83 : vector<8x1x128xf32> to vector<8x1x128xbf16>
    %c0_22 = arith.constant 0 : index
    %85 = arith.index_cast %c2_i32 : i32 to index
    %c0_23 = arith.constant 0 : index
    %86 = vector.load %arg6[%c0_22, %85, %c0_23] : memref<8x8x128xbf16, #tpu.memory_space<vmem>>, vector<8x1x128xbf16>
    tpu.vector_store %arg6[%c0_22, %85, %c0_23], %84 {strides = array<i32>} : memref<8x8x128xbf16, #tpu.memory_space<vmem>>, vector<8x1x128xbf16>,
    %c3_i32 = arith.constant 3 : i32
    %c0_24 = arith.constant 0 : index
    %87 = arith.index_cast %c3_i32 : i32 to index
    %c0_25 = arith.constant 0 : index
    %88 = vector.load %arg2[%c0_24, %87, %c0_25] : memref<8x8x512xbf16, #tpu.memory_space<vmem>>, vector<8x1x512xbf16>
    %89 = vector.shape_cast %88 : vector<8x1x512xbf16> to vector<8x512xbf16>
    %90 = arith.extf %89 : vector<8x512xbf16> to vector<8x512xf32>
    %91 = arith.truncf %82 : vector<8x128xf32> to vector<8x128xbf16>
    %cst_26 = arith.constant dense<0.000000e+00> : vector<8x512xf32>
    %92 = tpu.matmul %91, %3, %cst_26 {dimension_numbers = #tpu.dot_dimension_numbers<[1], [0], [0], [1], [0, 0, 1, 1], [], []>} : vector<8x128xbf16>, vector<128x512xbf16>, vector<8x512xf32> -> vector<8x512xf32>
    %93 = arith.addf %90, %92 : vector<8x512xf32>
    %94 = vector.extract_strided_slice %93 {offsets = [0, 0], sizes = [8, 384], strides = [1, 1]} : vector<8x512xf32> to vector<8x384xf32>
    %95 = arith.negf %94 : vector<8x384xf32>
    %96 = math.exp %95 : vector<8x384xf32>
    %cst_27 = arith.constant 1.000000e+00 : f32
    %97 = vector.broadcast %cst_27 : f32 to vector<8x384xf32>
    %98 = arith.addf %97, %96 : vector<8x384xf32>
    %99 = arith.divf %97, %98 : vector<8x384xf32>
    %100 = vector.extract_strided_slice %99 {offsets = [0, 0], sizes = [8, 128], strides = [1, 1]} : vector<8x384xf32> to vector<8x128xf32>
    %101 = vector.extract_strided_slice %99 {offsets = [0, 128], sizes = [8, 128], strides = [1, 1]} : vector<8x384xf32> to vector<8x128xf32>
    %102 = vector.extract_strided_slice %99 {offsets = [0, 256], sizes = [8, 128], strides = [1, 1]} : vector<8x384xf32> to vector<8x128xf32>
    %103 = vector.extract_strided_slice %93 {offsets = [0, 384], sizes = [8, 128], strides = [1, 1]} : vector<8x512xf32> to vector<8x128xf32>
    %104 = math.tanh %103 : vector<8x128xf32>
    %105 = arith.mulf %101, %80 : vector<8x128xf32>
    %106 = arith.mulf %100, %104 : vector<8x128xf32>
    %107 = arith.addf %105, %106 : vector<8x128xf32>
    %108 = math.tanh %107 : vector<8x128xf32>
    %109 = arith.mulf %102, %108 : vector<8x128xf32>
    %110 = vector.shape_cast %109 : vector<8x128xf32> to vector<8x1x128xf32>
    %111 = arith.truncf %110 : vector<8x1x128xf32> to vector<8x1x128xbf16>
    %c0_28 = arith.constant 0 : index
    %112 = arith.index_cast %c3_i32 : i32 to index
    %c0_29 = arith.constant 0 : index
    %113 = vector.load %arg6[%c0_28, %112, %c0_29] : memref<8x8x128xbf16, #tpu.memory_space<vmem>>, vector<8x1x128xbf16>
    tpu.vector_store %arg6[%c0_28, %112, %c0_29], %111 {strides = array<i32>} : memref<8x8x128xbf16, #tpu.memory_space<vmem>>, vector<8x1x128xbf16>,
    %c4_i32 = arith.constant 4 : i32
    %c0_30 = arith.constant 0 : index
    %114 = arith.index_cast %c4_i32 : i32 to index
    %c0_31 = arith.constant 0 : index
    %115 = vector.load %arg2[%c0_30, %114, %c0_31] : memref<8x8x512xbf16, #tpu.memory_space<vmem>>, vector<8x1x512xbf16>
    %116 = vector.shape_cast %115 : vector<8x1x512xbf16> to vector<8x512xbf16>
    %117 = arith.extf %116 : vector<8x512xbf16> to vector<8x512xf32>
    %118 = arith.truncf %109 : vector<8x128xf32> to vector<8x128xbf16>
    %cst_32 = arith.constant dense<0.000000e+00> : vector<8x512xf32>
    %119 = tpu.matmul %118, %3, %cst_32 {dimension_numbers = #tpu.dot_dimension_numbers<[1], [0], [0], [1], [0, 0, 1, 1], [], []>} : vector<8x128xbf16>, vector<128x512xbf16>, vector<8x512xf32> -> vector<8x512xf32>
    %120 = arith.addf %117, %119 : vector<8x512xf32>
    %121 = vector.extract_strided_slice %120 {offsets = [0, 0], sizes = [8, 384], strides = [1, 1]} : vector<8x512xf32> to vector<8x384xf32>
    %122 = arith.negf %121 : vector<8x384xf32>
    %123 = math.exp %122 : vector<8x384xf32>
    %cst_33 = arith.constant 1.000000e+00 : f32
    %124 = vector.broadcast %cst_33 : f32 to vector<8x384xf32>
    %125 = arith.addf %124, %123 : vector<8x384xf32>
    %126 = arith.divf %124, %125 : vector<8x384xf32>
    %127 = vector.extract_strided_slice %126 {offsets = [0, 0], sizes = [8, 128], strides = [1, 1]} : vector<8x384xf32> to vector<8x128xf32>
    %128 = vector.extract_strided_slice %126 {offsets = [0, 128], sizes = [8, 128], strides = [1, 1]} : vector<8x384xf32> to vector<8x128xf32>
    %129 = vector.extract_strided_slice %126 {offsets = [0, 256], sizes = [8, 128], strides = [1, 1]} : vector<8x384xf32> to vector<8x128xf32>
    %130 = vector.extract_strided_slice %120 {offsets = [0, 384], sizes = [8, 128], strides = [1, 1]} : vector<8x512xf32> to vector<8x128xf32>
    %131 = math.tanh %130 : vector<8x128xf32>
    %132 = arith.mulf %128, %107 : vector<8x128xf32>
    %133 = arith.mulf %127, %131 : vector<8x128xf32>
    %134 = arith.addf %132, %133 : vector<8x128xf32>
    %135 = math.tanh %134 : vector<8x128xf32>
    %136 = arith.mulf %129, %135 : vector<8x128xf32>
    %137 = vector.shape_cast %136 : vector<8x128xf32> to vector<8x1x128xf32>
    %138 = arith.truncf %137 : vector<8x1x128xf32> to vector<8x1x128xbf16>
    %c0_34 = arith.constant 0 : index
    %139 = arith.index_cast %c4_i32 : i32 to index
    %c0_35 = arith.constant 0 : index
    %140 = vector.load %arg6[%c0_34, %139, %c0_35] : memref<8x8x128xbf16, #tpu.memory_space<vmem>>, vector<8x1x128xbf16>
    tpu.vector_store %arg6[%c0_34, %139, %c0_35], %138 {strides = array<i32>} : memref<8x8x128xbf16, #tpu.memory_space<vmem>>, vector<8x1x128xbf16>,
    %c5_i32 = arith.constant 5 : i32
    %c0_36 = arith.constant 0 : index
    %141 = arith.index_cast %c5_i32 : i32 to index
    %c0_37 = arith.constant 0 : index
    %142 = vector.load %arg2[%c0_36, %141, %c0_37] : memref<8x8x512xbf16, #tpu.memory_space<vmem>>, vector<8x1x512xbf16>
    %143 = vector.shape_cast %142 : vector<8x1x512xbf16> to vector<8x512xbf16>
    %144 = arith.extf %143 : vector<8x512xbf16> to vector<8x512xf32>
    %145 = arith.truncf %136 : vector<8x128xf32> to vector<8x128xbf16>
    %cst_38 = arith.constant dense<0.000000e+00> : vector<8x512xf32>
    %146 = tpu.matmul %145, %3, %cst_38 {dimension_numbers = #tpu.dot_dimension_numbers<[1], [0], [0], [1], [0, 0, 1, 1], [], []>} : vector<8x128xbf16>, vector<128x512xbf16>, vector<8x512xf32> -> vector<8x512xf32>
    %147 = arith.addf %144, %146 : vector<8x512xf32>
    %148 = vector.extract_strided_slice %147 {offsets = [0, 0], sizes = [8, 384], strides = [1, 1]} : vector<8x512xf32> to vector<8x384xf32>
    %149 = arith.negf %148 : vector<8x384xf32>
    %150 = math.exp %149 : vector<8x384xf32>
    %cst_39 = arith.constant 1.000000e+00 : f32
    %151 = vector.broadcast %cst_39 : f32 to vector<8x384xf32>
    %152 = arith.addf %151, %150 : vector<8x384xf32>
    %153 = arith.divf %151, %152 : vector<8x384xf32>
    %154 = vector.extract_strided_slice %153 {offsets = [0, 0], sizes = [8, 128], strides = [1, 1]} : vector<8x384xf32> to vector<8x128xf32>
    %155 = vector.extract_strided_slice %153 {offsets = [0, 128], sizes = [8, 128], strides = [1, 1]} : vector<8x384xf32> to vector<8x128xf32>
    %156 = vector.extract_strided_slice %153 {offsets = [0, 256], sizes = [8, 128], strides = [1, 1]} : vector<8x384xf32> to vector<8x128xf32>
    %157 = vector.extract_strided_slice %147 {offsets = [0, 384], sizes = [8, 128], strides = [1, 1]} : vector<8x512xf32> to vector<8x128xf32>
    %158 = math.tanh %157 : vector<8x128xf32>
    %159 = arith.mulf %155, %134 : vector<8x128xf32>
    %160 = arith.mulf %154, %158 : vector<8x128xf32>
    %161 = arith.addf %159, %160 : vector<8x128xf32>
    %162 = math.tanh %161 : vector<8x128xf32>
    %163 = arith.mulf %156, %162 : vector<8x128xf32>
    %164 = vector.shape_cast %163 : vector<8x128xf32> to vector<8x1x128xf32>
    %165 = arith.truncf %164 : vector<8x1x128xf32> to vector<8x1x128xbf16>
    %c0_40 = arith.constant 0 : index
    %166 = arith.index_cast %c5_i32 : i32 to index
    %c0_41 = arith.constant 0 : index
    %167 = vector.load %arg6[%c0_40, %166, %c0_41] : memref<8x8x128xbf16, #tpu.memory_space<vmem>>, vector<8x1x128xbf16>
    tpu.vector_store %arg6[%c0_40, %166, %c0_41], %165 {strides = array<i32>} : memref<8x8x128xbf16, #tpu.memory_space<vmem>>, vector<8x1x128xbf16>,
    %c6_i32 = arith.constant 6 : i32
    %c0_42 = arith.constant 0 : index
    %168 = arith.index_cast %c6_i32 : i32 to index
    %c0_43 = arith.constant 0 : index
    %169 = vector.load %arg2[%c0_42, %168, %c0_43] : memref<8x8x512xbf16, #tpu.memory_space<vmem>>, vector<8x1x512xbf16>
    %170 = vector.shape_cast %169 : vector<8x1x512xbf16> to vector<8x512xbf16>
    %171 = arith.extf %170 : vector<8x512xbf16> to vector<8x512xf32>
    %172 = arith.truncf %163 : vector<8x128xf32> to vector<8x128xbf16>
    %cst_44 = arith.constant dense<0.000000e+00> : vector<8x512xf32>
    %173 = tpu.matmul %172, %3, %cst_44 {dimension_numbers = #tpu.dot_dimension_numbers<[1], [0], [0], [1], [0, 0, 1, 1], [], []>} : vector<8x128xbf16>, vector<128x512xbf16>, vector<8x512xf32> -> vector<8x512xf32>
    %174 = arith.addf %171, %173 : vector<8x512xf32>
    %175 = vector.extract_strided_slice %174 {offsets = [0, 0], sizes = [8, 384], strides = [1, 1]} : vector<8x512xf32> to vector<8x384xf32>
    %176 = arith.negf %175 : vector<8x384xf32>
    %177 = math.exp %176 : vector<8x384xf32>
    %cst_45 = arith.constant 1.000000e+00 : f32
    %178 = vector.broadcast %cst_45 : f32 to vector<8x384xf32>
    %179 = arith.addf %178, %177 : vector<8x384xf32>
    %180 = arith.divf %178, %179 : vector<8x384xf32>
    %181 = vector.extract_strided_slice %180 {offsets = [0, 0], sizes = [8, 128], strides = [1, 1]} : vector<8x384xf32> to vector<8x128xf32>
    %182 = vector.extract_strided_slice %180 {offsets = [0, 128], sizes = [8, 128], strides = [1, 1]} : vector<8x384xf32> to vector<8x128xf32>
    %183 = vector.extract_strided_slice %180 {offsets = [0, 256], sizes = [8, 128], strides = [1, 1]} : vector<8x384xf32> to vector<8x128xf32>
    %184 = vector.extract_strided_slice %174 {offsets = [0, 384], sizes = [8, 128], strides = [1, 1]} : vector<8x512xf32> to vector<8x128xf32>
    %185 = math.tanh %184 : vector<8x128xf32>
    %186 = arith.mulf %182, %161 : vector<8x128xf32>
    %187 = arith.mulf %181, %185 : vector<8x128xf32>
    %188 = arith.addf %186, %187 : vector<8x128xf32>
    %189 = math.tanh %188 : vector<8x128xf32>
    %190 = arith.mulf %183, %189 : vector<8x128xf32>
    %191 = vector.shape_cast %190 : vector<8x128xf32> to vector<8x1x128xf32>
    %192 = arith.truncf %191 : vector<8x1x128xf32> to vector<8x1x128xbf16>
    %c0_46 = arith.constant 0 : index
    %193 = arith.index_cast %c6_i32 : i32 to index
    %c0_47 = arith.constant 0 : index
    %194 = vector.load %arg6[%c0_46, %193, %c0_47] : memref<8x8x128xbf16, #tpu.memory_space<vmem>>, vector<8x1x128xbf16>
    tpu.vector_store %arg6[%c0_46, %193, %c0_47], %192 {strides = array<i32>} : memref<8x8x128xbf16, #tpu.memory_space<vmem>>, vector<8x1x128xbf16>,
    %c7_i32 = arith.constant 7 : i32
    %c0_48 = arith.constant 0 : index
    %195 = arith.index_cast %c7_i32 : i32 to index
    %c0_49 = arith.constant 0 : index
    %196 = vector.load %arg2[%c0_48, %195, %c0_49] : memref<8x8x512xbf16, #tpu.memory_space<vmem>>, vector<8x1x512xbf16>
    %197 = vector.shape_cast %196 : vector<8x1x512xbf16> to vector<8x512xbf16>
    %198 = arith.extf %197 : vector<8x512xbf16> to vector<8x512xf32>
    %199 = arith.truncf %190 : vector<8x128xf32> to vector<8x128xbf16>
    %cst_50 = arith.constant dense<0.000000e+00> : vector<8x512xf32>
    %200 = tpu.matmul %199, %3, %cst_50 {dimension_numbers = #tpu.dot_dimension_numbers<[1], [0], [0], [1], [0, 0, 1, 1], [], []>} : vector<8x128xbf16>, vector<128x512xbf16>, vector<8x512xf32> -> vector<8x512xf32>
    %201 = arith.addf %198, %200 : vector<8x512xf32>
    %202 = vector.extract_strided_slice %201 {offsets = [0, 0], sizes = [8, 384], strides = [1, 1]} : vector<8x512xf32> to vector<8x384xf32>
    %203 = arith.negf %202 : vector<8x384xf32>
    %204 = math.exp %203 : vector<8x384xf32>
    %cst_51 = arith.constant 1.000000e+00 : f32
    %205 = vector.broadcast %cst_51 : f32 to vector<8x384xf32>
    %206 = arith.addf %205, %204 : vector<8x384xf32>
    %207 = arith.divf %205, %206 : vector<8x384xf32>
    %208 = vector.extract_strided_slice %207 {offsets = [0, 0], sizes = [8, 128], strides = [1, 1]} : vector<8x384xf32> to vector<8x128xf32>
    %209 = vector.extract_strided_slice %207 {offsets = [0, 128], sizes = [8, 128], strides = [1, 1]} : vector<8x384xf32> to vector<8x128xf32>
    %210 = vector.extract_strided_slice %207 {offsets = [0, 256], sizes = [8, 128], strides = [1, 1]} : vector<8x384xf32> to vector<8x128xf32>
    %211 = vector.extract_strided_slice %201 {offsets = [0, 384], sizes = [8, 128], strides = [1, 1]} : vector<8x512xf32> to vector<8x128xf32>
    %212 = math.tanh %211 : vector<8x128xf32>
    %213 = arith.mulf %209, %188 : vector<8x128xf32>
    %214 = arith.mulf %208, %212 : vector<8x128xf32>
    %215 = arith.addf %213, %214 : vector<8x128xf32>
    %216 = math.tanh %215 : vector<8x128xf32>
    %217 = arith.mulf %210, %216 : vector<8x128xf32>
    %218 = vector.shape_cast %217 : vector<8x128xf32> to vector<8x1x128xf32>
    %219 = arith.truncf %218 : vector<8x1x128xf32> to vector<8x1x128xbf16>
    %c0_52 = arith.constant 0 : index
    %220 = arith.index_cast %c7_i32 : i32 to index
    %c0_53 = arith.constant 0 : index
    %221 = vector.load %arg6[%c0_52, %220, %c0_53] : memref<8x8x128xbf16, #tpu.memory_space<vmem>>, vector<8x1x128xbf16>
    tpu.vector_store %arg6[%c0_52, %220, %c0_53], %219 {strides = array<i32>} : memref<8x8x128xbf16, #tpu.memory_space<vmem>>, vector<8x1x128xbf16>,
    %c8_i32 = arith.constant 8 : i32
    %c0_54 = arith.constant 0 : index
    %c0_55 = arith.constant 0 : index
    %222 = vector.load %arg9[%c0_54, %c0_55] : memref<8x128xf32, #tpu.memory_space<vmem>>, vector<8x128xf32>
    tpu.vector_store %arg9[%c0_54, %c0_55], %217 {strides = array<i32>} : memref<8x128xf32, #tpu.memory_space<vmem>>, vector<8x128xf32>,
    %c0_56 = arith.constant 0 : index
    %c0_57 = arith.constant 0 : index
    %223 = vector.load %arg10[%c0_56, %c0_57] : memref<8x128xf32, #tpu.memory_space<vmem>>, vector<8x128xf32>
    tpu.vector_store %arg10[%c0_56, %c0_57], %215 {strides = array<i32>} : memref<8x128xf32, #tpu.memory_space<vmem>>, vector<8x128xf32>,
    %c0_i32_58 = arith.constant 0 : i32
    %224 = arith.cmpi eq, %arg1, %c0_i32_58 : i32
    %225 = arith.extui %224 : i1 to i32
    %c0_i32_59 = arith.constant 0 : i32
    %226 = arith.cmpi ne, %225, %c0_i32_59 : i32
    scf.if %226 {
      %c0_60 = arith.constant 0 : index
      %c0_61 = arith.constant 0 : index
      %227 = vector.load %arg7[%c0_60, %c0_61] : memref<8x128xf32, #tpu.memory_space<vmem>>, vector<8x128xf32>
      tpu.vector_store %arg7[%c0_60, %c0_61], %217 {strides = array<i32>} : memref<8x128xf32, #tpu.memory_space<vmem>>, vector<8x128xf32>,
      %c0_62 = arith.constant 0 : index
      %c0_63 = arith.constant 0 : index
      %228 = vector.load %arg8[%c0_62, %c0_63] : memref<8x128xf32, #tpu.memory_space<vmem>>, vector<8x128xf32>
      tpu.vector_store %arg8[%c0_62, %c0_63], %215 {strides = array<i32>} : memref<8x128xf32, #tpu.memory_space<vmem>>, vector<8x128xf32>,
    } else {
    }
    return
  }
  func.func @transform_0(%arg0: i32, %arg1: i32) -> (i32, i32, i32) {
    %c0_i32 = arith.constant 0 : i32
    %c0_i32_0 = arith.constant 0 : i32
    return %arg0, %arg1, %c0_i32 : i32, i32, i32
  }
  func.func @transform_1(%arg0: i32, %arg1: i32) -> (i32, i32) {
    %c0_i32 = arith.constant 0 : i32
    %c0_i32_0 = arith.constant 0 : i32
    return %arg0, %c0_i32 : i32, i32
  }
  func.func @transform_2(%arg0: i32, %arg1: i32) -> (i32, i32) {
    %c0_i32 = arith.constant 0 : i32
    %c0_i32_0 = arith.constant 0 : i32
    return %arg0, %c0_i32 : i32, i32
  }
  func.func @transform_3(%arg0: i32, %arg1: i32) -> (i32, i32) {
    %c0_i32 = arith.constant 0 : i32
    %c0_i32_0 = arith.constant 0 : i32
    %c0_i32_1 = arith.constant 0 : i32
    return %c0_i32, %c0_i32_0 : i32, i32
  }
  func.func @transform_4(%arg0: i32, %arg1: i32) -> (i32, i32, i32) {
    %c0_i32 = arith.constant 0 : i32
    %c0_i32_0 = arith.constant 0 : i32
    return %arg0, %arg1, %c0_i32 : i32, i32, i32
  }
  func.func @transform_5(%arg0: i32, %arg1: i32) -> (i32, i32) {
    %c0_i32 = arith.constant 0 : i32
    %c0_i32_0 = arith.constant 0 : i32
    return %arg0, %c0_i32 : i32, i32
  }
  func.func @transform_6(%arg0: i32, %arg1: i32) -> (i32, i32) {
    %c0_i32 = arith.constant 0 : i32
    %c0_i32_0 = arith.constant 0 : i32
    return %arg0, %c0_i32 : i32, i32
  }
}

module attributes {stable_mosaic.version = 11 : i64} {
  func.func @_matmul_bias_kernel(%arg0: i32, %arg1: i32, %arg2: memref<64x128xbf16, #tpu.memory_space<vmem>>, %arg3: memref<128x256xbf16, #tpu.memory_space<vmem>>, %arg4: memref<1x256xf32, #tpu.memory_space<vmem>>, %arg5: memref<64x256xf32, #tpu.memory_space<vmem>>) attributes {dimension_semantics = [#tpu.dimension_semantics<parallel>, #tpu.dimension_semantics<parallel>], iteration_bounds = array<i64: 1, 1>, scalar_prefetch = 0 : i64, scratch_operands = 0 : i64, tpu.core_type = #tpu.core_type<tc>, window_params = [{transform_indices = @transform_0, window_bounds = array<i64: 64, 128>}, {transform_indices = @transform_1, window_bounds = array<i64: 128, 256>}, {transform_indices = @transform_2, window_bounds = array<i64: 1, 256>}, {transform_indices = @transform_3, window_bounds = array<i64: 64, 256>}]} {
    %c0 = arith.constant 0 : index
    %c0_0 = arith.constant 0 : index
    %0 = vector.load %arg2[%c0, %c0_0] : memref<64x128xbf16, #tpu.memory_space<vmem>>, vector<64x128xbf16>
    %c0_1 = arith.constant 0 : index
    %c0_2 = arith.constant 0 : index
    %1 = vector.load %arg3[%c0_1, %c0_2] : memref<128x256xbf16, #tpu.memory_space<vmem>>, vector<128x256xbf16>
    %cst = arith.constant dense<0.000000e+00> : vector<64x256xf32>
    %2 = tpu.matmul %0, %1, %cst {dimension_numbers = #tpu.dot_dimension_numbers<[1], [0], [0], [1], [0, 0, 1, 1], [], []>} : vector<64x128xbf16>, vector<128x256xbf16>, vector<64x256xf32> -> vector<64x256xf32>
    %c0_3 = arith.constant 0 : index
    %c0_4 = arith.constant 0 : index
    %3 = vector.load %arg4[%c0_3, %c0_4] : memref<1x256xf32, #tpu.memory_space<vmem>>, vector<1x256xf32>
    %4 = vector.broadcast %3 : vector<1x256xf32> to vector<64x256xf32>
    %5 = arith.addf %2, %4 : vector<64x256xf32>
    %c0_5 = arith.constant 0 : index
    %c0_6 = arith.constant 0 : index
    %6 = vector.load %arg5[%c0_5, %c0_6] : memref<64x256xf32, #tpu.memory_space<vmem>>, vector<64x256xf32>
    tpu.vector_store %arg5[%c0_5, %c0_6], %5 {strides = array<i32>} : memref<64x256xf32, #tpu.memory_space<vmem>>, vector<64x256xf32>,
    return
  }
  func.func @transform_0(%arg0: i32, %arg1: i32) -> (i32, i32) {
    %c0_i32 = arith.constant 0 : i32
    %c0_i32_0 = arith.constant 0 : i32
    return %arg1, %c0_i32 : i32, i32
  }
  func.func @transform_1(%arg0: i32, %arg1: i32) -> (i32, i32) {
    %c0_i32 = arith.constant 0 : i32
    %c0_i32_0 = arith.constant 0 : i32
    return %c0_i32, %arg0 : i32, i32
  }
  func.func @transform_2(%arg0: i32, %arg1: i32) -> (i32, i32) {
    %c0_i32 = arith.constant 0 : i32
    %c0_i32_0 = arith.constant 0 : i32
    return %c0_i32, %arg0 : i32, i32
  }
  func.func @transform_3(%arg0: i32, %arg1: i32) -> (i32, i32) {
    %c0_i32 = arith.constant 0 : i32
    return %arg1, %arg0 : i32, i32
  }
}

</mosaic_0001>

<llo_original>
// kernel: rnn_module_forward.5
$region0: #{rnn_module_forward.5}
  #allocation0 [shape = 'u32[]', space=smem, size = 0x4, offset = 0x4, fixed_abs, tag = 'smem constant byte address 0x4 - core index']
  #allocation1 [shape = 'u32[144,128]{1,0:T(1,128)}', space=vmem, size = 0x12000, scoped, tag = 'internal scratch']
  %s0 = inlined_call_operand.vmem [shape: bf16[64,128], index: 0, kind: input, shape index: {}]
  %s1 = inlined_call_operand.vmem [shape: bf16[128,256], index: 1, kind: input, shape index: {}]
  %s2 = inlined_call_operand.vmem [shape: f32[1,256], index: 2, kind: input, shape index: {}]
  %s3 = inlined_call_operand.hbm [shape: f32[64,256], index: 3, kind: output, shape index: {}]
  %s4 = sld [smem:[#allocation0]]
  $region22: #{rnn_module_forward.5} parent=0
    _
  %s6 = ssub.s32 1, %s4
  %s7 = scalar_select 0, %s6, %s4
  $region1: #{rnn_module_forward.5} parent=0
    #allocation2 [shape = 'u8[65536]{0}', space=vmem, size = 0x10000, scoped, tag = 'output window, operand 0, single buffered']
    #allocation3 [shape = 's32[1]{0}', space=sflag, size = 0x4, scoped, tag = 'scoped memory for rnn_module_forward.5']
    %8 = vsyncpa [#allocation3], 0
    // Predicated region
    $region2: #{rnn_module_forward.5} parent=1 // pred_check
      _
    $region3: #{rnn_module_forward.5} parent=1 // pred_check_branch
      %10 = sbr.rel (0) target = $region5
    $region4: #{rnn_module_forward.5} parent=1 // pred_region
      _
    $region5: #{rnn_module_forward.5} parent=1 // pred_fallthru
      _
    // Predicated region
    $region6: #{rnn_module_forward.5} parent=1 // pred_check
      _
    $region7: #{rnn_module_forward.5} parent=1 // pred_check_branch
      %12 = sbr.rel (0) target = $region9
    $region8: #{rnn_module_forward.5} parent=1 // pred_region
      _
    $region9: #{rnn_module_forward.5} parent=1 // pred_fallthru
      _
    // Predicated region
    $region10: #{rnn_module_forward.5} parent=1 // pred_check
      _
    $region11: #{rnn_module_forward.5} parent=1 // pred_check_branch
      %14 = sbr.rel (0) target = $region13
    $region12: #{rnn_module_forward.5} parent=1 // pred_region
      _
    $region13: #{rnn_module_forward.5} parent=1 // pred_fallthru
      _
    %v16 = vld [vmem:[%s0] sm:$0xf]
    %v17 = vld [vmem:[%s0 + $0x4] sm:$0xf]
    %v18 = vld [vmem:[%s0 + $0x8] sm:$0xf]
    %v19 = vld [vmem:[%s0 + $0xc] sm:$0xf]
    %v20 = vld [vmem:[%s0 + $0x10] sm:$0xf]
    %v21 = vld [vmem:[%s0 + $0x14] sm:$0xf]
    %v22 = vld [vmem:[%s0 + $0x18] sm:$0xf]
    %v23 = vld [vmem:[%s0 + $0x1c] sm:$0xf]
    %v24 = vld [vmem:[%s1] sm:$0xff]
    %v25 = vld [vmem:[%s1 + $0x8] sm:$0xff]
    %v26 = vld [vmem:[%s1 + $0x10] sm:$0xff]
    %v27 = vld [vmem:[%s1 + $0x18] sm:$0xff]
    %v28 = vld [vmem:[%s1 + $0x20] sm:$0xff]
    %v29 = vld [vmem:[%s1 + $0x28] sm:$0xff]
    %v30 = vld [vmem:[%s1 + $0x30] sm:$0xff]
    %v31 = vld [vmem:[%s1 + $0x38] sm:$0xff]
    %v32 = vld [vmem:[%s1 + $0x40] sm:$0xff]
    %v33 = vld [vmem:[%s1 + $0x48] sm:$0xff]
    %v34 = vld [vmem:[%s1 + $0x50] sm:$0xff]
    %v35 = vld [vmem:[%s1 + $0x58] sm:$0xff]
    %v36 = vld [vmem:[%s1 + $0x60] sm:$0xff]
    %v37 = vld [vmem:[%s1 + $0x68] sm:$0xff]
    %v38 = vld [vmem:[%s1 + $0x70] sm:$0xff]
    %v39 = vld [vmem:[%s1 + $0x78] sm:$0xff]
    %v40 = vld [vmem:[%s2] sm:$0x3]
    %v42 = vlaneseq
    %v43 = vshrl.u32 %v42, 7
    %v44 = vsub.s32 0, %v43
    %v45 = vrot.slane %v40, %v44
    %v46 = vlaneseq
    %v47 = vshrl.u32 %v46, 7
    %v48 = vsub.s32 1, %v47
    %v49 = vrot.slane %v40, %v48
    %v60 = vunpack.c.l.b16 %v16
    %v61 = vunpack.c.l.b16 %v17
    %v62 = vunpack.c.l.b16 %v18
    %v63 = vunpack.c.l.b16 %v19
    %v64 = vunpack.c.l.b16 %v20
    %v65 = vunpack.c.l.b16 %v21
    %v66 = vunpack.c.l.b16 %v22
    %v67 = vunpack.c.l.b16 %v23
    %v68 = vpack.c.b16 %v61, %v60
    %v69 = vpack.c.b16 %v63, %v62
    %v70 = vpack.c.b16 %v65, %v64
    %v71 = vpack.c.b16 %v67, %v66
    %v92 = vunpack.c.l.b16 %v24
    %v93 = vunpack.c.h.b16 %v24
    %v94 = vunpack.c.l.b16 %v25
    %v95 = vunpack.c.h.b16 %v25
    %v96 = vunpack.c.l.b16 %v26
    %v97 = vunpack.c.h.b16 %v26
    %v98 = vunpack.c.l.b16 %v27
    %v99 = vunpack.c.h.b16 %v27
    %v100 = vunpack.c.l.b16 %v28
    %v101 = vunpack.c.h.b16 %v28
    %v102 = vunpack.c.l.b16 %v29
    %v103 = vunpack.c.h.b16 %v29
    %v104 = vunpack.c.l.b16 %v30
    %v105 = vunpack.c.h.b16 %v30
    %v106 = vunpack.c.l.b16 %v31
    %v107 = vunpack.c.h.b16 %v31
    %v108 = vunpack.c.l.b16 %v32
    %v109 = vunpack.c.h.b16 %v32
    %v110 = vunpack.c.l.b16 %v33
    %v111 = vunpack.c.h.b16 %v33
    %v112 = vunpack.c.l.b16 %v34
    %v113 = vunpack.c.h.b16 %v34
    %v114 = vunpack.c.l.b16 %v35
    %v115 = vunpack.c.h.b16 %v35
    %v116 = vunpack.c.l.b16 %v36
    %v117 = vunpack.c.h.b16 %v36
    %v118 = vunpack.c.l.b16 %v37
    %v119 = vunpack.c.h.b16 %v37
    %v120 = vunpack.c.l.b16 %v38
    %v121 = vunpack.c.h.b16 %v38
    %v122 = vunpack.c.l.b16 %v39
    %v123 = vunpack.c.h.b16 %v39
    %v124 = vpack.c.b16 %v94, %v92
    %v125 = vpack.c.b16 %v95, %v93
    %v126 = vpack.c.b16 %v98, %v96
    %v127 = vpack.c.b16 %v99, %v97
    %v128 = vpack.c.b16 %v102, %v100
    %v129 = vpack.c.b16 %v103, %v101
    %v130 = vpack.c.b16 %v106, %v104
    %v131 = vpack.c.b16 %v107, %v105
    %v132 = vpack.c.b16 %v110, %v108
    %v133 = vpack.c.b16 %v111, %v109
    %v134 = vpack.c.b16 %v114, %v112
    %v135 = vpack.c.b16 %v115, %v113
    %v136 = vpack.c.b16 %v118, %v116
    %v137 = vpack.c.b16 %v119, %v117
    %v138 = vpack.c.b16 %v122, %v120
    %v139 = vpack.c.b16 %v123, %v121
    %156 = vmatprep.subr.bf16.mxu0 %v125
    %157 = vmatpush1.bf16.msra.mxu0 %v124
    %158 = vmatprep.subr.bf16.mxu0 %v127
    %159 = vmatpush1.bf16.msra.mxu0 %v126
    %160 = vmatprep.subr.bf16.mxu0 %v129
    %161 = vmatpush1.bf16.msra.mxu0 %v128
    %162 = vmatprep.subr.bf16.mxu0 %v131
    %163 = vmatpush1.bf16.msra.mxu0 %v130
    %164 = vmatprep.subr.bf16.mxu0 %v133
    %165 = vmatpush1.bf16.msra.mxu0 %v132
    %166 = vmatprep.subr.bf16.mxu0 %v135
    %167 = vmatpush1.bf16.msra.mxu0 %v134
    %168 = vmatprep.subr.bf16.mxu0 %v137
    %169 = vmatpush1.bf16.msra.mxu0 %v136
    %170 = vmatprep.subr.bf16.mxu0 %v139
    %171 = vmatpush1.bf16.msra.mxu0 %v138
    %172 = vmatprep.subr.bf16.mxu0 0
    %173 = vmatpush1.bf16.msra.mxu0 0
    %174 = vmatprep.subr.bf16.mxu0 0
    %175 = vmatpush1.bf16.msra.mxu0 0
    %176 = vmatprep.subr.bf16.mxu0 0
    %177 = vmatpush1.bf16.msra.mxu0 0
    %178 = vmatprep.subr.bf16.mxu0 0
    %179 = vmatpush1.bf16.msra.mxu0 0
    %180 = vmatprep.subr.bf16.mxu0 0
    %181 = vmatpush1.bf16.msra.mxu0 0
    %182 = vmatprep.subr.bf16.mxu0 0
    %183 = vmatpush1.bf16.msra.mxu0 0
    %184 = vmatprep.subr.bf16.mxu0 0
    %185 = vmatpush1.bf16.msra.mxu0 0
    %186 = vmatprep.subr.bf16.mxu0 0
    %187 = vmatpush1.bf16.msra.mxu0 0
    %188 = vmatprep.mubr.bf16.mxu0 0
    %189 = vmatmul.mubr.bf16.gmra.mrb[0].mxu0 %v68
    %v190 = vpop.f32.mrb[0].mxu0
    %v191 = vadd.f32 %v45, %v190
    %v192 = vpop.f32.mrb[0].mxu0
    %v193 = vadd.f32 %v49, %v192
    %v194 = vpop.f32.mrb[0].mxu0
    %v195 = vadd.f32 %v45, %v194
    %v196 = vpop.f32.mrb[0].mxu0
    %v197 = vadd.f32 %v49, %v196
    %198 = vmatprep.mubr.bf16.mxu0 0
    %199 = vmatmul.mubr.bf16.gmra.mrb[0].mxu0 %v69
    %v200 = vpop.f32.mrb[0].mxu0
    %v201 = vadd.f32 %v45, %v200
    %v202 = vpop.f32.mrb[0].mxu0
    %v203 = vadd.f32 %v49, %v202
    %v204 = vpop.f32.mrb[0].mxu0
    %v205 = vadd.f32 %v45, %v204
    %v206 = vpop.f32.mrb[0].mxu0
    %v207 = vadd.f32 %v49, %v206
    %208 = vmatprep.mubr.bf16.mxu0 0
    %209 = vmatmul.mubr.bf16.gmra.mrb[0].mxu0 %v70
    %v210 = vpop.f32.mrb[0].mxu0
    %v211 = vadd.f32 %v45, %v210
    %v212 = vpop.f32.mrb[0].mxu0
    %v213 = vadd.f32 %v49, %v212
    %v214 = vpop.f32.mrb[0].mxu0
    %v215 = vadd.f32 %v45, %v214
    %v216 = vpop.f32.mrb[0].mxu0
    %v217 = vadd.f32 %v49, %v216
    %218 = vmatprep.mubr.bf16.mxu0 0
    %219 = vmatmul.mubr.bf16.gmra.mrb[0].mxu0 %v71
    %v220 = vpop.f32.mrb[0].mxu0
    %v221 = vadd.f32 %v45, %v220
    %v222 = vpop.f32.mrb[0].mxu0
    %v223 = vadd.f32 %v49, %v222
    %v224 = vpop.f32.mrb[0].mxu0
    %v225 = vadd.f32 %v45, %v224
    %v226 = vpop.f32.mrb[0].mxu0
    %v227 = vadd.f32 %v49, %v226
    %228 = vdwg.mxu0
    %229 = vst [vmem:[#allocation2] sm:$0xff] %v191
    %230 = vst [vmem:[#allocation2 + $0x8] sm:$0xff] %v193
    %231 = vst [vmem:[#allocation2 + $0x10] sm:$0xff] %v195
    %232 = vst [vmem:[#allocation2 + $0x18] sm:$0xff] %v197
    %233 = vst [vmem:[#allocation2 + $0x20] sm:$0xff] %v201
    %234 = vst [vmem:[#allocation2 + $0x28] sm:$0xff] %v203
    %235 = vst [vmem:[#allocation2 + $0x30] sm:$0xff] %v205
    %236 = vst [vmem:[#allocation2 + $0x38] sm:$0xff] %v207
    %237 = vst [vmem:[#allocation2 + $0x40] sm:$0xff] %v211
    %238 = vst [vmem:[#allocation2 + $0x48] sm:$0xff] %v213
    %239 = vst [vmem:[#allocation2 + $0x50] sm:$0xff] %v215
    %240 = vst [vmem:[#allocation2 + $0x58] sm:$0xff] %v217
    %241 = vst [vmem:[#allocation2 + $0x60] sm:$0xff] %v221
    %242 = vst [vmem:[#allocation2 + $0x68] sm:$0xff] %v223
    %243 = vst [vmem:[#allocation2 + $0x70] sm:$0xff] %v225
    %244 = vst [vmem:[#allocation2 + $0x78] sm:$0xff] %v227
    // Predicated region
    $region14: #{rnn_module_forward.5} parent=1 // pred_check
      _
    $region15: #{rnn_module_forward.5} parent=1 // pred_check_branch
      %246 = sbr.rel (0) target = $region17
    $region16: #{rnn_module_forward.5} parent=1 // pred_region
      %s248 = ssub.s32 2048, 2048
      %249 = vsyncadd [#allocation3], %s248
      %s250 = sshll.u32 [#allocation2], 4
      %s251 = int_to_ptr.vmem [resolvable:$true] %s250
      %256 = dma.vmem_to_hbm [thread:$0]  %s251, 2048, %s3, [#allocation3], 256, 256, 16
    $region17: #{rnn_module_forward.5} parent=1 // pred_fallthru
      _
    // Predicated region
    $region18: #{rnn_module_forward.5} parent=1 // pred_check
      _
    $region19: #{rnn_module_forward.5} parent=1 // pred_check_branch
      %258 = sbr.rel (0) target = $region21
    $region20: #{rnn_module_forward.5} parent=1 // pred_region
      %259 = dma.done [#allocation3], 2048
    $region21: #{rnn_module_forward.5} parent=1 // pred_fallthru
      _
    %260 = vsyncpa [#allocation3], 1

// kernel: rnn_module_forward.3
$region0: #{rnn_module_forward.3}
  #allocation0 [shape = 'u32[]', space=smem, size = 0x4, offset = 0x4, fixed_abs, tag = 'smem constant byte address 0x4 - core index']
  #allocation1 [shape = 'u32[144,128]{1,0:T(1,128)}', space=vmem, size = 0x12000, scoped, tag = 'internal scratch']
  %s0 = inlined_call_operand.vmem [shape: bf16[64,128], index: 0, kind: input, shape index: {}]
  %s1 = inlined_call_operand.vmem [shape: bf16[128,512], index: 1, kind: input, shape index: {}]
  %s2 = inlined_call_operand.vmem [shape: f32[1,512], index: 2, kind: input, shape index: {}]
  %s3 = inlined_call_operand.vmem [shape: bf16[64,512], index: 3, kind: output, shape index: {}]
  %s4 = sld [smem:[#allocation0]]
  $region22: #{rnn_module_forward.3} parent=0
    _
  %s6 = ssub.s32 1, %s4
  %s7 = scalar_select 0, %s6, %s4
  // Predicated region
  $region2: #{rnn_module_forward.3} parent=0 // pred_check
    _
  $region3: #{rnn_module_forward.3} parent=0 // pred_check_branch
    %9 = sbr.rel (0) target = $region5
  $region4: #{rnn_module_forward.3} parent=0 // pred_region
    _
  $region5: #{rnn_module_forward.3} parent=0 // pred_fallthru
    _
  // Predicated region
  $region6: #{rnn_module_forward.3} parent=0 // pred_check
    _
  $region7: #{rnn_module_forward.3} parent=0 // pred_check_branch
    %11 = sbr.rel (0) target = $region9
  $region8: #{rnn_module_forward.3} parent=0 // pred_region
    _
  $region9: #{rnn_module_forward.3} parent=0 // pred_fallthru
    _
  // Predicated region
  $region10: #{rnn_module_forward.3} parent=0 // pred_check
    _
  $region11: #{rnn_module_forward.3} parent=0 // pred_check_branch
    %13 = sbr.rel (0) target = $region13
  $region12: #{rnn_module_forward.3} parent=0 // pred_region
    _
  $region13: #{rnn_module_forward.3} parent=0 // pred_fallthru
    _
  %v15 = vld [vmem:[%s0] sm:$0xf]
  %v16 = vld [vmem:[%s0 + $0x4] sm:$0xf]
  %v17 = vld [vmem:[%s0 + $0x8] sm:$0xf]
  %v18 = vld [vmem:[%s0 + $0xc] sm:$0xf]
  %v19 = vld [vmem:[%s0 + $0x10] sm:$0xf]
  %v20 = vld [vmem:[%s0 + $0x14] sm:$0xf]
  %v21 = vld [vmem:[%s0 + $0x18] sm:$0xf]
  %v22 = vld [vmem:[%s0 + $0x1c] sm:$0xf]
  %v23 = vld [vmem:[%s1] sm:$0xff]
  %v24 = vld [vmem:[%s1 + $0x8] sm:$0xff]
  %v25 = vld [vmem:[%s1 + $0x10] sm:$0xff]
  %v26 = vld [vmem:[%s1 + $0x18] sm:$0xff]
  %v27 = vld [vmem:[%s1 + $0x20] sm:$0xff]
  %v28 = vld [vmem:[%s1 + $0x28] sm:$0xff]
  %v29 = vld [vmem:[%s1 + $0x30] sm:$0xff]
  %v30 = vld [vmem:[%s1 + $0x38] sm:$0xff]
  %v31 = vld [vmem:[%s1 + $0x40] sm:$0xff]
  %v32 = vld [vmem:[%s1 + $0x48] sm:$0xff]
  %v33 = vld [vmem:[%s1 + $0x50] sm:$0xff]
  %v34 = vld [vmem:[%s1 + $0x58] sm:$0xff]
  %v35 = vld [vmem:[%s1 + $0x60] sm:$0xff]
  %v36 = vld [vmem:[%s1 + $0x68] sm:$0xff]
  %v37 = vld [vmem:[%s1 + $0x70] sm:$0xff]
  %v38 = vld [vmem:[%s1 + $0x78] sm:$0xff]
  %v39 = vld [vmem:[%s1 + $0x80] sm:$0xff]
  %v40 = vld [vmem:[%s1 + $0x88] sm:$0xff]
  %v41 = vld [vmem:[%s1 + $0x90] sm:$0xff]
  %v42 = vld [vmem:[%s1 + $0x98] sm:$0xff]
  %v43 = vld [vmem:[%s1 + $0xa0] sm:$0xff]
  %v44 = vld [vmem:[%s1 + $0xa8] sm:$0xff]
  %v45 = vld [vmem:[%s1 + $0xb0] sm:$0xff]
  %v46 = vld [vmem:[%s1 + $0xb8] sm:$0xff]
  %v47 = vld [vmem:[%s1 + $0xc0] sm:$0xff]
  %v48 = vld [vmem:[%s1 + $0xc8] sm:$0xff]
  %v49 = vld [vmem:[%s1 + $0xd0] sm:$0xff]
  %v50 = vld [vmem:[%s1 + $0xd8] sm:$0xff]
  %v51 = vld [vmem:[%s1 + $0xe0] sm:$0xff]
  %v52 = vld [vmem:[%s1 + $0xe8] sm:$0xff]
  %v53 = vld [vmem:[%s1 + $0xf0] sm:$0xff]
  %v54 = vld [vmem:[%s1 + $0xf8] sm:$0xff]
  %v55 = vld [vmem:[%s2] sm:$0xf]
  %v57 = vlaneseq
  %v58 = vshrl.u32 %v57, 7
  %v59 = vsub.s32 0, %v58
  %v60 = vrot.slane %v55, %v59
  %v61 = vlaneseq
  %v62 = vshrl.u32 %v61, 7
  %v63 = vsub.s32 1, %v62
  %v64 = vrot.slane %v55, %v63
  %v65 = vlaneseq
  %v66 = vshrl.u32 %v65, 7
  %v67 = vsub.s32 2, %v66
  %v68 = vrot.slane %v55, %v67
  %v69 = vlaneseq
  %v70 = vshrl.u32 %v69, 7
  %v71 = vsub.s32 3, %v70
  %v72 = vrot.slane %v55, %v71
  %v85 = vunpack.c.l.b16 %v15
  %v86 = vunpack.c.l.b16 %v16
  %v87 = vunpack.c.l.b16 %v17
  %v88 = vunpack.c.l.b16 %v18
  %v89 = vunpack.c.l.b16 %v19
  %v90 = vunpack.c.l.b16 %v20
  %v91 = vunpack.c.l.b16 %v21
  %v92 = vunpack.c.l.b16 %v22
  %v93 = vpack.c.b16 %v86, %v85
  %v94 = vpack.c.b16 %v88, %v87
  %v95 = vpack.c.b16 %v90, %v89
  %v96 = vpack.c.b16 %v92, %v91
  %v133 = vunpack.c.l.b16 %v23
  %v134 = vunpack.c.h.b16 %v23
  %v135 = vunpack.c.l.b16 %v24
  %v136 = vunpack.c.h.b16 %v24
  %v137 = vunpack.c.l.b16 %v25
  %v138 = vunpack.c.h.b16 %v25
  %v139 = vunpack.c.l.b16 %v26
  %v140 = vunpack.c.h.b16 %v26
  %v141 = vunpack.c.l.b16 %v27
  %v142 = vunpack.c.h.b16 %v27
  %v143 = vunpack.c.l.b16 %v28
  %v144 = vunpack.c.h.b16 %v28
  %v145 = vunpack.c.l.b16 %v29
  %v146 = vunpack.c.h.b16 %v29
  %v147 = vunpack.c.l.b16 %v30
  %v148 = vunpack.c.h.b16 %v30
  %v149 = vunpack.c.l.b16 %v31
  %v150 = vunpack.c.h.b16 %v31
  %v151 = vunpack.c.l.b16 %v32
  %v152 = vunpack.c.h.b16 %v32
  %v153 = vunpack.c.l.b16 %v33
  %v154 = vunpack.c.h.b16 %v33
  %v155 = vunpack.c.l.b16 %v34
  %v156 = vunpack.c.h.b16 %v34
  %v157 = vunpack.c.l.b16 %v35
  %v158 = vunpack.c.h.b16 %v35
  %v159 = vunpack.c.l.b16 %v36
  %v160 = vunpack.c.h.b16 %v36
  %v161 = vunpack.c.l.b16 %v37
  %v162 = vunpack.c.h.b16 %v37
  %v163 = vunpack.c.l.b16 %v38
  %v164 = vunpack.c.h.b16 %v38
  %v165 = vunpack.c.l.b16 %v39
  %v166 = vunpack.c.h.b16 %v39
  %v167 = vunpack.c.l.b16 %v40
  %v168 = vunpack.c.h.b16 %v40
  %v169 = vunpack.c.l.b16 %v41
  %v170 = vunpack.c.h.b16 %v41
  %v171 = vunpack.c.l.b16 %v42
  %v172 = vunpack.c.h.b16 %v42
  %v173 = vunpack.c.l.b16 %v43
  %v174 = vunpack.c.h.b16 %v43
  %v175 = vunpack.c.l.b16 %v44
  %v176 = vunpack.c.h.b16 %v44
  %v177 = vunpack.c.l.b16 %v45
  %v178 = vunpack.c.h.b16 %v45
  %v179 = vunpack.c.l.b16 %v46
  %v180 = vunpack.c.h.b16 %v46
  %v181 = vunpack.c.l.b16 %v47
  %v182 = vunpack.c.h.b16 %v47
  %v183 = vunpack.c.l.b16 %v48
  %v184 = vunpack.c.h.b16 %v48
  %v185 = vunpack.c.l.b16 %v49
  %v186 = vunpack.c.h.b16 %v49
  %v187 = vunpack.c.l.b16 %v50
  %v188 = vunpack.c.h.b16 %v50
  %v189 = vunpack.c.l.b16 %v51
  %v190 = vunpack.c.h.b16 %v51
  %v191 = vunpack.c.l.b16 %v52
  %v192 = vunpack.c.h.b16 %v52
  %v193 = vunpack.c.l.b16 %v53
  %v194 = vunpack.c.h.b16 %v53
  %v195 = vunpack.c.l.b16 %v54
  %v196 = vunpack.c.h.b16 %v54
  %v197 = vpack.c.b16 %v137, %v133
  %v198 = vpack.c.b16 %v138, %v134
  %v199 = vpack.c.b16 %v139, %v135
  %v200 = vpack.c.b16 %v140, %v136
  %v201 = vpack.c.b16 %v145, %v141
  %v202 = vpack.c.b16 %v146, %v142
  %v203 = vpack.c.b16 %v147, %v143
  %v204 = vpack.c.b16 %v148, %v144
  %v205 = vpack.c.b16 %v153, %v149
  %v206 = vpack.c.b16 %v154, %v150
  %v207 = vpack.c.b16 %v155, %v151
  %v208 = vpack.c.b16 %v156, %v152
  %v209 = vpack.c.b16 %v161, %v157
  %v210 = vpack.c.b16 %v162, %v158
  %v211 = vpack.c.b16 %v163, %v159
  %v212 = vpack.c.b16 %v164, %v160
  %v213 = vpack.c.b16 %v169, %v165
  %v214 = vpack.c.b16 %v170, %v166
  %v215 = vpack.c.b16 %v171, %v167
  %v216 = vpack.c.b16 %v172, %v168
  %v217 = vpack.c.b16 %v177, %v173
  %v218 = vpack.c.b16 %v178, %v174
  %v219 = vpack.c.b16 %v179, %v175
  %v220 = vpack.c.b16 %v180, %v176
  %v221 = vpack.c.b16 %v185, %v181
  %v222 = vpack.c.b16 %v186, %v182
  %v223 = vpack.c.b16 %v187, %v183
  %v224 = vpack.c.b16 %v188, %v184
  %v225 = vpack.c.b16 %v193, %v189
  %v226 = vpack.c.b16 %v194, %v190
  %v227 = vpack.c.b16 %v195, %v191
  %v228 = vpack.c.b16 %v196, %v192
  %261 = vmatprep.subr.bf16.mxu0 %v198
  %262 = vmatpush1.bf16.msra.mxu0 %v197
  %263 = vmatprep.subr.bf16.mxu0 %v202
  %264 = vmatpush1.bf16.msra.mxu0 %v201
  %265 = vmatprep.subr.bf16.mxu0 %v206
  %266 = vmatpush1.bf16.msra.mxu0 %v205
  %267 = vmatprep.subr.bf16.mxu0 %v210
  %268 = vmatpush1.bf16.msra.mxu0 %v209
  %269 = vmatprep.subr.bf16.mxu0 %v214
  %270 = vmatpush1.bf16.msra.mxu0 %v213
  %271 = vmatprep.subr.bf16.mxu0 %v218
  %272 = vmatpush1.bf16.msra.mxu0 %v217
  %273 = vmatprep.subr.bf16.mxu0 %v222
  %274 = vmatpush1.bf16.msra.mxu0 %v221
  %275 = vmatprep.subr.bf16.mxu0 %v226
  %276 = vmatpush1.bf16.msra.mxu0 %v225
  %277 = vmatprep.subr.bf16.mxu0 0
  %278 = vmatpush1.bf16.msra.mxu0 0
  %279 = vmatprep.subr.bf16.mxu0 0
  %280 = vmatpush1.bf16.msra.mxu0 0
  %281 = vmatprep.subr.bf16.mxu0 0
  %282 = vmatpush1.bf16.msra.mxu0 0
  %283 = vmatprep.subr.bf16.mxu0 0
  %284 = vmatpush1.bf16.msra.mxu0 0
  %285 = vmatprep.subr.bf16.mxu0 0
  %286 = vmatpush1.bf16.msra.mxu0 0
  %287 = vmatprep.subr.bf16.mxu0 0
  %288 = vmatpush1.bf16.msra.mxu0 0
  %289 = vmatprep.subr.bf16.mxu0 0
  %290 = vmatpush1.bf16.msra.mxu0 0
  %291 = vmatprep.subr.bf16.mxu0 0
  %292 = vmatpush1.bf16.msra.mxu0 0
  %293 = vmatprep.mubr.bf16.mxu0 0
  %294 = vmatmul.mubr.bf16.gmra.mrb[0].mxu0 %v93
  %v295 = vpop.f32.mrb[0].mxu0
  %v296 = vadd.f32 %v60, %v295
  %v297 = vpop.f32.mrb[0].mxu0
  %v298 = vadd.f32 %v64, %v297
  %v299 = vpop.f32.mrb[0].mxu0
  %v300 = vadd.f32 %v60, %v299
  %v301 = vpop.f32.mrb[0].mxu0
  %v302 = vadd.f32 %v64, %v301
  %303 = vmatprep.mubr.bf16.mxu0 0
  %304 = vmatmul.mubr.bf16.gmra.mrb[0].mxu0 %v94
  %v305 = vpop.f32.mrb[0].mxu0
  %v306 = vadd.f32 %v60, %v305
  %v307 = vpop.f32.mrb[0].mxu0
  %v308 = vadd.f32 %v64, %v307
  %v309 = vpop.f32.mrb[0].mxu0
  %v310 = vadd.f32 %v60, %v309
  %v311 = vpop.f32.mrb[0].mxu0
  %v312 = vadd.f32 %v64, %v311
  %313 = vmatprep.mubr.bf16.mxu0 0
  %314 = vmatmul.mubr.bf16.gmra.mrb[0].mxu0 %v95
  %v315 = vpop.f32.mrb[0].mxu0
  %v316 = vadd.f32 %v60, %v315
  %v317 = vpop.f32.mrb[0].mxu0
  %v318 = vadd.f32 %v64, %v317
  %v319 = vpop.f32.mrb[0].mxu0
  %v320 = vadd.f32 %v60, %v319
  %v321 = vpop.f32.mrb[0].mxu0
  %v322 = vadd.f32 %v64, %v321
  %323 = vmatprep.mubr.bf16.mxu0 0
  %324 = vmatmul.mubr.bf16.gmra.mrb[0].mxu0 %v96
  %v325 = vpop.f32.mrb[0].mxu0
  %v326 = vadd.f32 %v60, %v325
  %v327 = vpop.f32.mrb[0].mxu0
  %v328 = vadd.f32 %v64, %v327
  %v329 = vpop.f32.mrb[0].mxu0
  %v330 = vadd.f32 %v60, %v329
  %v331 = vpop.f32.mrb[0].mxu0
  %v332 = vadd.f32 %v64, %v331
  %333 = vdwg.mxu0
  %334 = vmatprep.subr.bf16.mxu0 %v200
  %335 = vmatpush1.bf16.msra.mxu0 %v199
  %336 = vmatprep.subr.bf16.mxu0 %v204
  %337 = vmatpush1.bf16.msra.mxu0 %v203
  %338 = vmatprep.subr.bf16.mxu0 %v208
  %339 = vmatpush1.bf16.msra.mxu0 %v207
  %340 = vmatprep.subr.bf16.mxu0 %v212
  %341 = vmatpush1.bf16.msra.mxu0 %v211
  %342 = vmatprep.subr.bf16.mxu0 %v216
  %343 = vmatpush1.bf16.msra.mxu0 %v215
  %344 = vmatprep.subr.bf16.mxu0 %v220
  %345 = vmatpush1.bf16.msra.mxu0 %v219
  %346 = vmatprep.subr.bf16.mxu0 %v224
  %347 = vmatpush1.bf16.msra.mxu0 %v223
  %348 = vmatprep.subr.bf16.mxu0 %v228
  %349 = vmatpush1.bf16.msra.mxu0 %v227
  %350 = vmatprep.subr.bf16.mxu0 0
  %351 = vmatpush1.bf16.msra.mxu0 0
  %352 = vmatprep.subr.bf16.mxu0 0
  %353 = vmatpush1.bf16.msra.mxu0 0
  %354 = vmatprep.subr.bf16.mxu0 0
  %355 = vmatpush1.bf16.msra.mxu0 0
  %356 = vmatprep.subr.bf16.mxu0 0
  %357 = vmatpush1.bf16.msra.mxu0 0
  %358 = vmatprep.subr.bf16.mxu0 0
  %359 = vmatpush1.bf16.msra.mxu0 0
  %360 = vmatprep.subr.bf16.mxu0 0
  %361 = vmatpush1.bf16.msra.mxu0 0
  %362 = vmatprep.subr.bf16.mxu0 0
  %363 = vmatpush1.bf16.msra.mxu0 0
  %364 = vmatprep.subr.bf16.mxu0 0
  %365 = vmatpush1.bf16.msra.mxu0 0
  %366 = vmatprep.mubr.bf16.mxu0 0
  %367 = vmatmul.mubr.bf16.gmra.mrb[0].mxu0 %v93
  %v368 = vpop.f32.mrb[0].mxu0
  %v369 = vadd.f32 %v68, %v368
  %v370 = vpop.f32.mrb[0].mxu0
  %v371 = vadd.f32 %v72, %v370
  %v372 = vpop.f32.mrb[0].mxu0
  %v373 = vadd.f32 %v68, %v372
  %v374 = vpop.f32.mrb[0].mxu0
  %v375 = vadd.f32 %v72, %v374
  %376 = vmatprep.mubr.bf16.mxu0 0
  %377 = vmatmul.mubr.bf16.gmra.mrb[0].mxu0 %v94
  %v378 = vpop.f32.mrb[0].mxu0
  %v379 = vadd.f32 %v68, %v378
  %v380 = vpop.f32.mrb[0].mxu0
  %v381 = vadd.f32 %v72, %v380
  %v382 = vpop.f32.mrb[0].mxu0
  %v383 = vadd.f32 %v68, %v382
  %v384 = vpop.f32.mrb[0].mxu0
  %v385 = vadd.f32 %v72, %v384
  %386 = vmatprep.mubr.bf16.mxu0 0
  %387 = vmatmul.mubr.bf16.gmra.mrb[0].mxu0 %v95
  %v388 = vpop.f32.mrb[0].mxu0
  %v389 = vadd.f32 %v68, %v388
  %v390 = vpop.f32.mrb[0].mxu0
  %v391 = vadd.f32 %v72, %v390
  %v392 = vpop.f32.mrb[0].mxu0
  %v393 = vadd.f32 %v68, %v392
  %v394 = vpop.f32.mrb[0].mxu0
  %v395 = vadd.f32 %v72, %v394
  %396 = vmatprep.mubr.bf16.mxu0 0
  %397 = vmatmul.mubr.bf16.gmra.mrb[0].mxu0 %v96
  %v398 = vpop.f32.mrb[0].mxu0
  %v399 = vadd.f32 %v68, %v398
  %v400 = vpop.f32.mrb[0].mxu0
  %v401 = vadd.f32 %v72, %v400
  %v402 = vpop.f32.mrb[0].mxu0
  %v403 = vadd.f32 %v68, %v402
  %v404 = vpop.f32.mrb[0].mxu0
  %v405 = vadd.f32 %v72, %v404
  %406 = vdwg.mxu0
  %v407 = vpack.c.bf16 %v300, %v296
  %v408 = vpack.c.bf16 %v302, %v298
  %v409 = vpack.c.bf16 %v373, %v369
  %v410 = vpack.c.bf16 %v375, %v371
  %v411 = vpack.c.bf16 %v310, %v306
  %v412 = vpack.c.bf16 %v312, %v308
  %v413 = vpack.c.bf16 %v383, %v379
  %v414 = vpack.c.bf16 %v385, %v381
  %v415 = vpack.c.bf16 %v320, %v316
  %v416 = vpack.c.bf16 %v322, %v318
  %v417 = vpack.c.bf16 %v393, %v389
  %v418 = vpack.c.bf16 %v395, %v391
  %v419 = vpack.c.bf16 %v330, %v326
  %v420 = vpack.c.bf16 %v332, %v328
  %v421 = vpack.c.bf16 %v403, %v399
  %v422 = vpack.c.bf16 %v405, %v401
  %v439 = vunpack.c.l.b16 %v407
  %v440 = vunpack.c.l.b16 %v408
  %v441 = vunpack.c.l.b16 %v409
  %v442 = vunpack.c.l.b16 %v410
  %v443 = vunpack.c.h.b16 %v407
  %v444 = vunpack.c.h.b16 %v408
  %v445 = vunpack.c.h.b16 %v409
  %v446 = vunpack.c.h.b16 %v410
  %v447 = vunpack.c.l.b16 %v411
  %v448 = vunpack.c.l.b16 %v412
  %v449 = vunpack.c.l.b16 %v413
  %v450 = vunpack.c.l.b16 %v414
  %v451 = vunpack.c.h.b16 %v411
  %v452 = vunpack.c.h.b16 %v412
  %v453 = vunpack.c.h.b16 %v413
  %v454 = vunpack.c.h.b16 %v414
  %v455 = vunpack.c.l.b16 %v415
  %v456 = vunpack.c.l.b16 %v416
  %v457 = vunpack.c.l.b16 %v417
  %v458 = vunpack.c.l.b16 %v418
  %v459 = vunpack.c.h.b16 %v415
  %v460 = vunpack.c.h.b16 %v416
  %v461 = vunpack.c.h.b16 %v417
  %v462 = vunpack.c.h.b16 %v418
  %v463 = vunpack.c.l.b16 %v419
  %v464 = vunpack.c.l.b16 %v420
  %v465 = vunpack.c.l.b16 %v421
  %v466 = vunpack.c.l.b16 %v422
  %v467 = vunpack.c.h.b16 %v419
  %v468 = vunpack.c.h.b16 %v420
  %v469 = vunpack.c.h.b16 %v421
  %v470 = vunpack.c.h.b16 %v422
  %v471 = vpack.c.b16 %v440, %v439
  %v472 = vpack.c.b16 %v442, %v441
  %v473 = vpack.c.b16 %v444, %v443
  %v474 = vpack.c.b16 %v446, %v445
  %v475 = vpack.c.b16 %v448, %v447
  %v476 = vpack.c.b16 %v450, %v449
  %v477 = vpack.c.b16 %v452, %v451
  %v478 = vpack.c.b16 %v454, %v453
  %v479 = vpack.c.b16 %v456, %v455
  %v480 = vpack.c.b16 %v458, %v457
  %v481 = vpack.c.b16 %v460, %v459
  %v482 = vpack.c.b16 %v462, %v461
  %v483 = vpack.c.b16 %v464, %v463
  %v484 = vpack.c.b16 %v466, %v465
  %v485 = vpack.c.b16 %v468, %v467
  %v486 = vpack.c.b16 %v470, %v469
  %503 = vst [vmem:[%s3] sm:$0xff] %v471
  %504 = vst [vmem:[%s3 + $0x8] sm:$0xff] %v472
  %505 = vst [vmem:[%s3 + $0x10] sm:$0xff] %v473
  %506 = vst [vmem:[%s3 + $0x18] sm:$0xff] %v474
  %507 = vst [vmem:[%s3 + $0x20] sm:$0xff] %v475
  %508 = vst [vmem:[%s3 + $0x28] sm:$0xff] %v476
  %509 = vst [vmem:[%s3 + $0x30] sm:$0xff] %v477
  %510 = vst [vmem:[%s3 + $0x38] sm:$0xff] %v478
  %511 = vst [vmem:[%s3 + $0x40] sm:$0xff] %v479
  %512 = vst [vmem:[%s3 + $0x48] sm:$0xff] %v480
  %513 = vst [vmem:[%s3 + $0x50] sm:$0xff] %v481
  %514 = vst [vmem:[%s3 + $0x58] sm:$0xff] %v482
  %515 = vst [vmem:[%s3 + $0x60] sm:$0xff] %v483
  %516 = vst [vmem:[%s3 + $0x68] sm:$0xff] %v484
  %517 = vst [vmem:[%s3 + $0x70] sm:$0xff] %v485
  %518 = vst [vmem:[%s3 + $0x78] sm:$0xff] %v486
  // Predicated region
  $region14: #{rnn_module_forward.3} parent=0 // pred_check
    _
  $region15: #{rnn_module_forward.3} parent=0 // pred_check_branch
    %520 = sbr.rel (0) target = $region17
  $region16: #{rnn_module_forward.3} parent=0 // pred_region
    _
  $region17: #{rnn_module_forward.3} parent=0 // pred_fallthru
    _
  // Predicated region
  $region18: #{rnn_module_forward.3} parent=0 // pred_check
    _
  $region19: #{rnn_module_forward.3} parent=0 // pred_check_branch
    %522 = sbr.rel (0) target = $region21
  $region20: #{rnn_module_forward.3} parent=0 // pred_region
    _
  $region21: #{rnn_module_forward.3} parent=0 // pred_fallthru
    _

// kernel: rnn_module_forward.4
$region0: #{rnn_module_forward.4}
  #allocation0 [shape = 'u32[]', space=smem, size = 0x4, offset = 0x4, fixed_abs, tag = 'smem constant byte address 0x4 - core index']
  #allocation1 [shape = 'u32[144,128]{1,0:T(1,128)}', space=vmem, size = 0x12000, scoped, tag = 'internal scratch']
  #allocation2 [shape = 'f32[8,128]{1,0:T(8,128)}', space=vmem, size = 0x1000, scoped, tag = 'scratch operand']
  #allocation3 [shape = 'f32[8,128]{1,0:T(8,128)}', space=vmem, size = 0x1000, scoped, tag = 'scratch operand']
  %s0 = inlined_call_operand.vmem [shape: bf16[8,8,512], index: 0, kind: input, shape index: {}]
  %s1 = inlined_call_operand.vmem [shape: f32[8,128], index: 1, kind: input, shape index: {}]
  %s2 = inlined_call_operand.vmem [shape: f32[8,128], index: 2, kind: input, shape index: {}]
  %s3 = inlined_call_operand.vmem [shape: bf16[128,512], index: 3, kind: input, shape index: {}]
  %s4 = inlined_call_operand.vmem [shape: bf16[8,8,128], index: 4, kind: output, shape index: {0}]
  %s5 = inlined_call_operand.hbm [shape: f32[8,128], index: 5, kind: output, shape index: {1}]
  %s6 = inlined_call_operand.hbm [shape: f32[8,128], index: 6, kind: output, shape index: {2}]
  %7 = xla_tuple %s4, %s5, %s6
  %s8 = sld [smem:[#allocation0]]
  $region50: #{rnn_module_forward.4} parent=0
    _
  %s10 = ssub.s32 1, %s8
  %s11 = scalar_select 0, %s10, %s8
  $region1: #{rnn_module_forward.4} parent=0
    #allocation4 [shape = 'u8[4096]{0}', space=vmem, size = 0x1000, scoped, tag = 'output window, operand 1, single buffered']
    #allocation5 [shape = 's32[1]{0}', space=sflag, size = 0x4, scoped, tag = 'scoped memory for rnn_module_forward.4']
    #allocation6 [shape = 'u8[4096]{0}', space=vmem, size = 0x1000, scoped, tag = 'output window, operand 2, single buffered']
    #allocation7 [shape = 's32[1]{0}', space=sflag, size = 0x4, scoped, tag = 'scoped memory for rnn_module_forward.4']
    %12 = vsyncpa [#allocation5], 0
    %13 = vsyncpa [#allocation7], 0
    // Predicated region
    $region2: #{rnn_module_forward.4} parent=1 // pred_check
      _
    $region3: #{rnn_module_forward.4} parent=1 // pred_check_branch
      %15 = sbr.rel (0) target = $region5
    $region4: #{rnn_module_forward.4} parent=1 // pred_region
      _
    $region5: #{rnn_module_forward.4} parent=1 // pred_fallthru
      _
    // Predicated region
    $region6: #{rnn_module_forward.4} parent=1 // pred_check
      _
    $region7: #{rnn_module_forward.4} parent=1 // pred_check_branch
      %17 = sbr.rel (0) target = $region9
    $region8: #{rnn_module_forward.4} parent=1 // pred_region
      _
    $region9: #{rnn_module_forward.4} parent=1 // pred_fallthru
      _
    // Predicated region
    $region10: #{rnn_module_forward.4} parent=1 // pred_check
      _
    $region11: #{rnn_module_forward.4} parent=1 // pred_check_branch
      %19 = sbr.rel (0) target = $region13
    $region12: #{rnn_module_forward.4} parent=1 // pred_region
      _
    $region13: #{rnn_module_forward.4} parent=1 // pred_fallthru
      _
    // Predicated region
    $region14: #{rnn_module_forward.4} parent=1 // pred_check
      _
    $region15: #{rnn_module_forward.4} parent=1 // pred_check_branch
      %21 = sbr.rel (0) target = $region17
    $region16: #{rnn_module_forward.4} parent=1 // pred_region
      _
    $region17: #{rnn_module_forward.4} parent=1 // pred_fallthru
      _
    %p23 = scmp.eq.s32.totalorder 0, 0
    // Predicated region
    $region18: #{rnn_module_forward.4} parent=1 // pred_check
      %p24 = pneg %p23
    $region19: #{rnn_module_forward.4} parent=1 // pred_check_branch
      %26 = sbr.rel (%p24) target = $region21
    $region20: #{rnn_module_forward.4} parent=1 // pred_region
      %v27 = vld [vmem:[%s1] sm:$0xff]
      %28 = vst [vmem:[#allocation2] sm:$0xff] %v27
      %v29 = vld [vmem:[%s2] sm:$0xff]
      %30 = vst [vmem:[#allocation3] sm:$0xff] %v29
    $region21: #{rnn_module_forward.4} parent=1 // pred_fallthru
      _
    %v31 = vld [vmem:[%s3] sm:$0xff]
    %v32 = vld [vmem:[%s3 + $0x8] sm:$0xff]
    %v33 = vld [vmem:[%s3 + $0x10] sm:$0xff]
    %v34 = vld [vmem:[%s3 + $0x18] sm:$0xff]
    %v35 = vld [vmem:[%s3 + $0x20] sm:$0xff]
    %v36 = vld [vmem:[%s3 + $0x28] sm:$0xff]
    %v37 = vld [vmem:[%s3 + $0x30] sm:$0xff]
    %v38 = vld [vmem:[%s3 + $0x38] sm:$0xff]
    %v39 = vld [vmem:[%s3 + $0x40] sm:$0xff]
    %v40 = vld [vmem:[%s3 + $0x48] sm:$0xff]
    %v41 = vld [vmem:[%s3 + $0x50] sm:$0xff]
    %v42 = vld [vmem:[%s3 + $0x58] sm:$0xff]
    %v43 = vld [vmem:[%s3 + $0x60] sm:$0xff]
    %v44 = vld [vmem:[%s3 + $0x68] sm:$0xff]
    %v45 = vld [vmem:[%s3 + $0x70] sm:$0xff]
    %v46 = vld [vmem:[%s3 + $0x78] sm:$0xff]
    %v47 = vld [vmem:[%s3 + $0x80] sm:$0xff]
    %v48 = vld [vmem:[%s3 + $0x88] sm:$0xff]
    %v49 = vld [vmem:[%s3 + $0x90] sm:$0xff]
    %v50 = vld [vmem:[%s3 + $0x98] sm:$0xff]
    %v51 = vld [vmem:[%s3 + $0xa0] sm:$0xff]
    %v52 = vld [vmem:[%s3 + $0xa8] sm:$0xff]
    %v53 = vld [vmem:[%s3 + $0xb0] sm:$0xff]
    %v54 = vld [vmem:[%s3 + $0xb8] sm:$0xff]
    %v55 = vld [vmem:[%s3 + $0xc0] sm:$0xff]
    %v56 = vld [vmem:[%s3 + $0xc8] sm:$0xff]
    %v57 = vld [vmem:[%s3 + $0xd0] sm:$0xff]
    %v58 = vld [vmem:[%s3 + $0xd8] sm:$0xff]
    %v59 = vld [vmem:[%s3 + $0xe0] sm:$0xff]
    %v60 = vld [vmem:[%s3 + $0xe8] sm:$0xff]
    %v61 = vld [vmem:[%s3 + $0xf0] sm:$0xff]
    %v62 = vld [vmem:[%s3 + $0xf8] sm:$0xff]
    %v63 = vld [vmem:[#allocation2] sm:$0xff]
    %v64 = vld [vmem:[#allocation3] sm:$0xff]
    %v65 = vld [vmem:[%s0] sm:$0x11]
    %v66 = vld [vmem:[%s0 + $0x8] sm:$0x11]
    %v67 = vld [vmem:[%s0 + $0x10] sm:$0x11]
    %v68 = vld [vmem:[%s0 + $0x18] sm:$0x11]
    %v69 = vld [vmem:[%s0 + $0x20] sm:$0x11]
    %v70 = vld [vmem:[%s0 + $0x28] sm:$0x11]
    %v71 = vld [vmem:[%s0 + $0x30] sm:$0x11]
    %v72 = vld [vmem:[%s0 + $0x38] sm:$0x11]
    %v73 = vld [vmem:[%s0 + $0x40] sm:$0x11]
    %v74 = vld [vmem:[%s0 + $0x48] sm:$0x11]
    %v75 = vld [vmem:[%s0 + $0x50] sm:$0x11]
    %v76 = vld [vmem:[%s0 + $0x58] sm:$0x11]
    %v77 = vld [vmem:[%s0 + $0x60] sm:$0x11]
    %v78 = vld [vmem:[%s0 + $0x68] sm:$0x11]
    %v79 = vld [vmem:[%s0 + $0x70] sm:$0x11]
    %v80 = vld [vmem:[%s0 + $0x78] sm:$0x11]
    %v81 = vunpack.c.l.bf16 %v65
    %v82 = vunpack.c.h.bf16 %v65
    %v83 = vunpack.c.l.bf16 %v66
    %v84 = vunpack.c.h.bf16 %v66
    %v85 = vunpack.c.l.bf16 %v67
    %v86 = vunpack.c.h.bf16 %v67
    %v87 = vunpack.c.l.bf16 %v68
    %v88 = vunpack.c.h.bf16 %v68
    %v89 = vunpack.c.l.bf16 %v69
    %v90 = vunpack.c.h.bf16 %v69
    %v91 = vunpack.c.l.bf16 %v70
    %v92 = vunpack.c.h.bf16 %v70
    %v93 = vunpack.c.l.bf16 %v71
    %v94 = vunpack.c.h.bf16 %v71
    %v95 = vunpack.c.l.bf16 %v72
    %v96 = vunpack.c.h.bf16 %v72
    %v97 = vunpack.c.l.bf16 %v73
    %v98 = vunpack.c.h.bf16 %v73
    %v99 = vunpack.c.l.bf16 %v74
    %v100 = vunpack.c.h.bf16 %v74
    %v101 = vunpack.c.l.bf16 %v75
    %v102 = vunpack.c.h.bf16 %v75
    %v103 = vunpack.c.l.bf16 %v76
    %v104 = vunpack.c.h.bf16 %v76
    %v105 = vunpack.c.l.bf16 %v77
    %v106 = vunpack.c.h.bf16 %v77
    %v107 = vunpack.c.l.bf16 %v78
    %v108 = vunpack.c.h.bf16 %v78
    %v109 = vunpack.c.l.bf16 %v79
    %v110 = vunpack.c.h.bf16 %v79
    %v111 = vunpack.c.l.bf16 %v80
    %v112 = vunpack.c.h.bf16 %v80
    %v113 = vpack.c.bf16 %v63, %v63
    %v146 = vunpack.c.l.b16 %v31
    %v147 = vunpack.c.h.b16 %v31
    %v148 = vunpack.c.l.b16 %v32
    %v149 = vunpack.c.h.b16 %v32
    %v150 = vunpack.c.l.b16 %v33
    %v151 = vunpack.c.h.b16 %v33
    %v152 = vunpack.c.l.b16 %v34
    %v153 = vunpack.c.h.b16 %v34
    %v154 = vunpack.c.l.b16 %v35
    %v155 = vunpack.c.h.b16 %v35
    %v156 = vunpack.c.l.b16 %v36
    %v157 = vunpack.c.h.b16 %v36
    %v158 = vunpack.c.l.b16 %v37
    %v159 = vunpack.c.h.b16 %v37
    %v160 = vunpack.c.l.b16 %v38
    %v161 = vunpack.c.h.b16 %v38
    %v162 = vunpack.c.l.b16 %v39
    %v163 = vunpack.c.h.b16 %v39
    %v164 = vunpack.c.l.b16 %v40
    %v165 = vunpack.c.h.b16 %v40
    %v166 = vunpack.c.l.b16 %v41
    %v167 = vunpack.c.h.b16 %v41
    %v168 = vunpack.c.l.b16 %v42
    %v169 = vunpack.c.h.b16 %v42
    %v170 = vunpack.c.l.b16 %v43
    %v171 = vunpack.c.h.b16 %v43
    %v172 = vunpack.c.l.b16 %v44
    %v173 = vunpack.c.h.b16 %v44
    %v174 = vunpack.c.l.b16 %v45
    %v175 = vunpack.c.h.b16 %v45
    %v176 = vunpack.c.l.b16 %v46
    %v177 = vunpack.c.h.b16 %v46
    %v178 = vunpack.c.l.b16 %v47
    %v179 = vunpack.c.h.b16 %v47
    %v180 = vunpack.c.l.b16 %v48
    %v181 = vunpack.c.h.b16 %v48
    %v182 = vunpack.c.l.b16 %v49
    %v183 = vunpack.c.h.b16 %v49
    %v184 = vunpack.c.l.b16 %v50
    %v185 = vunpack.c.h.b16 %v50
    %v186 = vunpack.c.l.b16 %v51
    %v187 = vunpack.c.h.b16 %v51
    %v188 = vunpack.c.l.b16 %v52
    %v189 = vunpack.c.h.b16 %v52
    %v190 = vunpack.c.l.b16 %v53
    %v191 = vunpack.c.h.b16 %v53
    %v192 = vunpack.c.l.b16 %v54
    %v193 = vunpack.c.h.b16 %v54
    %v194 = vunpack.c.l.b16 %v55
    %v195 = vunpack.c.h.b16 %v55
    %v196 = vunpack.c.l.b16 %v56
    %v197 = vunpack.c.h.b16 %v56
    %v198 = vunpack.c.l.b16 %v57
    %v199 = vunpack.c.h.b16 %v57
    %v200 = vunpack.c.l.b16 %v58
    %v201 = vunpack.c.h.b16 %v58
    %v202 = vunpack.c.l.b16 %v59
    %v203 = vunpack.c.h.b16 %v59
    %v204 = vunpack.c.l.b16 %v60
    %v205 = vunpack.c.h.b16 %v60
    %v206 = vunpack.c.l.b16 %v61
    %v207 = vunpack.c.h.b16 %v61
    %v208 = vunpack.c.l.b16 %v62
    %v209 = vunpack.c.h.b16 %v62
    %v210 = vpack.c.b16 %v150, %v146
    %v211 = vpack.c.b16 %v151, %v147
    %v212 = vpack.c.b16 %v152, %v148
    %v213 = vpack.c.b16 %v153, %v149
    %v214 = vpack.c.b16 %v158, %v154
    %v215 = vpack.c.b16 %v159, %v155
    %v216 = vpack.c.b16 %v160, %v156
    %v217 = vpack.c.b16 %v161, %v157
    %v218 = vpack.c.b16 %v166, %v162
    %v219 = vpack.c.b16 %v167, %v163
    %v220 = vpack.c.b16 %v168, %v164
    %v221 = vpack.c.b16 %v169, %v165
    %v222 = vpack.c.b16 %v174, %v170
    %v223 = vpack.c.b16 %v175, %v171
    %v224 = vpack.c.b16 %v176, %v172
    %v225 = vpack.c.b16 %v177, %v173
    %v226 = vpack.c.b16 %v182, %v178
    %v227 = vpack.c.b16 %v183, %v179
    %v228 = vpack.c.b16 %v184, %v180
    %v229 = vpack.c.b16 %v185, %v181
    %v230 = vpack.c.b16 %v190, %v186
    %v231 = vpack.c.b16 %v191, %v187
    %v232 = vpack.c.b16 %v192, %v188
    %v233 = vpack.c.b16 %v193, %v189
    %v234 = vpack.c.b16 %v198, %v194
    %v235 = vpack.c.b16 %v199, %v195
    %v236 = vpack.c.b16 %v200, %v196
    %v237 = vpack.c.b16 %v201, %v197
    %v238 = vpack.c.b16 %v206, %v202
    %v239 = vpack.c.b16 %v207, %v203
    %v240 = vpack.c.b16 %v208, %v204
    %v241 = vpack.c.b16 %v209, %v205
    %274 = vmatprep.subr.bf16.mxu0 %v211
    %275 = vmatpush1.bf16.msra.mxu0 %v210
    %276 = vmatprep.subr.bf16.mxu0 %v215
    %277 = vmatpush1.bf16.msra.mxu0 %v214
    %278 = vmatprep.subr.bf16.mxu0 %v219
    %279 = vmatpush1.bf16.msra.mxu0 %v218
    %280 = vmatprep.subr.bf16.mxu0 %v223
    %281 = vmatpush1.bf16.msra.mxu0 %v222
    %282 = vmatprep.subr.bf16.mxu0 %v227
    %283 = vmatpush1.bf16.msra.mxu0 %v226
    %284 = vmatprep.subr.bf16.mxu0 %v231
    %285 = vmatpush1.bf16.msra.mxu0 %v230
    %286 = vmatprep.subr.bf16.mxu0 %v235
    %287 = vmatpush1.bf16.msra.mxu0 %v234
    %288 = vmatprep.subr.bf16.mxu0 %v239
    %289 = vmatpush1.bf16.msra.mxu0 %v238
    %290 = vmatprep.subr.bf16.mxu0 0
    %291 = vmatpush1.bf16.msra.mxu0 0
    %292 = vmatprep.subr.bf16.mxu0 0
    %293 = vmatpush1.bf16.msra.mxu0 0
    %294 = vmatprep.subr.bf16.mxu0 0
    %295 = vmatpush1.bf16.msra.mxu0 0
    %296 = vmatprep.subr.bf16.mxu0 0
    %297 = vmatpush1.bf16.msra.mxu0 0
    %298 = vmatprep.subr.bf16.mxu0 0
    %299 = vmatpush1.bf16.msra.mxu0 0
    %300 = vmatprep.subr.bf16.mxu0 0
    %301 = vmatpush1.bf16.msra.mxu0 0
    %302 = vmatprep.subr.bf16.mxu0 0
    %303 = vmatpush1.bf16.msra.mxu0 0
    %304 = vmatprep.subr.bf16.mxu0 0
    %305 = vmatpush1.bf16.msra.mxu0 0
    %306 = vmatprep.mubr.bf16.mxu0 0
    %307 = vmatmul.mubr.bf16.gmra.mrb[0].mxu0 %v113
    %v308 = vpop.f32.mrb[0].mxu0
    %v309 = vadd.f32 0.0, %v308
    %v310 = vpop.f32.mrb[0].mxu0
    %v311 = vadd.f32 0.0, %v310
    %v312 = vpop.f32.mrb[0].mxu0
    %v313 = vpop.f32.mrb[0].mxu0
    %314 = vdwg.mxu0
    %315 = vmatprep.subr.bf16.mxu0 %v213
    %316 = vmatpush1.bf16.msra.mxu0 %v212
    %317 = vmatprep.subr.bf16.mxu0 %v217
    %318 = vmatpush1.bf16.msra.mxu0 %v216
    %319 = vmatprep.subr.bf16.mxu0 %v221
    %320 = vmatpush1.bf16.msra.mxu0 %v220
    %321 = vmatprep.subr.bf16.mxu0 %v225
    %322 = vmatpush1.bf16.msra.mxu0 %v224
    %323 = vmatprep.subr.bf16.mxu0 %v229
    %324 = vmatpush1.bf16.msra.mxu0 %v228
    %325 = vmatprep.subr.bf16.mxu0 %v233
    %326 = vmatpush1.bf16.msra.mxu0 %v232
    %327 = vmatprep.subr.bf16.mxu0 %v237
    %328 = vmatpush1.bf16.msra.mxu0 %v236
    %329 = vmatprep.subr.bf16.mxu0 %v241
    %330 = vmatpush1.bf16.msra.mxu0 %v240
    %331 = vmatprep.subr.bf16.mxu0 0
    %332 = vmatpush1.bf16.msra.mxu0 0
    %333 = vmatprep.subr.bf16.mxu0 0
    %334 = vmatpush1.bf16.msra.mxu0 0
    %335 = vmatprep.subr.bf16.mxu0 0
    %336 = vmatpush1.bf16.msra.mxu0 0
    %337 = vmatprep.subr.bf16.mxu0 0
    %338 = vmatpush1.bf16.msra.mxu0 0
    %339 = vmatprep.subr.bf16.mxu0 0
    %340 = vmatpush1.bf16.msra.mxu0 0
    %341 = vmatprep.subr.bf16.mxu0 0
    %342 = vmatpush1.bf16.msra.mxu0 0
    %343 = vmatprep.subr.bf16.mxu0 0
    %344 = vmatpush1.bf16.msra.mxu0 0
    %345 = vmatprep.subr.bf16.mxu0 0
    %346 = vmatpush1.bf16.msra.mxu0 0
    %347 = vmatprep.mubr.bf16.mxu0 0
    %348 = vmatmul.mubr.bf16.gmra.mrb[0].mxu0 %v113
    %v349 = vpop.f32.mrb[0].mxu0
    %v350 = vadd.f32 0.0, %v349
    %v351 = vpop.f32.mrb[0].mxu0
    %v352 = vadd.f32 0.0, %v351
    %v353 = vpop.f32.mrb[0].mxu0
    %v354 = vpop.f32.mrb[0].mxu0
    %355 = vdwg.mxu0
    %v360 = vrot.slane %v309, 1
    %v361 = vrot.slane %v311, 1
    %v362 = vrot.slane %v350, 1
    %v363 = vrot.slane %v352, 1
    %v364 = vrot.slane %v309, 2
    %v365 = vrot.slane %v311, 2
    %v366 = vrot.slane %v350, 2
    %v367 = vrot.slane %v352, 2
    %v368 = vrot.slane %v309, 3
    %v369 = vrot.slane %v311, 3
    %v370 = vrot.slane %v350, 3
    %v371 = vrot.slane %v352, 3
    %v372 = vrot.slane %v309, 4
    %v373 = vrot.slane %v311, 4
    %v374 = vrot.slane %v350, 4
    %v375 = vrot.slane %v352, 4
    %v376 = vrot.slane %v309, 5
    %v377 = vrot.slane %v311, 5
    %v378 = vrot.slane %v350, 5
    %v379 = vrot.slane %v352, 5
    %v380 = vrot.slane %v309, 6
    %v381 = vrot.slane %v311, 6
    %v382 = vrot.slane %v350, 6
    %v383 = vrot.slane %v352, 6
    %v384 = vrot.slane %v309, 7
    %v385 = vrot.slane %v311, 7
    %v386 = vrot.slane %v350, 7
    %v387 = vrot.slane %v352, 7
    %v420 = vadd.f32 %v81, %v309
    %v421 = vadd.f32 %v82, %v311
    %v422 = vadd.f32 %v83, %v350
    %v423 = vadd.f32 %v84, %v352
    %v424 = vadd.f32 %v85, %v360
    %v425 = vadd.f32 %v86, %v361
    %v426 = vadd.f32 %v87, %v362
    %v427 = vadd.f32 %v88, %v363
    %v428 = vadd.f32 %v89, %v364
    %v429 = vadd.f32 %v90, %v365
    %v430 = vadd.f32 %v91, %v366
    %v431 = vadd.f32 %v92, %v367
    %v432 = vadd.f32 %v93, %v368
    %v433 = vadd.f32 %v94, %v369
    %v434 = vadd.f32 %v95, %v370
    %v435 = vadd.f32 %v96, %v371
    %v436 = vadd.f32 %v97, %v372
    %v437 = vadd.f32 %v98, %v373
    %v438 = vadd.f32 %v99, %v374
    %v439 = vadd.f32 %v100, %v375
    %v440 = vadd.f32 %v101, %v376
    %v441 = vadd.f32 %v102, %v377
    %v442 = vadd.f32 %v103, %v378
    %v443 = vadd.f32 %v104, %v379
    %v444 = vadd.f32 %v105, %v380
    %v445 = vadd.f32 %v106, %v381
    %v446 = vadd.f32 %v107, %v382
    %v447 = vadd.f32 %v108, %v383
    %v448 = vadd.f32 %v109, %v384
    %v449 = vadd.f32 %v110, %v385
    %v450 = vadd.f32 %v111, %v386
    %v451 = vadd.f32 %v112, %v387
    %v452 = vxor.u32 %v420, 2147483648
    %v453 = vxor.u32 %v421, 2147483648
    %v454 = vxor.u32 %v422, 2147483648
    %v455 = vxor.u32 %v424, 2147483648
    %v456 = vxor.u32 %v425, 2147483648
    %v457 = vxor.u32 %v426, 2147483648
    %v458 = vxor.u32 %v428, 2147483648
    %v459 = vxor.u32 %v429, 2147483648
    %v460 = vxor.u32 %v430, 2147483648
    %v461 = vxor.u32 %v432, 2147483648
    %v462 = vxor.u32 %v433, 2147483648
    %v463 = vxor.u32 %v434, 2147483648
    %v464 = vxor.u32 %v436, 2147483648
    %v465 = vxor.u32 %v437, 2147483648
    %v466 = vxor.u32 %v438, 2147483648
    %v467 = vxor.u32 %v440, 2147483648
    %v468 = vxor.u32 %v441, 2147483648
    %v469 = vxor.u32 %v442, 2147483648
    %v470 = vxor.u32 %v444, 2147483648
    %v471 = vxor.u32 %v445, 2147483648
    %v472 = vxor.u32 %v446, 2147483648
    %v473 = vxor.u32 %v448, 2147483648
    %v474 = vxor.u32 %v449, 2147483648
    %v475 = vxor.u32 %v450, 2147483648
    %v476 = vmul.f32 %v452, 1.442695
    %v477 = vpow.pop %v476
    %v478 = vmul.f32 %v453, 1.442695
    %v479 = vpow.pop %v478
    %v480 = vmul.f32 %v454, 1.442695
    %v481 = vpow.pop %v480
    %v482 = vmul.f32 %v455, 1.442695
    %v483 = vpow.pop %v482
    %v484 = vmul.f32 %v456, 1.442695
    %v485 = vpow.pop %v484
    %v486 = vmul.f32 %v457, 1.442695
    %v487 = vpow.pop %v486
    %v488 = vmul.f32 %v458, 1.442695
    %v489 = vpow.pop %v488
    %v490 = vmul.f32 %v459, 1.442695
    %v491 = vpow.pop %v490
    %v492 = vmul.f32 %v460, 1.442695
    %v493 = vpow.pop %v492
    %v494 = vmul.f32 %v461, 1.442695
    %v495 = vpow.pop %v494
    %v496 = vmul.f32 %v462, 1.442695
    %v497 = vpow.pop %v496
    %v498 = vmul.f32 %v463, 1.442695
    %v499 = vpow.pop %v498
    %v500 = vmul.f32 %v464, 1.442695
    %v501 = vpow.pop %v500
    %v502 = vmul.f32 %v465, 1.442695
    %v503 = vpow.pop %v502
    %v504 = vmul.f32 %v466, 1.442695
    %v505 = vpow.pop %v504
    %v506 = vmul.f32 %v467, 1.442695
    %v507 = vpow.pop %v506
    %v508 = vmul.f32 %v468, 1.442695
    %v509 = vpow.pop %v508
    %v510 = vmul.f32 %v469, 1.442695
    %v511 = vpow.pop %v510
    %v512 = vmul.f32 %v470, 1.442695
    %v513 = vpow.pop %v512
    %v514 = vmul.f32 %v471, 1.442695
    %v515 = vpow.pop %v514
    %v516 = vmul.f32 %v472, 1.442695
    %v517 = vpow.pop %v516
    %v518 = vmul.f32 %v473, 1.442695
    %v519 = vpow.pop %v518
    %v520 = vmul.f32 %v474, 1.442695
    %v521 = vpow.pop %v520
    %v522 = vmul.f32 %v475, 1.442695
    %v523 = vpow.pop %v522
    %v524 = vadd.f32 %v477, 1.0
    %v525 = vadd.f32 %v479, 1.0
    %v526 = vadd.f32 %v481, 1.0
    %v527 = vadd.f32 %v483, 1.0
    %v528 = vadd.f32 %v485, 1.0
    %v529 = vadd.f32 %v487, 1.0
    %v530 = vadd.f32 %v489, 1.0
    %v531 = vadd.f32 %v491, 1.0
    %v532 = vadd.f32 %v493, 1.0
    %v533 = vadd.f32 %v495, 1.0
    %v534 = vadd.f32 %v497, 1.0
    %v535 = vadd.f32 %v499, 1.0
    %v536 = vadd.f32 %v501, 1.0
    %v537 = vadd.f32 %v503, 1.0
    %v538 = vadd.f32 %v505, 1.0
    %v539 = vadd.f32 %v507, 1.0
    %v540 = vadd.f32 %v509, 1.0
    %v541 = vadd.f32 %v511, 1.0
    %v542 = vadd.f32 %v513, 1.0
    %v543 = vadd.f32 %v515, 1.0
    %v544 = vadd.f32 %v517, 1.0
    %v545 = vadd.f32 %v519, 1.0
    %v546 = vadd.f32 %v521, 1.0
    %v547 = vadd.f32 %v523, 1.0
    %v548 = vrcp.pop %v524
    %v549 = vmul.f32 1.0, %v548
    %v550 = vrcp.pop %v525
    %v551 = vmul.f32 1.0, %v550
    %v552 = vrcp.pop %v526
    %v553 = vmul.f32 1.0, %v552
    %v554 = vrcp.pop %v527
    %v555 = vmul.f32 1.0, %v554
    %v556 = vrcp.pop %v528
    %v557 = vmul.f32 1.0, %v556
    %v558 = vrcp.pop %v529
    %v559 = vmul.f32 1.0, %v558
    %v560 = vrcp.pop %v530
    %v561 = vmul.f32 1.0, %v560
    %v562 = vrcp.pop %v531
    %v563 = vmul.f32 1.0, %v562
    %v564 = vrcp.pop %v532
    %v565 = vmul.f32 1.0, %v564
    %v566 = vrcp.pop %v533
    %v567 = vmul.f32 1.0, %v566
    %v568 = vrcp.pop %v534
    %v569 = vmul.f32 1.0, %v568
    %v570 = vrcp.pop %v535
    %v571 = vmul.f32 1.0, %v570
    %v572 = vrcp.pop %v536
    %v573 = vmul.f32 1.0, %v572
    %v574 = vrcp.pop %v537
    %v575 = vmul.f32 1.0, %v574
    %v576 = vrcp.pop %v538
    %v577 = vmul.f32 1.0, %v576
    %v578 = vrcp.pop %v539
    %v579 = vmul.f32 1.0, %v578
    %v580 = vrcp.pop %v540
    %v581 = vmul.f32 1.0, %v580
    %v582 = vrcp.pop %v541
    %v583 = vmul.f32 1.0, %v582
    %v584 = vrcp.pop %v542
    %v585 = vmul.f32 1.0, %v584
    %v586 = vrcp.pop %v543
    %v587 = vmul.f32 1.0, %v586
    %v588 = vrcp.pop %v544
    %v589 = vmul.f32 1.0, %v588
    %v590 = vrcp.pop %v545
    %v591 = vmul.f32 1.0, %v590
    %v592 = vrcp.pop %v546
    %v593 = vmul.f32 1.0, %v592
    %v594 = vrcp.pop %v547
    %v595 = vmul.f32 1.0, %v594
    %v596 = vtanh.pop %v423
    %v597 = vtanh.pop %v427
    %v598 = vtanh.pop %v431
    %v599 = vtanh.pop %v435
    %v600 = vtanh.pop %v439
    %v601 = vtanh.pop %v443
    %v602 = vtanh.pop %v447
    %v603 = vtanh.pop %v451
    %v605 = vrot.slane %v64, 1
    %v606 = vrot.slane %v64, 2
    %v607 = vrot.slane %v64, 3
    %v608 = vrot.slane %v64, 4
    %v609 = vrot.slane %v64, 5
    %v610 = vrot.slane %v64, 6
    %v611 = vrot.slane %v64, 7
    %v620 = vmul.f32 %v551, %v64
    %v621 = vmul.f32 %v557, %v605
    %v622 = vmul.f32 %v563, %v606
    %v623 = vmul.f32 %v569, %v607
    %v624 = vmul.f32 %v575, %v608
    %v625 = vmul.f32 %v581, %v609
    %v626 = vmul.f32 %v587, %v610
    %v627 = vmul.f32 %v593, %v611
    %v628 = vmul.f32 %v549, %v596
    %v629 = vmul.f32 %v555, %v597
    %v630 = vmul.f32 %v561, %v598
    %v631 = vmul.f32 %v567, %v599
    %v632 = vmul.f32 %v573, %v600
    %v633 = vmul.f32 %v579, %v601
    %v634 = vmul.f32 %v585, %v602
    %v635 = vmul.f32 %v591, %v603
    %v636 = vadd.f32 %v620, %v628
    %v637 = vadd.f32 %v621, %v629
    %v638 = vadd.f32 %v622, %v630
    %v639 = vadd.f32 %v623, %v631
    %v640 = vadd.f32 %v624, %v632
    %v641 = vadd.f32 %v625, %v633
    %v642 = vadd.f32 %v626, %v634
    %v643 = vadd.f32 %v627, %v635
    %v644 = vtanh.pop %v636
    %v645 = vtanh.pop %v637
    %v646 = vtanh.pop %v638
    %v647 = vtanh.pop %v639
    %v648 = vtanh.pop %v640
    %v649 = vtanh.pop %v641
    %v650 = vtanh.pop %v642
    %v651 = vtanh.pop %v643
    %v652 = vmul.f32 %v553, %v644
    %v653 = vmul.f32 %v559, %v645
    %v654 = vmul.f32 %v565, %v646
    %v655 = vmul.f32 %v571, %v647
    %v656 = vmul.f32 %v577, %v648
    %v657 = vmul.f32 %v583, %v649
    %v658 = vmul.f32 %v589, %v650
    %v659 = vmul.f32 %v595, %v651
    %v660 = vpack.c.bf16 %v652, %v652
    %v661 = vpack.c.bf16 %v653, %v653
    %v662 = vpack.c.bf16 %v654, %v654
    %v663 = vpack.c.bf16 %v655, %v655
    %v664 = vpack.c.bf16 %v656, %v656
    %v665 = vpack.c.bf16 %v657, %v657
    %v666 = vpack.c.bf16 %v658, %v658
    %v667 = vpack.c.bf16 %v659, %v659
    %vm668 = vcmask 1040384
    %vm669 = vsmask.f32 256
    %vm670 = vmand %vm668, %vm669
    %v671 = vld [vmem:[%s4] sm:$0x1]
    %v672 = vsel %vm670, %v660, %v671
    %673 = vst [vmem:[%s4] sm:$0x1] %v672
    %v674 = vld [vmem:[%s4 + $0x4] sm:$0x1]
    %v675 = vsel %vm670, %v661, %v674
    %676 = vst [vmem:[%s4 + $0x4] sm:$0x1] %v675
    %v677 = vld [vmem:[%s4 + $0x8] sm:$0x1]
    %v678 = vsel %vm670, %v662, %v677
    %679 = vst [vmem:[%s4 + $0x8] sm:$0x1] %v678
    %v680 = vld [vmem:[%s4 + $0xc] sm:$0x1]
    %v681 = vsel %vm670, %v663, %v680
    %682 = vst [vmem:[%s4 + $0xc] sm:$0x1] %v681
    %v683 = vld [vmem:[%s4 + $0x10] sm:$0x1]
    %v684 = vsel %vm670, %v664, %v683
    %685 = vst [vmem:[%s4 + $0x10] sm:$0x1] %v684
    %v686 = vld [vmem:[%s4 + $0x14] sm:$0x1]
    %v687 = vsel %vm670, %v665, %v686
    %688 = vst [vmem:[%s4 + $0x14] sm:$0x1] %v687
    %v689 = vld [vmem:[%s4 + $0x18] sm:$0x1]
    %v690 = vsel %vm670, %v666, %v689
    %691 = vst [vmem:[%s4 + $0x18] sm:$0x1] %v690
    %v692 = vld [vmem:[%s4 + $0x1c] sm:$0x1]
    %v693 = vsel %vm670, %v667, %v692
    %694 = vst [vmem:[%s4 + $0x1c] sm:$0x1] %v693
    %v695 = vld [vmem:[%s0] sm:$0x11]
    %v696 = vld [vmem:[%s0 + $0x8] sm:$0x11]
    %v697 = vld [vmem:[%s0 + $0x10] sm:$0x11]
    %v698 = vld [vmem:[%s0 + $0x18] sm:$0x11]
    %v699 = vld [vmem:[%s0 + $0x20] sm:$0x11]
    %v700 = vld [vmem:[%s0 + $0x28] sm:$0x11]
    %v701 = vld [vmem:[%s0 + $0x30] sm:$0x11]
    %v702 = vld [vmem:[%s0 + $0x38] sm:$0x11]
    %v703 = vld [vmem:[%s0 + $0x40] sm:$0x11]
    %v704 = vld [vmem:[%s0 + $0x48] sm:$0x11]
    %v705 = vld [vmem:[%s0 + $0x50] sm:$0x11]
    %v706 = vld [vmem:[%s0 + $0x58] sm:$0x11]
    %v707 = vld [vmem:[%s0 + $0x60] sm:$0x11]
    %v708 = vld [vmem:[%s0 + $0x68] sm:$0x11]
    %v709 = vld [vmem:[%s0 + $0x70] sm:$0x11]
    %v710 = vld [vmem:[%s0 + $0x78] sm:$0x11]
    %v711 = vunpack.c.l.bf16 %v695
    %v712 = vunpack.c.h.bf16 %v695
    %v713 = vunpack.c.l.bf16 %v696
    %v714 = vunpack.c.h.bf16 %v696
    %v715 = vunpack.c.l.bf16 %v697
    %v716 = vunpack.c.h.bf16 %v697
    %v717 = vunpack.c.l.bf16 %v698
    %v718 = vunpack.c.h.bf16 %v698
    %v719 = vunpack.c.l.bf16 %v699
    %v720 = vunpack.c.h.bf16 %v699
    %v721 = vunpack.c.l.bf16 %v700
    %v722 = vunpack.c.h.bf16 %v700
    %v723 = vunpack.c.l.bf16 %v701
    %v724 = vunpack.c.h.bf16 %v701
    %v725 = vunpack.c.l.bf16 %v702
    %v726 = vunpack.c.h.bf16 %v702
    %v727 = vunpack.c.l.bf16 %v703
    %v728 = vunpack.c.h.bf16 %v703
    %v729 = vunpack.c.l.bf16 %v704
    %v730 = vunpack.c.h.bf16 %v704
    %v731 = vunpack.c.l.bf16 %v705
    %v732 = vunpack.c.h.bf16 %v705
    %v733 = vunpack.c.l.bf16 %v706
    %v734 = vunpack.c.h.bf16 %v706
    %v735 = vunpack.c.l.bf16 %v707
    %v736 = vunpack.c.h.bf16 %v707
    %v737 = vunpack.c.l.bf16 %v708
    %v738 = vunpack.c.h.bf16 %v708
    %v739 = vunpack.c.l.bf16 %v709
    %v740 = vunpack.c.h.bf16 %v709
    %v741 = vunpack.c.l.bf16 %v710
    %v742 = vunpack.c.h.bf16 %v710
    %v751 = vunpack.c.l.b16 %v660
    %v752 = vunpack.c.l.b16 %v661
    %v753 = vunpack.c.l.b16 %v662
    %v754 = vunpack.c.l.b16 %v663
    %v755 = vunpack.c.l.b16 %v664
    %v756 = vunpack.c.l.b16 %v665
    %v757 = vunpack.c.l.b16 %v666
    %v758 = vunpack.c.l.b16 %v667
    %v759 = vrot.slane %v752, 7
    %vm760 = vcmask 1041409
    %v761 = vsel %vm760, %v759, %v751
    %v762 = vrot.slane %v753, 6
    %vm763 = vcmask 1042434
    %v764 = vsel %vm763, %v762, %v761
    %v765 = vrot.slane %v754, 5
    %vm766 = vcmask 1043459
    %v767 = vsel %vm766, %v765, %v764
    %v768 = vrot.slane %v755, 4
    %vm769 = vcmask 1044484
    %v770 = vsel %vm769, %v768, %v767
    %v771 = vrot.slane %v756, 3
    %vm772 = vcmask 1045509
    %v773 = vsel %vm772, %v771, %v770
    %v774 = vrot.slane %v757, 2
    %vm775 = vcmask 1046534
    %v776 = vsel %vm775, %v774, %v773
    %v777 = vrot.slane %v758, 1
    %vm778 = vcmask 1047559
    %v779 = vsel %vm778, %v777, %v776
    %v780 = vpack.c.b16 %v779, %v779
    %782 = vmatprep.subr.bf16.mxu0 %v211
    %783 = vmatpush1.bf16.msra.mxu0 %v210
    %784 = vmatprep.subr.bf16.mxu0 %v215
    %785 = vmatpush1.bf16.msra.mxu0 %v214
    %786 = vmatprep.subr.bf16.mxu0 %v219
    %787 = vmatpush1.bf16.msra.mxu0 %v218
    %788 = vmatprep.subr.bf16.mxu0 %v223
    %789 = vmatpush1.bf16.msra.mxu0 %v222
    %790 = vmatprep.subr.bf16.mxu0 %v227
    %791 = vmatpush1.bf16.msra.mxu0 %v226
    %792 = vmatprep.subr.bf16.mxu0 %v231
    %793 = vmatpush1.bf16.msra.mxu0 %v230
    %794 = vmatprep.subr.bf16.mxu0 %v235
    %795 = vmatpush1.bf16.msra.mxu0 %v234
    %796 = vmatprep.subr.bf16.mxu0 %v239
    %797 = vmatpush1.bf16.msra.mxu0 %v238
    %798 = vmatprep.subr.bf16.mxu0 0
    %799 = vmatpush1.bf16.msra.mxu0 0
    %800 = vmatprep.subr.bf16.mxu0 0
    %801 = vmatpush1.bf16.msra.mxu0 0
    %802 = vmatprep.subr.bf16.mxu0 0
    %803 = vmatpush1.bf16.msra.mxu0 0
    %804 = vmatprep.subr.bf16.mxu0 0
    %805 = vmatpush1.bf16.msra.mxu0 0
    %806 = vmatprep.subr.bf16.mxu0 0
    %807 = vmatpush1.bf16.msra.mxu0 0
    %808 = vmatprep.subr.bf16.mxu0 0
    %809 = vmatpush1.bf16.msra.mxu0 0
    %810 = vmatprep.subr.bf16.mxu0 0
    %811 = vmatpush1.bf16.msra.mxu0 0
    %812 = vmatprep.subr.bf16.mxu0 0
    %813 = vmatpush1.bf16.msra.mxu0 0
    %814 = vmatprep.mubr.bf16.mxu0 0
    %815 = vmatmul.mubr.bf16.gmra.mrb[0].mxu0 %v780
    %v816 = vpop.f32.mrb[0].mxu0
    %v817 = vadd.f32 0.0, %v816
    %v818 = vpop.f32.mrb[0].mxu0
    %v819 = vadd.f32 0.0, %v818
    %v820 = vpop.f32.mrb[0].mxu0
    %v821 = vpop.f32.mrb[0].mxu0
    %822 = vdwg.mxu0
    %823 = vmatprep.subr.bf16.mxu0 %v213
    %824 = vmatpush1.bf16.msra.mxu0 %v212
    %825 = vmatprep.subr.bf16.mxu0 %v217
    %826 = vmatpush1.bf16.msra.mxu0 %v216
    %827 = vmatprep.subr.bf16.mxu0 %v221
    %828 = vmatpush1.bf16.msra.mxu0 %v220
    %829 = vmatprep.subr.bf16.mxu0 %v225
    %830 = vmatpush1.bf16.msra.mxu0 %v224
    %831 = vmatprep.subr.bf16.mxu0 %v229
    %832 = vmatpush1.bf16.msra.mxu0 %v228
    %833 = vmatprep.subr.bf16.mxu0 %v233
    %834 = vmatpush1.bf16.msra.mxu0 %v232
    %835 = vmatprep.subr.bf16.mxu0 %v237
    %836 = vmatpush1.bf16.msra.mxu0 %v236
    %837 = vmatprep.subr.bf16.mxu0 %v241
    %838 = vmatpush1.bf16.msra.mxu0 %v240
    %839 = vmatprep.subr.bf16.mxu0 0
    %840 = vmatpush1.bf16.msra.mxu0 0
    %841 = vmatprep.subr.bf16.mxu0 0
    %842 = vmatpush1.bf16.msra.mxu0 0
    %843 = vmatprep.subr.bf16.mxu0 0
    %844 = vmatpush1.bf16.msra.mxu0 0
    %845 = vmatprep.subr.bf16.mxu0 0
    %846 = vmatpush1.bf16.msra.mxu0 0
    %847 = vmatprep.subr.bf16.mxu0 0
    %848 = vmatpush1.bf16.msra.mxu0 0
    %849 = vmatprep.subr.bf16.mxu0 0
    %850 = vmatpush1.bf16.msra.mxu0 0
    %851 = vmatprep.subr.bf16.mxu0 0
    %852 = vmatpush1.bf16.msra.mxu0 0
    %853 = vmatprep.subr.bf16.mxu0 0
    %854 = vmatpush1.bf16.msra.mxu0 0
    %855 = vmatprep.mubr.bf16.mxu0 0
    %856 = vmatmul.mubr.bf16.gmra.mrb[0].mxu0 %v780
    %v857 = vpop.f32.mrb[0].mxu0
    %v858 = vadd.f32 0.0, %v857
    %v859 = vpop.f32.mrb[0].mxu0
    %v860 = vadd.f32 0.0, %v859
    %v861 = vpop.f32.mrb[0].mxu0
    %v862 = vpop.f32.mrb[0].mxu0
    %863 = vdwg.mxu0
    %v868 = vrot.slane %v817, 7
    %v869 = vrot.slane %v819, 7
    %v870 = vrot.slane %v858, 7
    %v871 = vrot.slane %v860, 7
    %v872 = vrot.slane %v817, 1
    %v873 = vrot.slane %v819, 1
    %v874 = vrot.slane %v858, 1
    %v875 = vrot.slane %v860, 1
    %v876 = vrot.slane %v817, 2
    %v877 = vrot.slane %v819, 2
    %v878 = vrot.slane %v858, 2
    %v879 = vrot.slane %v860, 2
    %v880 = vrot.slane %v817, 3
    %v881 = vrot.slane %v819, 3
    %v882 = vrot.slane %v858, 3
    %v883 = vrot.slane %v860, 3
    %v884 = vrot.slane %v817, 4
    %v885 = vrot.slane %v819, 4
    %v886 = vrot.slane %v858, 4
    %v887 = vrot.slane %v860, 4
    %v888 = vrot.slane %v817, 5
    %v889 = vrot.slane %v819, 5
    %v890 = vrot.slane %v858, 5
    %v891 = vrot.slane %v860, 5
    %v892 = vrot.slane %v817, 6
    %v893 = vrot.slane %v819, 6
    %v894 = vrot.slane %v858, 6
    %v895 = vrot.slane %v860, 6
    %v928 = vadd.f32 %v711, %v868
    %v929 = vadd.f32 %v712, %v869
    %v930 = vadd.f32 %v713, %v870
    %v931 = vadd.f32 %v714, %v871
    %v932 = vadd.f32 %v715, %v817
    %v933 = vadd.f32 %v716, %v819
    %v934 = vadd.f32 %v717, %v858
    %v935 = vadd.f32 %v718, %v860
    %v936 = vadd.f32 %v719, %v872
    %v937 = vadd.f32 %v720, %v873
    %v938 = vadd.f32 %v721, %v874
    %v939 = vadd.f32 %v722, %v875
    %v940 = vadd.f32 %v723, %v876
    %v941 = vadd.f32 %v724, %v877
    %v942 = vadd.f32 %v725, %v878
    %v943 = vadd.f32 %v726, %v879
    %v944 = vadd.f32 %v727, %v880
    %v945 = vadd.f32 %v728, %v881
    %v946 = vadd.f32 %v729, %v882
    %v947 = vadd.f32 %v730, %v883
    %v948 = vadd.f32 %v731, %v884
    %v949 = vadd.f32 %v732, %v885
    %v950 = vadd.f32 %v733, %v886
    %v951 = vadd.f32 %v734, %v887
    %v952 = vadd.f32 %v735, %v888
    %v953 = vadd.f32 %v736, %v889
    %v954 = vadd.f32 %v737, %v890
    %v955 = vadd.f32 %v738, %v891
    %v956 = vadd.f32 %v739, %v892
    %v957 = vadd.f32 %v740, %v893
    %v958 = vadd.f32 %v741, %v894
    %v959 = vadd.f32 %v742, %v895
    %v960 = vxor.u32 %v928, 2147483648
    %v961 = vxor.u32 %v929, 2147483648
    %v962 = vxor.u32 %v930, 2147483648
    %v963 = vxor.u32 %v932, 2147483648
    %v964 = vxor.u32 %v933, 2147483648
    %v965 = vxor.u32 %v934, 2147483648
    %v966 = vxor.u32 %v936, 2147483648
    %v967 = vxor.u32 %v937, 2147483648
    %v968 = vxor.u32 %v938, 2147483648
    %v969 = vxor.u32 %v940, 2147483648
    %v970 = vxor.u32 %v941, 2147483648
    %v971 = vxor.u32 %v942, 2147483648
    %v972 = vxor.u32 %v944, 2147483648
    %v973 = vxor.u32 %v945, 2147483648
    %v974 = vxor.u32 %v946, 2147483648
    %v975 = vxor.u32 %v948, 2147483648
    %v976 = vxor.u32 %v949, 2147483648
    %v977 = vxor.u32 %v950, 2147483648
    %v978 = vxor.u32 %v952, 2147483648
    %v979 = vxor.u32 %v953, 2147483648
    %v980 = vxor.u32 %v954, 2147483648
    %v981 = vxor.u32 %v956, 2147483648
    %v982 = vxor.u32 %v957, 2147483648
    %v983 = vxor.u32 %v958, 2147483648
    %v984 = vmul.f32 %v960, 1.442695
    %v985 = vpow.pop %v984
    %v986 = vmul.f32 %v961, 1.442695
    %v987 = vpow.pop %v986
    %v988 = vmul.f32 %v962, 1.442695
    %v989 = vpow.pop %v988
    %v990 = vmul.f32 %v963, 1.442695
    %v991 = vpow.pop %v990
    %v992 = vmul.f32 %v964, 1.442695
    %v993 = vpow.pop %v992
    %v994 = vmul.f32 %v965, 1.442695
    %v995 = vpow.pop %v994
    %v996 = vmul.f32 %v966, 1.442695
    %v997 = vpow.pop %v996
    %v998 = vmul.f32 %v967, 1.442695
    %v999 = vpow.pop %v998
    %v1000 = vmul.f32 %v968, 1.442695
    %v1001 = vpow.pop %v1000
    %v1002 = vmul.f32 %v969, 1.442695
    %v1003 = vpow.pop %v1002
    %v1004 = vmul.f32 %v970, 1.442695
    %v1005 = vpow.pop %v1004
    %v1006 = vmul.f32 %v971, 1.442695
    %v1007 = vpow.pop %v1006
    %v1008 = vmul.f32 %v972, 1.442695
    %v1009 = vpow.pop %v1008
    %v1010 = vmul.f32 %v973, 1.442695
    %v1011 = vpow.pop %v1010
    %v1012 = vmul.f32 %v974, 1.442695
    %v1013 = vpow.pop %v1012
    %v1014 = vmul.f32 %v975, 1.442695
    %v1015 = vpow.pop %v1014
    %v1016 = vmul.f32 %v976, 1.442695
    %v1017 = vpow.pop %v1016
    %v1018 = vmul.f32 %v977, 1.442695
    %v1019 = vpow.pop %v1018
    %v1020 = vmul.f32 %v978, 1.442695
    %v1021 = vpow.pop %v1020
    %v1022 = vmul.f32 %v979, 1.442695
    %v1023 = vpow.pop %v1022
    %v1024 = vmul.f32 %v980, 1.442695
    %v1025 = vpow.pop %v1024
    %v1026 = vmul.f32 %v981, 1.442695
    %v1027 = vpow.pop %v1026
    %v1028 = vmul.f32 %v982, 1.442695
    %v1029 = vpow.pop %v1028
    %v1030 = vmul.f32 %v983, 1.442695
    %v1031 = vpow.pop %v1030
    %v1032 = vadd.f32 %v985, 1.0
    %v1033 = vadd.f32 %v987, 1.0
    %v1034 = vadd.f32 %v989, 1.0
    %v1035 = vadd.f32 %v991, 1.0
    %v1036 = vadd.f32 %v993, 1.0
    %v1037 = vadd.f32 %v995, 1.0
    %v1038 = vadd.f32 %v997, 1.0
    %v1039 = vadd.f32 %v999, 1.0
    %v1040 = vadd.f32 %v1001, 1.0
    %v1041 = vadd.f32 %v1003, 1.0
    %v1042 = vadd.f32 %v1005, 1.0
    %v1043 = vadd.f32 %v1007, 1.0
    %v1044 = vadd.f32 %v1009, 1.0
    %v1045 = vadd.f32 %v1011, 1.0
    %v1046 = vadd.f32 %v1013, 1.0
    %v1047 = vadd.f32 %v1015, 1.0
    %v1048 = vadd.f32 %v1017, 1.0
    %v1049 = vadd.f32 %v1019, 1.0
    %v1050 = vadd.f32 %v1021, 1.0
    %v1051 = vadd.f32 %v1023, 1.0
    %v1052 = vadd.f32 %v1025, 1.0
    %v1053 = vadd.f32 %v1027, 1.0
    %v1054 = vadd.f32 %v1029, 1.0
    %v1055 = vadd.f32 %v1031, 1.0
    %v1056 = vrcp.pop %v1032
    %v1057 = vmul.f32 1.0, %v1056
    %v1058 = vrcp.pop %v1033
    %v1059 = vmul.f32 1.0, %v1058
    %v1060 = vrcp.pop %v1034
    %v1061 = vmul.f32 1.0, %v1060
    %v1062 = vrcp.pop %v1035
    %v1063 = vmul.f32 1.0, %v1062
    %v1064 = vrcp.pop %v1036
    %v1065 = vmul.f32 1.0, %v1064
    %v1066 = vrcp.pop %v1037
    %v1067 = vmul.f32 1.0, %v1066
    %v1068 = vrcp.pop %v1038
    %v1069 = vmul.f32 1.0, %v1068
    %v1070 = vrcp.pop %v1039
    %v1071 = vmul.f32 1.0, %v1070
    %v1072 = vrcp.pop %v1040
    %v1073 = vmul.f32 1.0, %v1072
    %v1074 = vrcp.pop %v1041
    %v1075 = vmul.f32 1.0, %v1074
    %v1076 = vrcp.pop %v1042
    %v1077 = vmul.f32 1.0, %v1076
    %v1078 = vrcp.pop %v1043
    %v1079 = vmul.f32 1.0, %v1078
    %v1080 = vrcp.pop %v1044
    %v1081 = vmul.f32 1.0, %v1080
    %v1082 = vrcp.pop %v1045
    %v1083 = vmul.f32 1.0, %v1082
    %v1084 = vrcp.pop %v1046
    %v1085 = vmul.f32 1.0, %v1084
    %v1086 = vrcp.pop %v1047
    %v1087 = vmul.f32 1.0, %v1086
    %v1088 = vrcp.pop %v1048
    %v1089 = vmul.f32 1.0, %v1088
    %v1090 = vrcp.pop %v1049
    %v1091 = vmul.f32 1.0, %v1090
    %v1092 = vrcp.pop %v1050
    %v1093 = vmul.f32 1.0, %v1092
    %v1094 = vrcp.pop %v1051
    %v1095 = vmul.f32 1.0, %v1094
    %v1096 = vrcp.pop %v1052
    %v1097 = vmul.f32 1.0, %v1096
    %v1098 = vrcp.pop %v1053
    %v1099 = vmul.f32 1.0, %v1098
    %v1100 = vrcp.pop %v1054
    %v1101 = vmul.f32 1.0, %v1100
    %v1102 = vrcp.pop %v1055
    %v1103 = vmul.f32 1.0, %v1102
    %v1104 = vtanh.pop %v931
    %v1105 = vtanh.pop %v935
    %v1106 = vtanh.pop %v939
    %v1107 = vtanh.pop %v943
    %v1108 = vtanh.pop %v947
    %v1109 = vtanh.pop %v951
    %v1110 = vtanh.pop %v955
    %v1111 = vtanh.pop %v959
    %v1120 = vrot.slane %v636, 7
    %v1121 = vrot.slane %v637, 7
    %v1122 = vrot.slane %v638, 7
    %v1123 = vrot.slane %v639, 7
    %v1124 = vrot.slane %v640, 7
    %v1125 = vrot.slane %v641, 7
    %v1126 = vrot.slane %v642, 7
    %v1127 = vrot.slane %v643, 7
    %v1136 = vmul.f32 %v1059, %v1120
    %v1137 = vmul.f32 %v1065, %v1121
    %v1138 = vmul.f32 %v1071, %v1122
    %v1139 = vmul.f32 %v1077, %v1123
    %v1140 = vmul.f32 %v1083, %v1124
    %v1141 = vmul.f32 %v1089, %v1125
    %v1142 = vmul.f32 %v1095, %v1126
    %v1143 = vmul.f32 %v1101, %v1127
    %v1144 = vmul.f32 %v1057, %v1104
    %v1145 = vmul.f32 %v1063, %v1105
    %v1146 = vmul.f32 %v1069, %v1106
    %v1147 = vmul.f32 %v1075, %v1107
    %v1148 = vmul.f32 %v1081, %v1108
    %v1149 = vmul.f32 %v1087, %v1109
    %v1150 = vmul.f32 %v1093, %v1110
    %v1151 = vmul.f32 %v1099, %v1111
    %v1152 = vadd.f32 %v1136, %v1144
    %v1153 = vadd.f32 %v1137, %v1145
    %v1154 = vadd.f32 %v1138, %v1146
    %v1155 = vadd.f32 %v1139, %v1147
    %v1156 = vadd.f32 %v1140, %v1148
    %v1157 = vadd.f32 %v1141, %v1149
    %v1158 = vadd.f32 %v1142, %v1150
    %v1159 = vadd.f32 %v1143, %v1151
    %v1160 = vtanh.pop %v1152
    %v1161 = vtanh.pop %v1153
    %v1162 = vtanh.pop %v1154
    %v1163 = vtanh.pop %v1155
    %v1164 = vtanh.pop %v1156
    %v1165 = vtanh.pop %v1157
    %v1166 = vtanh.pop %v1158
    %v1167 = vtanh.pop %v1159
    %v1168 = vmul.f32 %v1061, %v1160
    %v1169 = vmul.f32 %v1067, %v1161
    %v1170 = vmul.f32 %v1073, %v1162
    %v1171 = vmul.f32 %v1079, %v1163
    %v1172 = vmul.f32 %v1085, %v1164
    %v1173 = vmul.f32 %v1091, %v1165
    %v1174 = vmul.f32 %v1097, %v1166
    %v1175 = vmul.f32 %v1103, %v1167
    %v1176 = vpack.c.bf16 %v1168, %v1168
    %v1177 = vpack.c.bf16 %v1169, %v1169
    %v1178 = vpack.c.bf16 %v1170, %v1170
    %v1179 = vpack.c.bf16 %v1171, %v1171
    %v1180 = vpack.c.bf16 %v1172, %v1172
    %v1181 = vpack.c.bf16 %v1173, %v1173
    %v1182 = vpack.c.bf16 %v1174, %v1174
    %v1183 = vpack.c.bf16 %v1175, %v1175
    %vm1184 = vsmask.f32 7938
    %vm1185 = vmand %vm668, %vm1184
    %v1186 = vld [vmem:[%s4] sm:$0x1]
    %v1187 = vsel %vm1185, %v1176, %v1186
    %1188 = vst [vmem:[%s4] sm:$0x1] %v1187
    %v1189 = vld [vmem:[%s4 + $0x4] sm:$0x1]
    %v1190 = vsel %vm1185, %v1177, %v1189
    %1191 = vst [vmem:[%s4 + $0x4] sm:$0x1] %v1190
    %v1192 = vld [vmem:[%s4 + $0x8] sm:$0x1]
    %v1193 = vsel %vm1185, %v1178, %v1192
    %1194 = vst [vmem:[%s4 + $0x8] sm:$0x1] %v1193
    %v1195 = vld [vmem:[%s4 + $0xc] sm:$0x1]
    %v1196 = vsel %vm1185, %v1179, %v1195
    %1197 = vst [vmem:[%s4 + $0xc] sm:$0x1] %v1196
    %v1198 = vld [vmem:[%s4 + $0x10] sm:$0x1]
    %v1199 = vsel %vm1185, %v1180, %v1198
    %1200 = vst [vmem:[%s4 + $0x10] sm:$0x1] %v1199
    %v1201 = vld [vmem:[%s4 + $0x14] sm:$0x1]
    %v1202 = vsel %vm1185, %v1181, %v1201
    %1203 = vst [vmem:[%s4 + $0x14] sm:$0x1] %v1202
    %v1204 = vld [vmem:[%s4 + $0x18] sm:$0x1]
    %v1205 = vsel %vm1185, %v1182, %v1204
    %1206 = vst [vmem:[%s4 + $0x18] sm:$0x1] %v1205
    %v1207 = vld [vmem:[%s4 + $0x1c] sm:$0x1]
    %v1208 = vsel %vm1185, %v1183, %v1207
    %1209 = vst [vmem:[%s4 + $0x1c] sm:$0x1] %v1208
    %v1210 = vld [vmem:[%s0] sm:$0x22]
    %v1211 = vld [vmem:[%s0 + $0x8] sm:$0x22]
    %v1212 = vld [vmem:[%s0 + $0x10] sm:$0x22]
    %v1213 = vld [vmem:[%s0 + $0x18] sm:$0x22]
    %v1214 = vld [vmem:[%s0 + $0x20] sm:$0x22]
    %v1215 = vld [vmem:[%s0 + $0x28] sm:$0x22]
    %v1216 = vld [vmem:[%s0 + $0x30] sm:$0x22]
    %v1217 = vld [vmem:[%s0 + $0x38] sm:$0x22]
    %v1218 = vld [vmem:[%s0 + $0x40] sm:$0x22]
    %v1219 = vld [vmem:[%s0 + $0x48] sm:$0x22]
    %v1220 = vld [vmem:[%s0 + $0x50] sm:$0x22]
    %v1221 = vld [vmem:[%s0 + $0x58] sm:$0x22]
    %v1222 = vld [vmem:[%s0 + $0x60] sm:$0x22]
    %v1223 = vld [vmem:[%s0 + $0x68] sm:$0x22]
    %v1224 = vld [vmem:[%s0 + $0x70] sm:$0x22]
    %v1225 = vld [vmem:[%s0 + $0x78] sm:$0x22]
    %v1226 = vunpack.c.l.bf16 %v1210
    %v1227 = vunpack.c.h.bf16 %v1210
    %v1228 = vunpack.c.l.bf16 %v1211
    %v1229 = vunpack.c.h.bf16 %v1211
    %v1230 = vunpack.c.l.bf16 %v1212
    %v1231 = vunpack.c.h.bf16 %v1212
    %v1232 = vunpack.c.l.bf16 %v1213
    %v1233 = vunpack.c.h.bf16 %v1213
    %v1234 = vunpack.c.l.bf16 %v1214
    %v1235 = vunpack.c.h.bf16 %v1214
    %v1236 = vunpack.c.l.bf16 %v1215
    %v1237 = vunpack.c.h.bf16 %v1215
    %v1238 = vunpack.c.l.bf16 %v1216
    %v1239 = vunpack.c.h.bf16 %v1216
    %v1240 = vunpack.c.l.bf16 %v1217
    %v1241 = vunpack.c.h.bf16 %v1217
    %v1242 = vunpack.c.l.bf16 %v1218
    %v1243 = vunpack.c.h.bf16 %v1218
    %v1244 = vunpack.c.l.bf16 %v1219
    %v1245 = vunpack.c.h.bf16 %v1219
    %v1246 = vunpack.c.l.bf16 %v1220
    %v1247 = vunpack.c.h.bf16 %v1220
    %v1248 = vunpack.c.l.bf16 %v1221
    %v1249 = vunpack.c.h.bf16 %v1221
    %v1250 = vunpack.c.l.bf16 %v1222
    %v1251 = vunpack.c.h.bf16 %v1222
    %v1252 = vunpack.c.l.bf16 %v1223
    %v1253 = vunpack.c.h.bf16 %v1223
    %v1254 = vunpack.c.l.bf16 %v1224
    %v1255 = vunpack.c.h.bf16 %v1224
    %v1256 = vunpack.c.l.bf16 %v1225
    %v1257 = vunpack.c.h.bf16 %v1225
    %v1266 = vunpack.c.l.b16 %v1176
    %v1267 = vunpack.c.l.b16 %v1177
    %v1268 = vunpack.c.l.b16 %v1178
    %v1269 = vunpack.c.l.b16 %v1179
    %v1270 = vunpack.c.l.b16 %v1180
    %v1271 = vunpack.c.l.b16 %v1181
    %v1272 = vunpack.c.l.b16 %v1182
    %v1273 = vunpack.c.l.b16 %v1183
    %v1274 = vrot.slane %v1266, 1
    %v1275 = vsel %vm760, %v1267, %v1274
    %v1276 = vrot.slane %v1268, 7
    %v1277 = vsel %vm763, %v1276, %v1275
    %v1278 = vrot.slane %v1269, 6
    %v1279 = vsel %vm766, %v1278, %v1277
    %v1280 = vrot.slane %v1270, 5
    %v1281 = vsel %vm769, %v1280, %v1279
    %v1282 = vrot.slane %v1271, 4
    %v1283 = vsel %vm772, %v1282, %v1281
    %v1284 = vrot.slane %v1272, 3
    %v1285 = vsel %vm775, %v1284, %v1283
    %v1286 = vrot.slane %v1273, 2
    %v1287 = vsel %vm778, %v1286, %v1285
    %v1288 = vpack.c.b16 %v1287, %v1287
    %1290 = vmatprep.subr.bf16.mxu0 %v211
    %1291 = vmatpush1.bf16.msra.mxu0 %v210
    %1292 = vmatprep.subr.bf16.mxu0 %v215
    %1293 = vmatpush1.bf16.msra.mxu0 %v214
    %1294 = vmatprep.subr.bf16.mxu0 %v219
    %1295 = vmatpush1.bf16.msra.mxu0 %v218
    %1296 = vmatprep.subr.bf16.mxu0 %v223
    %1297 = vmatpush1.bf16.msra.mxu0 %v222
    %1298 = vmatprep.subr.bf16.mxu0 %v227
    %1299 = vmatpush1.bf16.msra.mxu0 %v226
    %1300 = vmatprep.subr.bf16.mxu0 %v231
    %1301 = vmatpush1.bf16.msra.mxu0 %v230
    %1302 = vmatprep.subr.bf16.mxu0 %v235
    %1303 = vmatpush1.bf16.msra.mxu0 %v234
    %1304 = vmatprep.subr.bf16.mxu0 %v239
    %1305 = vmatpush1.bf16.msra.mxu0 %v238
    %1306 = vmatprep.subr.bf16.mxu0 0
    %1307 = vmatpush1.bf16.msra.mxu0 0
    %1308 = vmatprep.subr.bf16.mxu0 0
    %1309 = vmatpush1.bf16.msra.mxu0 0
    %1310 = vmatprep.subr.bf16.mxu0 0
    %1311 = vmatpush1.bf16.msra.mxu0 0
    %1312 = vmatprep.subr.bf16.mxu0 0
    %1313 = vmatpush1.bf16.msra.mxu0 0
    %1314 = vmatprep.subr.bf16.mxu0 0
    %1315 = vmatpush1.bf16.msra.mxu0 0
    %1316 = vmatprep.subr.bf16.mxu0 0
    %1317 = vmatpush1.bf16.msra.mxu0 0
    %1318 = vmatprep.subr.bf16.mxu0 0
    %1319 = vmatpush1.bf16.msra.mxu0 0
    %1320 = vmatprep.subr.bf16.mxu0 0
    %1321 = vmatpush1.bf16.msra.mxu0 0
    %1322 = vmatprep.mubr.bf16.mxu0 0
    %1323 = vmatmul.mubr.bf16.gmra.mrb[0].mxu0 %v1288
    %v1324 = vpop.f32.mrb[0].mxu0
    %v1325 = vadd.f32 0.0, %v1324
    %v1326 = vpop.f32.mrb[0].mxu0
    %v1327 = vadd.f32 0.0, %v1326
    %v1328 = vpop.f32.mrb[0].mxu0
    %v1329 = vpop.f32.mrb[0].mxu0
    %1330 = vdwg.mxu0
    %1331 = vmatprep.subr.bf16.mxu0 %v213
    %1332 = vmatpush1.bf16.msra.mxu0 %v212
    %1333 = vmatprep.subr.bf16.mxu0 %v217
    %1334 = vmatpush1.bf16.msra.mxu0 %v216
    %1335 = vmatprep.subr.bf16.mxu0 %v221
    %1336 = vmatpush1.bf16.msra.mxu0 %v220
    %1337 = vmatprep.subr.bf16.mxu0 %v225
    %1338 = vmatpush1.bf16.msra.mxu0 %v224
    %1339 = vmatprep.subr.bf16.mxu0 %v229
    %1340 = vmatpush1.bf16.msra.mxu0 %v228
    %1341 = vmatprep.subr.bf16.mxu0 %v233
    %1342 = vmatpush1.bf16.msra.mxu0 %v232
    %1343 = vmatprep.subr.bf16.mxu0 %v237
    %1344 = vmatpush1.bf16.msra.mxu0 %v236
    %1345 = vmatprep.subr.bf16.mxu0 %v241
    %1346 = vmatpush1.bf16.msra.mxu0 %v240
    %1347 = vmatprep.subr.bf16.mxu0 0
    %1348 = vmatpush1.bf16.msra.mxu0 0
    %1349 = vmatprep.subr.bf16.mxu0 0
    %1350 = vmatpush1.bf16.msra.mxu0 0
    %1351 = vmatprep.subr.bf16.mxu0 0
    %1352 = vmatpush1.bf16.msra.mxu0 0
    %1353 = vmatprep.subr.bf16.mxu0 0
    %1354 = vmatpush1.bf16.msra.mxu0 0
    %1355 = vmatprep.subr.bf16.mxu0 0
    %1356 = vmatpush1.bf16.msra.mxu0 0
    %1357 = vmatprep.subr.bf16.mxu0 0
    %1358 = vmatpush1.bf16.msra.mxu0 0
    %1359 = vmatprep.subr.bf16.mxu0 0
    %1360 = vmatpush1.bf16.msra.mxu0 0
    %1361 = vmatprep.subr.bf16.mxu0 0
    %1362 = vmatpush1.bf16.msra.mxu0 0
    %1363 = vmatprep.mubr.bf16.mxu0 0
    %1364 = vmatmul.mubr.bf16.gmra.mrb[0].mxu0 %v1288
    %v1365 = vpop.f32.mrb[0].mxu0
    %v1366 = vadd.f32 0.0, %v1365
    %v1367 = vpop.f32.mrb[0].mxu0
    %v1368 = vadd.f32 0.0, %v1367
    %v1369 = vpop.f32.mrb[0].mxu0
    %v1370 = vpop.f32.mrb[0].mxu0
    %1371 = vdwg.mxu0
    %v1376 = vrot.slane %v1325, 6
    %v1377 = vrot.slane %v1327, 6
    %v1378 = vrot.slane %v1366, 6
    %v1379 = vrot.slane %v1368, 6
    %v1380 = vrot.slane %v1325, 7
    %v1381 = vrot.slane %v1327, 7
    %v1382 = vrot.slane %v1366, 7
    %v1383 = vrot.slane %v1368, 7
    %v1384 = vrot.slane %v1325, 1
    %v1385 = vrot.slane %v1327, 1
    %v1386 = vrot.slane %v1366, 1
    %v1387 = vrot.slane %v1368, 1
    %v1388 = vrot.slane %v1325, 2
    %v1389 = vrot.slane %v1327, 2
    %v1390 = vrot.slane %v1366, 2
    %v1391 = vrot.slane %v1368, 2
    %v1392 = vrot.slane %v1325, 3
    %v1393 = vrot.slane %v1327, 3
    %v1394 = vrot.slane %v1366, 3
    %v1395 = vrot.slane %v1368, 3
    %v1396 = vrot.slane %v1325, 4
    %v1397 = vrot.slane %v1327, 4
    %v1398 = vrot.slane %v1366, 4
    %v1399 = vrot.slane %v1368, 4
    %v1400 = vrot.slane %v1325, 5
    %v1401 = vrot.slane %v1327, 5
    %v1402 = vrot.slane %v1366, 5
    %v1403 = vrot.slane %v1368, 5
    %v1436 = vadd.f32 %v1226, %v1376
    %v1437 = vadd.f32 %v1227, %v1377
    %v1438 = vadd.f32 %v1228, %v1378
    %v1439 = vadd.f32 %v1229, %v1379
    %v1440 = vadd.f32 %v1230, %v1380
    %v1441 = vadd.f32 %v1231, %v1381
    %v1442 = vadd.f32 %v1232, %v1382
    %v1443 = vadd.f32 %v1233, %v1383
    %v1444 = vadd.f32 %v1234, %v1325
    %v1445 = vadd.f32 %v1235, %v1327
    %v1446 = vadd.f32 %v1236, %v1366
    %v1447 = vadd.f32 %v1237, %v1368
    %v1448 = vadd.f32 %v1238, %v1384
    %v1449 = vadd.f32 %v1239, %v1385
    %v1450 = vadd.f32 %v1240, %v1386
    %v1451 = vadd.f32 %v1241, %v1387
    %v1452 = vadd.f32 %v1242, %v1388
    %v1453 = vadd.f32 %v1243, %v1389
    %v1454 = vadd.f32 %v1244, %v1390
    %v1455 = vadd.f32 %v1245, %v1391
    %v1456 = vadd.f32 %v1246, %v1392
    %v1457 = vadd.f32 %v1247, %v1393
    %v1458 = vadd.f32 %v1248, %v1394
    %v1459 = vadd.f32 %v1249, %v1395
    %v1460 = vadd.f32 %v1250, %v1396
    %v1461 = vadd.f32 %v1251, %v1397
    %v1462 = vadd.f32 %v1252, %v1398
    %v1463 = vadd.f32 %v1253, %v1399
    %v1464 = vadd.f32 %v1254, %v1400
    %v1465 = vadd.f32 %v1255, %v1401
    %v1466 = vadd.f32 %v1256, %v1402
    %v1467 = vadd.f32 %v1257, %v1403
    %v1468 = vxor.u32 %v1436, 2147483648
    %v1469 = vxor.u32 %v1437, 2147483648
    %v1470 = vxor.u32 %v1438, 2147483648
    %v1471 = vxor.u32 %v1440, 2147483648
    %v1472 = vxor.u32 %v1441, 2147483648
    %v1473 = vxor.u32 %v1442, 2147483648
    %v1474 = vxor.u32 %v1444, 2147483648
    %v1475 = vxor.u32 %v1445, 2147483648
    %v1476 = vxor.u32 %v1446, 2147483648
    %v1477 = vxor.u32 %v1448, 2147483648
    %v1478 = vxor.u32 %v1449, 2147483648
    %v1479 = vxor.u32 %v1450, 2147483648
    %v1480 = vxor.u32 %v1452, 2147483648
    %v1481 = vxor.u32 %v1453, 2147483648
    %v1482 = vxor.u32 %v1454, 2147483648
    %v1483 = vxor.u32 %v1456, 2147483648
    %v1484 = vxor.u32 %v1457, 2147483648
    %v1485 = vxor.u32 %v1458, 2147483648
    %v1486 = vxor.u32 %v1460, 2147483648
    %v1487 = vxor.u32 %v1461, 2147483648
    %v1488 = vxor.u32 %v1462, 2147483648
    %v1489 = vxor.u32 %v1464, 2147483648
    %v1490 = vxor.u32 %v1465, 2147483648
    %v1491 = vxor.u32 %v1466, 2147483648
    %v1492 = vmul.f32 %v1468, 1.442695
    %v1493 = vpow.pop %v1492
    %v1494 = vmul.f32 %v1469, 1.442695
    %v1495 = vpow.pop %v1494
    %v1496 = vmul.f32 %v1470, 1.442695
    %v1497 = vpow.pop %v1496
    %v1498 = vmul.f32 %v1471, 1.442695
    %v1499 = vpow.pop %v1498
    %v1500 = vmul.f32 %v1472, 1.442695
    %v1501 = vpow.pop %v1500
    %v1502 = vmul.f32 %v1473, 1.442695
    %v1503 = vpow.pop %v1502
    %v1504 = vmul.f32 %v1474, 1.442695
    %v1505 = vpow.pop %v1504
    %v1506 = vmul.f32 %v1475, 1.442695
    %v1507 = vpow.pop %v1506
    %v1508 = vmul.f32 %v1476, 1.442695
    %v1509 = vpow.pop %v1508
    %v1510 = vmul.f32 %v1477, 1.442695
    %v1511 = vpow.pop %v1510
    %v1512 = vmul.f32 %v1478, 1.442695
    %v1513 = vpow.pop %v1512
    %v1514 = vmul.f32 %v1479, 1.442695
    %v1515 = vpow.pop %v1514
    %v1516 = vmul.f32 %v1480, 1.442695
    %v1517 = vpow.pop %v1516
    %v1518 = vmul.f32 %v1481, 1.442695
    %v1519 = vpow.pop %v1518
    %v1520 = vmul.f32 %v1482, 1.442695
    %v1521 = vpow.pop %v1520
    %v1522 = vmul.f32 %v1483, 1.442695
    %v1523 = vpow.pop %v1522
    %v1524 = vmul.f32 %v1484, 1.442695
    %v1525 = vpow.pop %v1524
    %v1526 = vmul.f32 %v1485, 1.442695
    %v1527 = vpow.pop %v1526
    %v1528 = vmul.f32 %v1486, 1.442695
    %v1529 = vpow.pop %v1528
    %v1530 = vmul.f32 %v1487, 1.442695
    %v1531 = vpow.pop %v1530
    %v1532 = vmul.f32 %v1488, 1.442695
    %v1533 = vpow.pop %v1532
    %v1534 = vmul.f32 %v1489, 1.442695
    %v1535 = vpow.pop %v1534
    %v1536 = vmul.f32 %v1490, 1.442695
    %v1537 = vpow.pop %v1536
    %v1538 = vmul.f32 %v1491, 1.442695
    %v1539 = vpow.pop %v1538
    %v1540 = vadd.f32 %v1493, 1.0
    %v1541 = vadd.f32 %v1495, 1.0
    %v1542 = vadd.f32 %v1497, 1.0
    %v1543 = vadd.f32 %v1499, 1.0
    %v1544 = vadd.f32 %v1501, 1.0
    %v1545 = vadd.f32 %v1503, 1.0
    %v1546 = vadd.f32 %v1505, 1.0
    %v1547 = vadd.f32 %v1507, 1.0
    %v1548 = vadd.f32 %v1509, 1.0
    %v1549 = vadd.f32 %v1511, 1.0
    %v1550 = vadd.f32 %v1513, 1.0
    %v1551 = vadd.f32 %v1515, 1.0
    %v1552 = vadd.f32 %v1517, 1.0
    %v1553 = vadd.f32 %v1519, 1.0
    %v1554 = vadd.f32 %v1521, 1.0
    %v1555 = vadd.f32 %v1523, 1.0
    %v1556 = vadd.f32 %v1525, 1.0
    %v1557 = vadd.f32 %v1527, 1.0
    %v1558 = vadd.f32 %v1529, 1.0
    %v1559 = vadd.f32 %v1531, 1.0
    %v1560 = vadd.f32 %v1533, 1.0
    %v1561 = vadd.f32 %v1535, 1.0
    %v1562 = vadd.f32 %v1537, 1.0
    %v1563 = vadd.f32 %v1539, 1.0
    %v1564 = vrcp.pop %v1540
    %v1565 = vmul.f32 1.0, %v1564
    %v1566 = vrcp.pop %v1541
    %v1567 = vmul.f32 1.0, %v1566
    %v1568 = vrcp.pop %v1542
    %v1569 = vmul.f32 1.0, %v1568
    %v1570 = vrcp.pop %v1543
    %v1571 = vmul.f32 1.0, %v1570
    %v1572 = vrcp.pop %v1544
    %v1573 = vmul.f32 1.0, %v1572
    %v1574 = vrcp.pop %v1545
    %v1575 = vmul.f32 1.0, %v1574
    %v1576 = vrcp.pop %v1546
    %v1577 = vmul.f32 1.0, %v1576
    %v1578 = vrcp.pop %v1547
    %v1579 = vmul.f32 1.0, %v1578
    %v1580 = vrcp.pop %v1548
    %v1581 = vmul.f32 1.0, %v1580
    %v1582 = vrcp.pop %v1549
    %v1583 = vmul.f32 1.0, %v1582
    %v1584 = vrcp.pop %v1550
    %v1585 = vmul.f32 1.0, %v1584
    %v1586 = vrcp.pop %v1551
    %v1587 = vmul.f32 1.0, %v1586
    %v1588 = vrcp.pop %v1552
    %v1589 = vmul.f32 1.0, %v1588
    %v1590 = vrcp.pop %v1553
    %v1591 = vmul.f32 1.0, %v1590
    %v1592 = vrcp.pop %v1554
    %v1593 = vmul.f32 1.0, %v1592
    %v1594 = vrcp.pop %v1555
    %v1595 = vmul.f32 1.0, %v1594
    %v1596 = vrcp.pop %v1556
    %v1597 = vmul.f32 1.0, %v1596
    %v1598 = vrcp.pop %v1557
    %v1599 = vmul.f32 1.0, %v1598
    %v1600 = vrcp.pop %v1558
    %v1601 = vmul.f32 1.0, %v1600
    %v1602 = vrcp.pop %v1559
    %v1603 = vmul.f32 1.0, %v1602
    %v1604 = vrcp.pop %v1560
    %v1605 = vmul.f32 1.0, %v1604
    %v1606 = vrcp.pop %v1561
    %v1607 = vmul.f32 1.0, %v1606
    %v1608 = vrcp.pop %v1562
    %v1609 = vmul.f32 1.0, %v1608
    %v1610 = vrcp.pop %v1563
    %v1611 = vmul.f32 1.0, %v1610
    %v1612 = vtanh.pop %v1439
    %v1613 = vtanh.pop %v1443
    %v1614 = vtanh.pop %v1447
    %v1615 = vtanh.pop %v1451
    %v1616 = vtanh.pop %v1455
    %v1617 = vtanh.pop %v1459
    %v1618 = vtanh.pop %v1463
    %v1619 = vtanh.pop %v1467
    %v1628 = vrot.slane %v1152, 7
    %v1629 = vrot.slane %v1153, 7
    %v1630 = vrot.slane %v1154, 7
    %v1631 = vrot.slane %v1155, 7
    %v1632 = vrot.slane %v1156, 7
    %v1633 = vrot.slane %v1157, 7
    %v1634 = vrot.slane %v1158, 7
    %v1635 = vrot.slane %v1159, 7
    %v1644 = vmul.f32 %v1567, %v1628
    %v1645 = vmul.f32 %v1573, %v1629
    %v1646 = vmul.f32 %v1579, %v1630
    %v1647 = vmul.f32 %v1585, %v1631
    %v1648 = vmul.f32 %v1591, %v1632
    %v1649 = vmul.f32 %v1597, %v1633
    %v1650 = vmul.f32 %v1603, %v1634
    %v1651 = vmul.f32 %v1609, %v1635
    %v1652 = vmul.f32 %v1565, %v1612
    %v1653 = vmul.f32 %v1571, %v1613
    %v1654 = vmul.f32 %v1577, %v1614
    %v1655 = vmul.f32 %v1583, %v1615
    %v1656 = vmul.f32 %v1589, %v1616
    %v1657 = vmul.f32 %v1595, %v1617
    %v1658 = vmul.f32 %v1601, %v1618
    %v1659 = vmul.f32 %v1607, %v1619
    %v1660 = vadd.f32 %v1644, %v1652
    %v1661 = vadd.f32 %v1645, %v1653
    %v1662 = vadd.f32 %v1646, %v1654
    %v1663 = vadd.f32 %v1647, %v1655
    %v1664 = vadd.f32 %v1648, %v1656
    %v1665 = vadd.f32 %v1649, %v1657
    %v1666 = vadd.f32 %v1650, %v1658
    %v1667 = vadd.f32 %v1651, %v1659
    %v1668 = vtanh.pop %v1660
    %v1669 = vtanh.pop %v1661
    %v1670 = vtanh.pop %v1662
    %v1671 = vtanh.pop %v1663
    %v1672 = vtanh.pop %v1664
    %v1673 = vtanh.pop %v1665
    %v1674 = vtanh.pop %v1666
    %v1675 = vtanh.pop %v1667
    %v1676 = vmul.f32 %v1569, %v1668
    %v1677 = vmul.f32 %v1575, %v1669
    %v1678 = vmul.f32 %v1581, %v1670
    %v1679 = vmul.f32 %v1587, %v1671
    %v1680 = vmul.f32 %v1593, %v1672
    %v1681 = vmul.f32 %v1599, %v1673
    %v1682 = vmul.f32 %v1605, %v1674
    %v1683 = vmul.f32 %v1611, %v1675
    %v1684 = vpack.c.bf16 %v1676, %v1676
    %v1685 = vpack.c.bf16 %v1677, %v1677
    %v1686 = vpack.c.bf16 %v1678, %v1678
    %v1687 = vpack.c.bf16 %v1679, %v1679
    %v1688 = vpack.c.bf16 %v1680, %v1680
    %v1689 = vpack.c.bf16 %v1681, %v1681
    %v1690 = vpack.c.bf16 %v1682, %v1682
    %v1691 = vpack.c.bf16 %v1683, %v1683
    %vm1692 = vcmask 1041409
    %vm1693 = vsmask.f32 1280
    %vm1694 = vmand %vm1692, %vm1693
    %v1695 = vld [vmem:[%s4] sm:$0x2]
    %v1696 = vsel %vm1694, %v1684, %v1695
    %1697 = vst [vmem:[%s4] sm:$0x2] %v1696
    %v1698 = vld [vmem:[%s4 + $0x4] sm:$0x2]
    %v1699 = vsel %vm1694, %v1685, %v1698
    %1700 = vst [vmem:[%s4 + $0x4] sm:$0x2] %v1699
    %v1701 = vld [vmem:[%s4 + $0x8] sm:$0x2]
    %v1702 = vsel %vm1694, %v1686, %v1701
    %1703 = vst [vmem:[%s4 + $0x8] sm:$0x2] %v1702
    %v1704 = vld [vmem:[%s4 + $0xc] sm:$0x2]
    %v1705 = vsel %vm1694, %v1687, %v1704
    %1706 = vst [vmem:[%s4 + $0xc] sm:$0x2] %v1705
    %v1707 = vld [vmem:[%s4 + $0x10] sm:$0x2]
    %v1708 = vsel %vm1694, %v1688, %v1707
    %1709 = vst [vmem:[%s4 + $0x10] sm:$0x2] %v1708
    %v1710 = vld [vmem:[%s4 + $0x14] sm:$0x2]
    %v1711 = vsel %vm1694, %v1689, %v1710
    %1712 = vst [vmem:[%s4 + $0x14] sm:$0x2] %v1711
    %v1713 = vld [vmem:[%s4 + $0x18] sm:$0x2]
    %v1714 = vsel %vm1694, %v1690, %v1713
    %1715 = vst [vmem:[%s4 + $0x18] sm:$0x2] %v1714
    %v1716 = vld [vmem:[%s4 + $0x1c] sm:$0x2]
    %v1717 = vsel %vm1694, %v1691, %v1716
    %1718 = vst [vmem:[%s4 + $0x1c] sm:$0x2] %v1717
    %v1719 = vld [vmem:[%s0] sm:$0x22]
    %v1720 = vld [vmem:[%s0 + $0x8] sm:$0x22]
    %v1721 = vld [vmem:[%s0 + $0x10] sm:$0x22]
    %v1722 = vld [vmem:[%s0 + $0x18] sm:$0x22]
    %v1723 = vld [vmem:[%s0 + $0x20] sm:$0x22]
    %v1724 = vld [vmem:[%s0 + $0x28] sm:$0x22]
    %v1725 = vld [vmem:[%s0 + $0x30] sm:$0x22]
    %v1726 = vld [vmem:[%s0 + $0x38] sm:$0x22]
    %v1727 = vld [vmem:[%s0 + $0x40] sm:$0x22]
    %v1728 = vld [vmem:[%s0 + $0x48] sm:$0x22]
    %v1729 = vld [vmem:[%s0 + $0x50] sm:$0x22]
    %v1730 = vld [vmem:[%s0 + $0x58] sm:$0x22]
    %v1731 = vld [vmem:[%s0 + $0x60] sm:$0x22]
    %v1732 = vld [vmem:[%s0 + $0x68] sm:$0x22]
    %v1733 = vld [vmem:[%s0 + $0x70] sm:$0x22]
    %v1734 = vld [vmem:[%s0 + $0x78] sm:$0x22]
    %v1735 = vunpack.c.l.bf16 %v1719
    %v1736 = vunpack.c.h.bf16 %v1719
    %v1737 = vunpack.c.l.bf16 %v1720
    %v1738 = vunpack.c.h.bf16 %v1720
    %v1739 = vunpack.c.l.bf16 %v1721
    %v1740 = vunpack.c.h.bf16 %v1721
    %v1741 = vunpack.c.l.bf16 %v1722
    %v1742 = vunpack.c.h.bf16 %v1722
    %v1743 = vunpack.c.l.bf16 %v1723
    %v1744 = vunpack.c.h.bf16 %v1723
    %v1745 = vunpack.c.l.bf16 %v1724
    %v1746 = vunpack.c.h.bf16 %v1724
    %v1747 = vunpack.c.l.bf16 %v1725
    %v1748 = vunpack.c.h.bf16 %v1725
    %v1749 = vunpack.c.l.bf16 %v1726
    %v1750 = vunpack.c.h.bf16 %v1726
    %v1751 = vunpack.c.l.bf16 %v1727
    %v1752 = vunpack.c.h.bf16 %v1727
    %v1753 = vunpack.c.l.bf16 %v1728
    %v1754 = vunpack.c.h.bf16 %v1728
    %v1755 = vunpack.c.l.bf16 %v1729
    %v1756 = vunpack.c.h.bf16 %v1729
    %v1757 = vunpack.c.l.bf16 %v1730
    %v1758 = vunpack.c.h.bf16 %v1730
    %v1759 = vunpack.c.l.bf16 %v1731
    %v1760 = vunpack.c.h.bf16 %v1731
    %v1761 = vunpack.c.l.bf16 %v1732
    %v1762 = vunpack.c.h.bf16 %v1732
    %v1763 = vunpack.c.l.bf16 %v1733
    %v1764 = vunpack.c.h.bf16 %v1733
    %v1765 = vunpack.c.l.bf16 %v1734
    %v1766 = vunpack.c.h.bf16 %v1734
    %v1775 = vunpack.c.l.b16 %v1684
    %v1776 = vunpack.c.l.b16 %v1685
    %v1777 = vunpack.c.l.b16 %v1686
    %v1778 = vunpack.c.l.b16 %v1687
    %v1779 = vunpack.c.l.b16 %v1688
    %v1780 = vunpack.c.l.b16 %v1689
    %v1781 = vunpack.c.l.b16 %v1690
    %v1782 = vunpack.c.l.b16 %v1691
    %v1783 = vrot.slane %v1775, 2
    %v1784 = vrot.slane %v1776, 1
    %v1785 = vsel %vm760, %v1784, %v1783
    %v1786 = vsel %vm763, %v1777, %v1785
    %v1787 = vrot.slane %v1778, 7
    %v1788 = vsel %vm766, %v1787, %v1786
    %v1789 = vrot.slane %v1779, 6
    %v1790 = vsel %vm769, %v1789, %v1788
    %v1791 = vrot.slane %v1780, 5
    %v1792 = vsel %vm772, %v1791, %v1790
    %v1793 = vrot.slane %v1781, 4
    %v1794 = vsel %vm775, %v1793, %v1792
    %v1795 = vrot.slane %v1782, 3
    %v1796 = vsel %vm778, %v1795, %v1794
    %v1797 = vpack.c.b16 %v1796, %v1796
    %1799 = vmatprep.subr.bf16.mxu0 %v211
    %1800 = vmatpush1.bf16.msra.mxu0 %v210
    %1801 = vmatprep.subr.bf16.mxu0 %v215
    %1802 = vmatpush1.bf16.msra.mxu0 %v214
    %1803 = vmatprep.subr.bf16.mxu0 %v219
    %1804 = vmatpush1.bf16.msra.mxu0 %v218
    %1805 = vmatprep.subr.bf16.mxu0 %v223
    %1806 = vmatpush1.bf16.msra.mxu0 %v222
    %1807 = vmatprep.subr.bf16.mxu0 %v227
    %1808 = vmatpush1.bf16.msra.mxu0 %v226
    %1809 = vmatprep.subr.bf16.mxu0 %v231
    %1810 = vmatpush1.bf16.msra.mxu0 %v230
    %1811 = vmatprep.subr.bf16.mxu0 %v235
    %1812 = vmatpush1.bf16.msra.mxu0 %v234
    %1813 = vmatprep.subr.bf16.mxu0 %v239
    %1814 = vmatpush1.bf16.msra.mxu0 %v238
    %1815 = vmatprep.subr.bf16.mxu0 0
    %1816 = vmatpush1.bf16.msra.mxu0 0
    %1817 = vmatprep.subr.bf16.mxu0 0
    %1818 = vmatpush1.bf16.msra.mxu0 0
    %1819 = vmatprep.subr.bf16.mxu0 0
    %1820 = vmatpush1.bf16.msra.mxu0 0
    %1821 = vmatprep.subr.bf16.mxu0 0
    %1822 = vmatpush1.bf16.msra.mxu0 0
    %1823 = vmatprep.subr.bf16.mxu0 0
    %1824 = vmatpush1.bf16.msra.mxu0 0
    %1825 = vmatprep.subr.bf16.mxu0 0
    %1826 = vmatpush1.bf16.msra.mxu0 0
    %1827 = vmatprep.subr.bf16.mxu0 0
    %1828 = vmatpush1.bf16.msra.mxu0 0
    %1829 = vmatprep.subr.bf16.mxu0 0
    %1830 = vmatpush1.bf16.msra.mxu0 0
    %1831 = vmatprep.mubr.bf16.mxu0 0
    %1832 = vmatmul.mubr.bf16.gmra.mrb[0].mxu0 %v1797
    %v1833 = vpop.f32.mrb[0].mxu0
    %v1834 = vadd.f32 0.0, %v1833
    %v1835 = vpop.f32.mrb[0].mxu0
    %v1836 = vadd.f32 0.0, %v1835
    %v1837 = vpop.f32.mrb[0].mxu0
    %v1838 = vpop.f32.mrb[0].mxu0
    %1839 = vdwg.mxu0
    %1840 = vmatprep.subr.bf16.mxu0 %v213
    %1841 = vmatpush1.bf16.msra.mxu0 %v212
    %1842 = vmatprep.subr.bf16.mxu0 %v217
    %1843 = vmatpush1.bf16.msra.mxu0 %v216
    %1844 = vmatprep.subr.bf16.mxu0 %v221
    %1845 = vmatpush1.bf16.msra.mxu0 %v220
    %1846 = vmatprep.subr.bf16.mxu0 %v225
    %1847 = vmatpush1.bf16.msra.mxu0 %v224
    %1848 = vmatprep.subr.bf16.mxu0 %v229
    %1849 = vmatpush1.bf16.msra.mxu0 %v228
    %1850 = vmatprep.subr.bf16.mxu0 %v233
    %1851 = vmatpush1.bf16.msra.mxu0 %v232
    %1852 = vmatprep.subr.bf16.mxu0 %v237
    %1853 = vmatpush1.bf16.msra.mxu0 %v236
    %1854 = vmatprep.subr.bf16.mxu0 %v241
    %1855 = vmatpush1.bf16.msra.mxu0 %v240
    %1856 = vmatprep.subr.bf16.mxu0 0
    %1857 = vmatpush1.bf16.msra.mxu0 0
    %1858 = vmatprep.subr.bf16.mxu0 0
    %1859 = vmatpush1.bf16.msra.mxu0 0
    %1860 = vmatprep.subr.bf16.mxu0 0
    %1861 = vmatpush1.bf16.msra.mxu0 0
    %1862 = vmatprep.subr.bf16.mxu0 0
    %1863 = vmatpush1.bf16.msra.mxu0 0
    %1864 = vmatprep.subr.bf16.mxu0 0
    %1865 = vmatpush1.bf16.msra.mxu0 0
    %1866 = vmatprep.subr.bf16.mxu0 0
    %1867 = vmatpush1.bf16.msra.mxu0 0
    %1868 = vmatprep.subr.bf16.mxu0 0
    %1869 = vmatpush1.bf16.msra.mxu0 0
    %1870 = vmatprep.subr.bf16.mxu0 0
    %1871 = vmatpush1.bf16.msra.mxu0 0
    %1872 = vmatprep.mubr.bf16.mxu0 0
    %1873 = vmatmul.mubr.bf16.gmra.mrb[0].mxu0 %v1797
    %v1874 = vpop.f32.mrb[0].mxu0
    %v1875 = vadd.f32 0.0, %v1874
    %v1876 = vpop.f32.mrb[0].mxu0
    %v1877 = vadd.f32 0.0, %v1876
    %v1878 = vpop.f32.mrb[0].mxu0
    %v1879 = vpop.f32.mrb[0].mxu0
    %1880 = vdwg.mxu0
    %v1885 = vrot.slane %v1834, 5
    %v1886 = vrot.slane %v1836, 5
    %v1887 = vrot.slane %v1875, 5
    %v1888 = vrot.slane %v1877, 5
    %v1889 = vrot.slane %v1834, 6
    %v1890 = vrot.slane %v1836, 6
    %v1891 = vrot.slane %v1875, 6
    %v1892 = vrot.slane %v1877, 6
    %v1893 = vrot.slane %v1834, 7
    %v1894 = vrot.slane %v1836, 7
    %v1895 = vrot.slane %v1875, 7
    %v1896 = vrot.slane %v1877, 7
    %v1897 = vrot.slane %v1834, 1
    %v1898 = vrot.slane %v1836, 1
    %v1899 = vrot.slane %v1875, 1
    %v1900 = vrot.slane %v1877, 1
    %v1901 = vrot.slane %v1834, 2
    %v1902 = vrot.slane %v1836, 2
    %v1903 = vrot.slane %v1875, 2
    %v1904 = vrot.slane %v1877, 2
    %v1905 = vrot.slane %v1834, 3
    %v1906 = vrot.slane %v1836, 3
    %v1907 = vrot.slane %v1875, 3
    %v1908 = vrot.slane %v1877, 3
    %v1909 = vrot.slane %v1834, 4
    %v1910 = vrot.slane %v1836, 4
    %v1911 = vrot.slane %v1875, 4
    %v1912 = vrot.slane %v1877, 4
    %v1945 = vadd.f32 %v1735, %v1885
    %v1946 = vadd.f32 %v1736, %v1886
    %v1947 = vadd.f32 %v1737, %v1887
    %v1948 = vadd.f32 %v1738, %v1888
    %v1949 = vadd.f32 %v1739, %v1889
    %v1950 = vadd.f32 %v1740, %v1890
    %v1951 = vadd.f32 %v1741, %v1891
    %v1952 = vadd.f32 %v1742, %v1892
    %v1953 = vadd.f32 %v1743, %v1893
    %v1954 = vadd.f32 %v1744, %v1894
    %v1955 = vadd.f32 %v1745, %v1895
    %v1956 = vadd.f32 %v1746, %v1896
    %v1957 = vadd.f32 %v1747, %v1834
    %v1958 = vadd.f32 %v1748, %v1836
    %v1959 = vadd.f32 %v1749, %v1875
    %v1960 = vadd.f32 %v1750, %v1877
    %v1961 = vadd.f32 %v1751, %v1897
    %v1962 = vadd.f32 %v1752, %v1898
    %v1963 = vadd.f32 %v1753, %v1899
    %v1964 = vadd.f32 %v1754, %v1900
    %v1965 = vadd.f32 %v1755, %v1901
    %v1966 = vadd.f32 %v1756, %v1902
    %v1967 = vadd.f32 %v1757, %v1903
    %v1968 = vadd.f32 %v1758, %v1904
    %v1969 = vadd.f32 %v1759, %v1905
    %v1970 = vadd.f32 %v1760, %v1906
    %v1971 = vadd.f32 %v1761, %v1907
    %v1972 = vadd.f32 %v1762, %v1908
    %v1973 = vadd.f32 %v1763, %v1909
    %v1974 = vadd.f32 %v1764, %v1910
    %v1975 = vadd.f32 %v1765, %v1911
    %v1976 = vadd.f32 %v1766, %v1912
    %v1977 = vxor.u32 %v1945, 2147483648
    %v1978 = vxor.u32 %v1946, 2147483648
    %v1979 = vxor.u32 %v1947, 2147483648
    %v1980 = vxor.u32 %v1949, 2147483648
    %v1981 = vxor.u32 %v1950, 2147483648
    %v1982 = vxor.u32 %v1951, 2147483648
    %v1983 = vxor.u32 %v1953, 2147483648
    %v1984 = vxor.u32 %v1954, 2147483648
    %v1985 = vxor.u32 %v1955, 2147483648
    %v1986 = vxor.u32 %v1957, 2147483648
    %v1987 = vxor.u32 %v1958, 2147483648
    %v1988 = vxor.u32 %v1959, 2147483648
    %v1989 = vxor.u32 %v1961, 2147483648
    %v1990 = vxor.u32 %v1962, 2147483648
    %v1991 = vxor.u32 %v1963, 2147483648
    %v1992 = vxor.u32 %v1965, 2147483648
    %v1993 = vxor.u32 %v1966, 2147483648
    %v1994 = vxor.u32 %v1967, 2147483648
    %v1995 = vxor.u32 %v1969, 2147483648
    %v1996 = vxor.u32 %v1970, 2147483648
    %v1997 = vxor.u32 %v1971, 2147483648
    %v1998 = vxor.u32 %v1973, 2147483648
    %v1999 = vxor.u32 %v1974, 2147483648
    %v2000 = vxor.u32 %v1975, 2147483648
    %v2001 = vmul.f32 %v1977, 1.442695
    %v2002 = vpow.pop %v2001
    %v2003 = vmul.f32 %v1978, 1.442695
    %v2004 = vpow.pop %v2003
    %v2005 = vmul.f32 %v1979, 1.442695
    %v2006 = vpow.pop %v2005
    %v2007 = vmul.f32 %v1980, 1.442695
    %v2008 = vpow.pop %v2007
    %v2009 = vmul.f32 %v1981, 1.442695
    %v2010 = vpow.pop %v2009
    %v2011 = vmul.f32 %v1982, 1.442695
    %v2012 = vpow.pop %v2011
    %v2013 = vmul.f32 %v1983, 1.442695
    %v2014 = vpow.pop %v2013
    %v2015 = vmul.f32 %v1984, 1.442695
    %v2016 = vpow.pop %v2015
    %v2017 = vmul.f32 %v1985, 1.442695
    %v2018 = vpow.pop %v2017
    %v2019 = vmul.f32 %v1986, 1.442695
    %v2020 = vpow.pop %v2019
    %v2021 = vmul.f32 %v1987, 1.442695
    %v2022 = vpow.pop %v2021
    %v2023 = vmul.f32 %v1988, 1.442695
    %v2024 = vpow.pop %v2023
    %v2025 = vmul.f32 %v1989, 1.442695
    %v2026 = vpow.pop %v2025
    %v2027 = vmul.f32 %v1990, 1.442695
    %v2028 = vpow.pop %v2027
    %v2029 = vmul.f32 %v1991, 1.442695
    %v2030 = vpow.pop %v2029
    %v2031 = vmul.f32 %v1992, 1.442695
    %v2032 = vpow.pop %v2031
    %v2033 = vmul.f32 %v1993, 1.442695
    %v2034 = vpow.pop %v2033
    %v2035 = vmul.f32 %v1994, 1.442695
    %v2036 = vpow.pop %v2035
    %v2037 = vmul.f32 %v1995, 1.442695
    %v2038 = vpow.pop %v2037
    %v2039 = vmul.f32 %v1996, 1.442695
    %v2040 = vpow.pop %v2039
    %v2041 = vmul.f32 %v1997, 1.442695
    %v2042 = vpow.pop %v2041
    %v2043 = vmul.f32 %v1998, 1.442695
    %v2044 = vpow.pop %v2043
    %v2045 = vmul.f32 %v1999, 1.442695
    %v2046 = vpow.pop %v2045
    %v2047 = vmul.f32 %v2000, 1.442695
    %v2048 = vpow.pop %v2047
    %v2049 = vadd.f32 %v2002, 1.0
    %v2050 = vadd.f32 %v2004, 1.0
    %v2051 = vadd.f32 %v2006, 1.0
    %v2052 = vadd.f32 %v2008, 1.0
    %v2053 = vadd.f32 %v2010, 1.0
    %v2054 = vadd.f32 %v2012, 1.0
    %v2055 = vadd.f32 %v2014, 1.0
    %v2056 = vadd.f32 %v2016, 1.0
    %v2057 = vadd.f32 %v2018, 1.0
    %v2058 = vadd.f32 %v2020, 1.0
    %v2059 = vadd.f32 %v2022, 1.0
    %v2060 = vadd.f32 %v2024, 1.0
    %v2061 = vadd.f32 %v2026, 1.0
    %v2062 = vadd.f32 %v2028, 1.0
    %v2063 = vadd.f32 %v2030, 1.0
    %v2064 = vadd.f32 %v2032, 1.0
    %v2065 = vadd.f32 %v2034, 1.0
    %v2066 = vadd.f32 %v2036, 1.0
    %v2067 = vadd.f32 %v2038, 1.0
    %v2068 = vadd.f32 %v2040, 1.0
    %v2069 = vadd.f32 %v2042, 1.0
    %v2070 = vadd.f32 %v2044, 1.0
    %v2071 = vadd.f32 %v2046, 1.0
    %v2072 = vadd.f32 %v2048, 1.0
    %v2073 = vrcp.pop %v2049
    %v2074 = vmul.f32 1.0, %v2073
    %v2075 = vrcp.pop %v2050
    %v2076 = vmul.f32 1.0, %v2075
    %v2077 = vrcp.pop %v2051
    %v2078 = vmul.f32 1.0, %v2077
    %v2079 = vrcp.pop %v2052
    %v2080 = vmul.f32 1.0, %v2079
    %v2081 = vrcp.pop %v2053
    %v2082 = vmul.f32 1.0, %v2081
    %v2083 = vrcp.pop %v2054
    %v2084 = vmul.f32 1.0, %v2083
    %v2085 = vrcp.pop %v2055
    %v2086 = vmul.f32 1.0, %v2085
    %v2087 = vrcp.pop %v2056
    %v2088 = vmul.f32 1.0, %v2087
    %v2089 = vrcp.pop %v2057
    %v2090 = vmul.f32 1.0, %v2089
    %v2091 = vrcp.pop %v2058
    %v2092 = vmul.f32 1.0, %v2091
    %v2093 = vrcp.pop %v2059
    %v2094 = vmul.f32 1.0, %v2093
    %v2095 = vrcp.pop %v2060
    %v2096 = vmul.f32 1.0, %v2095
    %v2097 = vrcp.pop %v2061
    %v2098 = vmul.f32 1.0, %v2097
    %v2099 = vrcp.pop %v2062
    %v2100 = vmul.f32 1.0, %v2099
    %v2101 = vrcp.pop %v2063
    %v2102 = vmul.f32 1.0, %v2101
    %v2103 = vrcp.pop %v2064
    %v2104 = vmul.f32 1.0, %v2103
    %v2105 = vrcp.pop %v2065
    %v2106 = vmul.f32 1.0, %v2105
    %v2107 = vrcp.pop %v2066
    %v2108 = vmul.f32 1.0, %v2107
    %v2109 = vrcp.pop %v2067
    %v2110 = vmul.f32 1.0, %v2109
    %v2111 = vrcp.pop %v2068
    %v2112 = vmul.f32 1.0, %v2111
    %v2113 = vrcp.pop %v2069
    %v2114 = vmul.f32 1.0, %v2113
    %v2115 = vrcp.pop %v2070
    %v2116 = vmul.f32 1.0, %v2115
    %v2117 = vrcp.pop %v2071
    %v2118 = vmul.f32 1.0, %v2117
    %v2119 = vrcp.pop %v2072
    %v2120 = vmul.f32 1.0, %v2119
    %v2121 = vtanh.pop %v1948
    %v2122 = vtanh.pop %v1952
    %v2123 = vtanh.pop %v1956
    %v2124 = vtanh.pop %v1960
    %v2125 = vtanh.pop %v1964
    %v2126 = vtanh.pop %v1968
    %v2127 = vtanh.pop %v1972
    %v2128 = vtanh.pop %v1976
    %v2137 = vrot.slane %v1660, 7
    %v2138 = vrot.slane %v1661, 7
    %v2139 = vrot.slane %v1662, 7
    %v2140 = vrot.slane %v1663, 7
    %v2141 = vrot.slane %v1664, 7
    %v2142 = vrot.slane %v1665, 7
    %v2143 = vrot.slane %v1666, 7
    %v2144 = vrot.slane %v1667, 7
    %v2153 = vmul.f32 %v2076, %v2137
    %v2154 = vmul.f32 %v2082, %v2138
    %v2155 = vmul.f32 %v2088, %v2139
    %v2156 = vmul.f32 %v2094, %v2140
    %v2157 = vmul.f32 %v2100, %v2141
    %v2158 = vmul.f32 %v2106, %v2142
    %v2159 = vmul.f32 %v2112, %v2143
    %v2160 = vmul.f32 %v2118, %v2144
    %v2161 = vmul.f32 %v2074, %v2121
    %v2162 = vmul.f32 %v2080, %v2122
    %v2163 = vmul.f32 %v2086, %v2123
    %v2164 = vmul.f32 %v2092, %v2124
    %v2165 = vmul.f32 %v2098, %v2125
    %v2166 = vmul.f32 %v2104, %v2126
    %v2167 = vmul.f32 %v2110, %v2127
    %v2168 = vmul.f32 %v2116, %v2128
    %v2169 = vadd.f32 %v2153, %v2161
    %v2170 = vadd.f32 %v2154, %v2162
    %v2171 = vadd.f32 %v2155, %v2163
    %v2172 = vadd.f32 %v2156, %v2164
    %v2173 = vadd.f32 %v2157, %v2165
    %v2174 = vadd.f32 %v2158, %v2166
    %v2175 = vadd.f32 %v2159, %v2167
    %v2176 = vadd.f32 %v2160, %v2168
    %v2177 = vtanh.pop %v2169
    %v2178 = vtanh.pop %v2170
    %v2179 = vtanh.pop %v2171
    %v2180 = vtanh.pop %v2172
    %v2181 = vtanh.pop %v2173
    %v2182 = vtanh.pop %v2174
    %v2183 = vtanh.pop %v2175
    %v2184 = vtanh.pop %v2176
    %v2185 = vmul.f32 %v2078, %v2177
    %v2186 = vmul.f32 %v2084, %v2178
    %v2187 = vmul.f32 %v2090, %v2179
    %v2188 = vmul.f32 %v2096, %v2180
    %v2189 = vmul.f32 %v2102, %v2181
    %v2190 = vmul.f32 %v2108, %v2182
    %v2191 = vmul.f32 %v2114, %v2183
    %v2192 = vmul.f32 %v2120, %v2184
    %v2193 = vpack.c.bf16 %v2185, %v2185
    %v2194 = vpack.c.bf16 %v2186, %v2186
    %v2195 = vpack.c.bf16 %v2187, %v2187
    %v2196 = vpack.c.bf16 %v2188, %v2188
    %v2197 = vpack.c.bf16 %v2189, %v2189
    %v2198 = vpack.c.bf16 %v2190, %v2190
    %v2199 = vpack.c.bf16 %v2191, %v2191
    %v2200 = vpack.c.bf16 %v2192, %v2192
    %vm2201 = vsmask.f32 7942
    %vm2202 = vmand %vm1692, %vm2201
    %v2203 = vld [vmem:[%s4] sm:$0x2]
    %v2204 = vsel %vm2202, %v2193, %v2203
    %2205 = vst [vmem:[%s4] sm:$0x2] %v2204
    %v2206 = vld [vmem:[%s4 + $0x4] sm:$0x2]
    %v2207 = vsel %vm2202, %v2194, %v2206
    %2208 = vst [vmem:[%s4 + $0x4] sm:$0x2] %v2207
    %v2209 = vld [vmem:[%s4 + $0x8] sm:$0x2]
    %v2210 = vsel %vm2202, %v2195, %v2209
    %2211 = vst [vmem:[%s4 + $0x8] sm:$0x2] %v2210
    %v2212 = vld [vmem:[%s4 + $0xc] sm:$0x2]
    %v2213 = vsel %vm2202, %v2196, %v2212
    %2214 = vst [vmem:[%s4 + $0xc] sm:$0x2] %v2213
    %v2215 = vld [vmem:[%s4 + $0x10] sm:$0x2]
    %v2216 = vsel %vm2202, %v2197, %v2215
    %2217 = vst [vmem:[%s4 + $0x10] sm:$0x2] %v2216
    %v2218 = vld [vmem:[%s4 + $0x14] sm:$0x2]
    %v2219 = vsel %vm2202, %v2198, %v2218
    %2220 = vst [vmem:[%s4 + $0x14] sm:$0x2] %v2219
    %v2221 = vld [vmem:[%s4 + $0x18] sm:$0x2]
    %v2222 = vsel %vm2202, %v2199, %v2221
    %2223 = vst [vmem:[%s4 + $0x18] sm:$0x2] %v2222
    %v2224 = vld [vmem:[%s4 + $0x1c] sm:$0x2]
    %v2225 = vsel %vm2202, %v2200, %v2224
    %2226 = vst [vmem:[%s4 + $0x1c] sm:$0x2] %v2225
    %v2227 = vld [vmem:[%s0] sm:$0x44]
    %v2228 = vld [vmem:[%s0 + $0x8] sm:$0x44]
    %v2229 = vld [vmem:[%s0 + $0x10] sm:$0x44]
    %v2230 = vld [vmem:[%s0 + $0x18] sm:$0x44]
    %v2231 = vld [vmem:[%s0 + $0x20] sm:$0x44]
    %v2232 = vld [vmem:[%s0 + $0x28] sm:$0x44]
    %v2233 = vld [vmem:[%s0 + $0x30] sm:$0x44]
    %v2234 = vld [vmem:[%s0 + $0x38] sm:$0x44]
    %v2235 = vld [vmem:[%s0 + $0x40] sm:$0x44]
    %v2236 = vld [vmem:[%s0 + $0x48] sm:$0x44]
    %v2237 = vld [vmem:[%s0 + $0x50] sm:$0x44]
    %v2238 = vld [vmem:[%s0 + $0x58] sm:$0x44]
    %v2239 = vld [vmem:[%s0 + $0x60] sm:$0x44]
    %v2240 = vld [vmem:[%s0 + $0x68] sm:$0x44]
    %v2241 = vld [vmem:[%s0 + $0x70] sm:$0x44]
    %v2242 = vld [vmem:[%s0 + $0x78] sm:$0x44]
    %v2243 = vunpack.c.l.bf16 %v2227
    %v2244 = vunpack.c.h.bf16 %v2227
    %v2245 = vunpack.c.l.bf16 %v2228
    %v2246 = vunpack.c.h.bf16 %v2228
    %v2247 = vunpack.c.l.bf16 %v2229
    %v2248 = vunpack.c.h.bf16 %v2229
    %v2249 = vunpack.c.l.bf16 %v2230
    %v2250 = vunpack.c.h.bf16 %v2230
    %v2251 = vunpack.c.l.bf16 %v2231
    %v2252 = vunpack.c.h.bf16 %v2231
    %v2253 = vunpack.c.l.bf16 %v2232
    %v2254 = vunpack.c.h.bf16 %v2232
    %v2255 = vunpack.c.l.bf16 %v2233
    %v2256 = vunpack.c.h.bf16 %v2233
    %v2257 = vunpack.c.l.bf16 %v2234
    %v2258 = vunpack.c.h.bf16 %v2234
    %v2259 = vunpack.c.l.bf16 %v2235
    %v2260 = vunpack.c.h.bf16 %v2235
    %v2261 = vunpack.c.l.bf16 %v2236
    %v2262 = vunpack.c.h.bf16 %v2236
    %v2263 = vunpack.c.l.bf16 %v2237
    %v2264 = vunpack.c.h.bf16 %v2237
    %v2265 = vunpack.c.l.bf16 %v2238
    %v2266 = vunpack.c.h.bf16 %v2238
    %v2267 = vunpack.c.l.bf16 %v2239
    %v2268 = vunpack.c.h.bf16 %v2239
    %v2269 = vunpack.c.l.bf16 %v2240
    %v2270 = vunpack.c.h.bf16 %v2240
    %v2271 = vunpack.c.l.bf16 %v2241
    %v2272 = vunpack.c.h.bf16 %v2241
    %v2273 = vunpack.c.l.bf16 %v2242
    %v2274 = vunpack.c.h.bf16 %v2242
    %v2283 = vunpack.c.l.b16 %v2193
    %v2284 = vunpack.c.l.b16 %v2194
    %v2285 = vunpack.c.l.b16 %v2195
    %v2286 = vunpack.c.l.b16 %v2196
    %v2287 = vunpack.c.l.b16 %v2197
    %v2288 = vunpack.c.l.b16 %v2198
    %v2289 = vunpack.c.l.b16 %v2199
    %v2290 = vunpack.c.l.b16 %v2200
    %v2291 = vrot.slane %v2283, 3
    %v2292 = vrot.slane %v2284, 2
    %v2293 = vsel %vm760, %v2292, %v2291
    %v2294 = vrot.slane %v2285, 1
    %v2295 = vsel %vm763, %v2294, %v2293
    %v2296 = vsel %vm766, %v2286, %v2295
    %v2297 = vrot.slane %v2287, 7
    %v2298 = vsel %vm769, %v2297, %v2296
    %v2299 = vrot.slane %v2288, 6
    %v2300 = vsel %vm772, %v2299, %v2298
    %v2301 = vrot.slane %v2289, 5
    %v2302 = vsel %vm775, %v2301, %v2300
    %v2303 = vrot.slane %v2290, 4
    %v2304 = vsel %vm778, %v2303, %v2302
    %v2305 = vpack.c.b16 %v2304, %v2304
    %2307 = vmatprep.subr.bf16.mxu0 %v211
    %2308 = vmatpush1.bf16.msra.mxu0 %v210
    %2309 = vmatprep.subr.bf16.mxu0 %v215
    %2310 = vmatpush1.bf16.msra.mxu0 %v214
    %2311 = vmatprep.subr.bf16.mxu0 %v219
    %2312 = vmatpush1.bf16.msra.mxu0 %v218
    %2313 = vmatprep.subr.bf16.mxu0 %v223
    %2314 = vmatpush1.bf16.msra.mxu0 %v222
    %2315 = vmatprep.subr.bf16.mxu0 %v227
    %2316 = vmatpush1.bf16.msra.mxu0 %v226
    %2317 = vmatprep.subr.bf16.mxu0 %v231
    %2318 = vmatpush1.bf16.msra.mxu0 %v230
    %2319 = vmatprep.subr.bf16.mxu0 %v235
    %2320 = vmatpush1.bf16.msra.mxu0 %v234
    %2321 = vmatprep.subr.bf16.mxu0 %v239
    %2322 = vmatpush1.bf16.msra.mxu0 %v238
    %2323 = vmatprep.subr.bf16.mxu0 0
    %2324 = vmatpush1.bf16.msra.mxu0 0
    %2325 = vmatprep.subr.bf16.mxu0 0
    %2326 = vmatpush1.bf16.msra.mxu0 0
    %2327 = vmatprep.subr.bf16.mxu0 0
    %2328 = vmatpush1.bf16.msra.mxu0 0
    %2329 = vmatprep.subr.bf16.mxu0 0
    %2330 = vmatpush1.bf16.msra.mxu0 0
    %2331 = vmatprep.subr.bf16.mxu0 0
    %2332 = vmatpush1.bf16.msra.mxu0 0
    %2333 = vmatprep.subr.bf16.mxu0 0
    %2334 = vmatpush1.bf16.msra.mxu0 0
    %2335 = vmatprep.subr.bf16.mxu0 0
    %2336 = vmatpush1.bf16.msra.mxu0 0
    %2337 = vmatprep.subr.bf16.mxu0 0
    %2338 = vmatpush1.bf16.msra.mxu0 0
    %2339 = vmatprep.mubr.bf16.mxu0 0
    %2340 = vmatmul.mubr.bf16.gmra.mrb[0].mxu0 %v2305
    %v2341 = vpop.f32.mrb[0].mxu0
    %v2342 = vadd.f32 0.0, %v2341
    %v2343 = vpop.f32.mrb[0].mxu0
    %v2344 = vadd.f32 0.0, %v2343
    %v2345 = vpop.f32.mrb[0].mxu0
    %v2346 = vpop.f32.mrb[0].mxu0
    %2347 = vdwg.mxu0
    %2348 = vmatprep.subr.bf16.mxu0 %v213
    %2349 = vmatpush1.bf16.msra.mxu0 %v212
    %2350 = vmatprep.subr.bf16.mxu0 %v217
    %2351 = vmatpush1.bf16.msra.mxu0 %v216
    %2352 = vmatprep.subr.bf16.mxu0 %v221
    %2353 = vmatpush1.bf16.msra.mxu0 %v220
    %2354 = vmatprep.subr.bf16.mxu0 %v225
    %2355 = vmatpush1.bf16.msra.mxu0 %v224
    %2356 = vmatprep.subr.bf16.mxu0 %v229
    %2357 = vmatpush1.bf16.msra.mxu0 %v228
    %2358 = vmatprep.subr.bf16.mxu0 %v233
    %2359 = vmatpush1.bf16.msra.mxu0 %v232
    %2360 = vmatprep.subr.bf16.mxu0 %v237
    %2361 = vmatpush1.bf16.msra.mxu0 %v236
    %2362 = vmatprep.subr.bf16.mxu0 %v241
    %2363 = vmatpush1.bf16.msra.mxu0 %v240
    %2364 = vmatprep.subr.bf16.mxu0 0
    %2365 = vmatpush1.bf16.msra.mxu0 0
    %2366 = vmatprep.subr.bf16.mxu0 0
    %2367 = vmatpush1.bf16.msra.mxu0 0
    %2368 = vmatprep.subr.bf16.mxu0 0
    %2369 = vmatpush1.bf16.msra.mxu0 0
    %2370 = vmatprep.subr.bf16.mxu0 0
    %2371 = vmatpush1.bf16.msra.mxu0 0
    %2372 = vmatprep.subr.bf16.mxu0 0
    %2373 = vmatpush1.bf16.msra.mxu0 0
    %2374 = vmatprep.subr.bf16.mxu0 0
    %2375 = vmatpush1.bf16.msra.mxu0 0
    %2376 = vmatprep.subr.bf16.mxu0 0
    %2377 = vmatpush1.bf16.msra.mxu0 0
    %2378 = vmatprep.subr.bf16.mxu0 0
    %2379 = vmatpush1.bf16.msra.mxu0 0
    %2380 = vmatprep.mubr.bf16.mxu0 0
    %2381 = vmatmul.mubr.bf16.gmra.mrb[0].mxu0 %v2305
    %v2382 = vpop.f32.mrb[0].mxu0
    %v2383 = vadd.f32 0.0, %v2382
    %v2384 = vpop.f32.mrb[0].mxu0
    %v2385 = vadd.f32 0.0, %v2384
    %v2386 = vpop.f32.mrb[0].mxu0
    %v2387 = vpop.f32.mrb[0].mxu0
    %2388 = vdwg.mxu0
    %v2393 = vrot.slane %v2342, 4
    %v2394 = vrot.slane %v2344, 4
    %v2395 = vrot.slane %v2383, 4
    %v2396 = vrot.slane %v2385, 4
    %v2397 = vrot.slane %v2342, 5
    %v2398 = vrot.slane %v2344, 5
    %v2399 = vrot.slane %v2383, 5
    %v2400 = vrot.slane %v2385, 5
    %v2401 = vrot.slane %v2342, 6
    %v2402 = vrot.slane %v2344, 6
    %v2403 = vrot.slane %v2383, 6
    %v2404 = vrot.slane %v2385, 6
    %v2405 = vrot.slane %v2342, 7
    %v2406 = vrot.slane %v2344, 7
    %v2407 = vrot.slane %v2383, 7
    %v2408 = vrot.slane %v2385, 7
    %v2409 = vrot.slane %v2342, 1
    %v2410 = vrot.slane %v2344, 1
    %v2411 = vrot.slane %v2383, 1
    %v2412 = vrot.slane %v2385, 1
    %v2413 = vrot.slane %v2342, 2
    %v2414 = vrot.slane %v2344, 2
    %v2415 = vrot.slane %v2383, 2
    %v2416 = vrot.slane %v2385, 2
    %v2417 = vrot.slane %v2342, 3
    %v2418 = vrot.slane %v2344, 3
    %v2419 = vrot.slane %v2383, 3
    %v2420 = vrot.slane %v2385, 3
    %v2453 = vadd.f32 %v2243, %v2393
    %v2454 = vadd.f32 %v2244, %v2394
    %v2455 = vadd.f32 %v2245, %v2395
    %v2456 = vadd.f32 %v2246, %v2396
    %v2457 = vadd.f32 %v2247, %v2397
    %v2458 = vadd.f32 %v2248, %v2398
    %v2459 = vadd.f32 %v2249, %v2399
    %v2460 = vadd.f32 %v2250, %v2400
    %v2461 = vadd.f32 %v2251, %v2401
    %v2462 = vadd.f32 %v2252, %v2402
    %v2463 = vadd.f32 %v2253, %v2403
    %v2464 = vadd.f32 %v2254, %v2404
    %v2465 = vadd.f32 %v2255, %v2405
    %v2466 = vadd.f32 %v2256, %v2406
    %v2467 = vadd.f32 %v2257, %v2407
    %v2468 = vadd.f32 %v2258, %v2408
    %v2469 = vadd.f32 %v2259, %v2342
    %v2470 = vadd.f32 %v2260, %v2344
    %v2471 = vadd.f32 %v2261, %v2383
    %v2472 = vadd.f32 %v2262, %v2385
    %v2473 = vadd.f32 %v2263, %v2409
    %v2474 = vadd.f32 %v2264, %v2410
    %v2475 = vadd.f32 %v2265, %v2411
    %v2476 = vadd.f32 %v2266, %v2412
    %v2477 = vadd.f32 %v2267, %v2413
    %v2478 = vadd.f32 %v2268, %v2414
    %v2479 = vadd.f32 %v2269, %v2415
    %v2480 = vadd.f32 %v2270, %v2416
    %v2481 = vadd.f32 %v2271, %v2417
    %v2482 = vadd.f32 %v2272, %v2418
    %v2483 = vadd.f32 %v2273, %v2419
    %v2484 = vadd.f32 %v2274, %v2420
    %v2485 = vxor.u32 %v2453, 2147483648
    %v2486 = vxor.u32 %v2454, 2147483648
    %v2487 = vxor.u32 %v2455, 2147483648
    %v2488 = vxor.u32 %v2457, 2147483648
    %v2489 = vxor.u32 %v2458, 2147483648
    %v2490 = vxor.u32 %v2459, 2147483648
    %v2491 = vxor.u32 %v2461, 2147483648
    %v2492 = vxor.u32 %v2462, 2147483648
    %v2493 = vxor.u32 %v2463, 2147483648
    %v2494 = vxor.u32 %v2465, 2147483648
    %v2495 = vxor.u32 %v2466, 2147483648
    %v2496 = vxor.u32 %v2467, 2147483648
    %v2497 = vxor.u32 %v2469, 2147483648
    %v2498 = vxor.u32 %v2470, 2147483648
    %v2499 = vxor.u32 %v2471, 2147483648
    %v2500 = vxor.u32 %v2473, 2147483648
    %v2501 = vxor.u32 %v2474, 2147483648
    %v2502 = vxor.u32 %v2475, 2147483648
    %v2503 = vxor.u32 %v2477, 2147483648
    %v2504 = vxor.u32 %v2478, 2147483648
    %v2505 = vxor.u32 %v2479, 2147483648
    %v2506 = vxor.u32 %v2481, 2147483648
    %v2507 = vxor.u32 %v2482, 2147483648
    %v2508 = vxor.u32 %v2483, 2147483648
    %v2509 = vmul.f32 %v2485, 1.442695
    %v2510 = vpow.pop %v2509
    %v2511 = vmul.f32 %v2486, 1.442695
    %v2512 = vpow.pop %v2511
    %v2513 = vmul.f32 %v2487, 1.442695
    %v2514 = vpow.pop %v2513
    %v2515 = vmul.f32 %v2488, 1.442695
    %v2516 = vpow.pop %v2515
    %v2517 = vmul.f32 %v2489, 1.442695
    %v2518 = vpow.pop %v2517
    %v2519 = vmul.f32 %v2490, 1.442695
    %v2520 = vpow.pop %v2519
    %v2521 = vmul.f32 %v2491, 1.442695
    %v2522 = vpow.pop %v2521
    %v2523 = vmul.f32 %v2492, 1.442695
    %v2524 = vpow.pop %v2523
    %v2525 = vmul.f32 %v2493, 1.442695
    %v2526 = vpow.pop %v2525
    %v2527 = vmul.f32 %v2494, 1.442695
    %v2528 = vpow.pop %v2527
    %v2529 = vmul.f32 %v2495, 1.442695
    %v2530 = vpow.pop %v2529
    %v2531 = vmul.f32 %v2496, 1.442695
    %v2532 = vpow.pop %v2531
    %v2533 = vmul.f32 %v2497, 1.442695
    %v2534 = vpow.pop %v2533
    %v2535 = vmul.f32 %v2498, 1.442695
    %v2536 = vpow.pop %v2535
    %v2537 = vmul.f32 %v2499, 1.442695
    %v2538 = vpow.pop %v2537
    %v2539 = vmul.f32 %v2500, 1.442695
    %v2540 = vpow.pop %v2539
    %v2541 = vmul.f32 %v2501, 1.442695
    %v2542 = vpow.pop %v2541
    %v2543 = vmul.f32 %v2502, 1.442695
    %v2544 = vpow.pop %v2543
    %v2545 = vmul.f32 %v2503, 1.442695
    %v2546 = vpow.pop %v2545
    %v2547 = vmul.f32 %v2504, 1.442695
    %v2548 = vpow.pop %v2547
    %v2549 = vmul.f32 %v2505, 1.442695
    %v2550 = vpow.pop %v2549
    %v2551 = vmul.f32 %v2506, 1.442695
    %v2552 = vpow.pop %v2551
    %v2553 = vmul.f32 %v2507, 1.442695
    %v2554 = vpow.pop %v2553
    %v2555 = vmul.f32 %v2508, 1.442695
    %v2556 = vpow.pop %v2555
    %v2557 = vadd.f32 %v2510, 1.0
    %v2558 = vadd.f32 %v2512, 1.0
    %v2559 = vadd.f32 %v2514, 1.0
    %v2560 = vadd.f32 %v2516, 1.0
    %v2561 = vadd.f32 %v2518, 1.0
    %v2562 = vadd.f32 %v2520, 1.0
    %v2563 = vadd.f32 %v2522, 1.0
    %v2564 = vadd.f32 %v2524, 1.0
    %v2565 = vadd.f32 %v2526, 1.0
    %v2566 = vadd.f32 %v2528, 1.0
    %v2567 = vadd.f32 %v2530, 1.0
    %v2568 = vadd.f32 %v2532, 1.0
    %v2569 = vadd.f32 %v2534, 1.0
    %v2570 = vadd.f32 %v2536, 1.0
    %v2571 = vadd.f32 %v2538, 1.0
    %v2572 = vadd.f32 %v2540, 1.0
    %v2573 = vadd.f32 %v2542, 1.0
    %v2574 = vadd.f32 %v2544, 1.0
    %v2575 = vadd.f32 %v2546, 1.0
    %v2576 = vadd.f32 %v2548, 1.0
    %v2577 = vadd.f32 %v2550, 1.0
    %v2578 = vadd.f32 %v2552, 1.0
    %v2579 = vadd.f32 %v2554, 1.0
    %v2580 = vadd.f32 %v2556, 1.0
    %v2581 = vrcp.pop %v2557
    %v2582 = vmul.f32 1.0, %v2581
    %v2583 = vrcp.pop %v2558
    %v2584 = vmul.f32 1.0, %v2583
    %v2585 = vrcp.pop %v2559
    %v2586 = vmul.f32 1.0, %v2585
    %v2587 = vrcp.pop %v2560
    %v2588 = vmul.f32 1.0, %v2587
    %v2589 = vrcp.pop %v2561
    %v2590 = vmul.f32 1.0, %v2589
    %v2591 = vrcp.pop %v2562
    %v2592 = vmul.f32 1.0, %v2591
    %v2593 = vrcp.pop %v2563
    %v2594 = vmul.f32 1.0, %v2593
    %v2595 = vrcp.pop %v2564
    %v2596 = vmul.f32 1.0, %v2595
    %v2597 = vrcp.pop %v2565
    %v2598 = vmul.f32 1.0, %v2597
    %v2599 = vrcp.pop %v2566
    %v2600 = vmul.f32 1.0, %v2599
    %v2601 = vrcp.pop %v2567
    %v2602 = vmul.f32 1.0, %v2601
    %v2603 = vrcp.pop %v2568
    %v2604 = vmul.f32 1.0, %v2603
    %v2605 = vrcp.pop %v2569
    %v2606 = vmul.f32 1.0, %v2605
    %v2607 = vrcp.pop %v2570
    %v2608 = vmul.f32 1.0, %v2607
    %v2609 = vrcp.pop %v2571
    %v2610 = vmul.f32 1.0, %v2609
    %v2611 = vrcp.pop %v2572
    %v2612 = vmul.f32 1.0, %v2611
    %v2613 = vrcp.pop %v2573
    %v2614 = vmul.f32 1.0, %v2613
    %v2615 = vrcp.pop %v2574
    %v2616 = vmul.f32 1.0, %v2615
    %v2617 = vrcp.pop %v2575
    %v2618 = vmul.f32 1.0, %v2617
    %v2619 = vrcp.pop %v2576
    %v2620 = vmul.f32 1.0, %v2619
    %v2621 = vrcp.pop %v2577
    %v2622 = vmul.f32 1.0, %v2621
    %v2623 = vrcp.pop %v2578
    %v2624 = vmul.f32 1.0, %v2623
    %v2625 = vrcp.pop %v2579
    %v2626 = vmul.f32 1.0, %v2625
    %v2627 = vrcp.pop %v2580
    %v2628 = vmul.f32 1.0, %v2627
    %v2629 = vtanh.pop %v2456
    %v2630 = vtanh.pop %v2460
    %v2631 = vtanh.pop %v2464
    %v2632 = vtanh.pop %v2468
    %v2633 = vtanh.pop %v2472
    %v2634 = vtanh.pop %v2476
    %v2635 = vtanh.pop %v2480
    %v2636 = vtanh.pop %v2484
    %v2645 = vrot.slane %v2169, 7
    %v2646 = vrot.slane %v2170, 7
    %v2647 = vrot.slane %v2171, 7
    %v2648 = vrot.slane %v2172, 7
    %v2649 = vrot.slane %v2173, 7
    %v2650 = vrot.slane %v2174, 7
    %v2651 = vrot.slane %v2175, 7
    %v2652 = vrot.slane %v2176, 7
    %v2661 = vmul.f32 %v2584, %v2645
    %v2662 = vmul.f32 %v2590, %v2646
    %v2663 = vmul.f32 %v2596, %v2647
    %v2664 = vmul.f32 %v2602, %v2648
    %v2665 = vmul.f32 %v2608, %v2649
    %v2666 = vmul.f32 %v2614, %v2650
    %v2667 = vmul.f32 %v2620, %v2651
    %v2668 = vmul.f32 %v2626, %v2652
    %v2669 = vmul.f32 %v2582, %v2629
    %v2670 = vmul.f32 %v2588, %v2630
    %v2671 = vmul.f32 %v2594, %v2631
    %v2672 = vmul.f32 %v2600, %v2632
    %v2673 = vmul.f32 %v2606, %v2633
    %v2674 = vmul.f32 %v2612, %v2634
    %v2675 = vmul.f32 %v2618, %v2635
    %v2676 = vmul.f32 %v2624, %v2636
    %v2677 = vadd.f32 %v2661, %v2669
    %v2678 = vadd.f32 %v2662, %v2670
    %v2679 = vadd.f32 %v2663, %v2671
    %v2680 = vadd.f32 %v2664, %v2672
    %v2681 = vadd.f32 %v2665, %v2673
    %v2682 = vadd.f32 %v2666, %v2674
    %v2683 = vadd.f32 %v2667, %v2675
    %v2684 = vadd.f32 %v2668, %v2676
    %v2685 = vtanh.pop %v2677
    %v2686 = vtanh.pop %v2678
    %v2687 = vtanh.pop %v2679
    %v2688 = vtanh.pop %v2680
    %v2689 = vtanh.pop %v2681
    %v2690 = vtanh.pop %v2682
    %v2691 = vtanh.pop %v2683
    %v2692 = vtanh.pop %v2684
    %v2693 = vmul.f32 %v2586, %v2685
    %v2694 = vmul.f32 %v2592, %v2686
    %v2695 = vmul.f32 %v2598, %v2687
    %v2696 = vmul.f32 %v2604, %v2688
    %v2697 = vmul.f32 %v2610, %v2689
    %v2698 = vmul.f32 %v2616, %v2690
    %v2699 = vmul.f32 %v2622, %v2691
    %v2700 = vmul.f32 %v2628, %v2692
    %v2701 = vpack.c.bf16 %v2693, %v2693
    %v2702 = vpack.c.bf16 %v2694, %v2694
    %v2703 = vpack.c.bf16 %v2695, %v2695
    %v2704 = vpack.c.bf16 %v2696, %v2696
    %v2705 = vpack.c.bf16 %v2697, %v2697
    %v2706 = vpack.c.bf16 %v2698, %v2698
    %v2707 = vpack.c.bf16 %v2699, %v2699
    %v2708 = vpack.c.bf16 %v2700, %v2700
    %vm2709 = vcmask 1042434
    %vm2710 = vsmask.f32 2304
    %vm2711 = vmand %vm2709, %vm2710
    %v2712 = vld [vmem:[%s4] sm:$0x4]
    %v2713 = vsel %vm2711, %v2701, %v2712
    %2714 = vst [vmem:[%s4] sm:$0x4] %v2713
    %v2715 = vld [vmem:[%s4 + $0x4] sm:$0x4]
    %v2716 = vsel %vm2711, %v2702, %v2715
    %2717 = vst [vmem:[%s4 + $0x4] sm:$0x4] %v2716
    %v2718 = vld [vmem:[%s4 + $0x8] sm:$0x4]
    %v2719 = vsel %vm2711, %v2703, %v2718
    %2720 = vst [vmem:[%s4 + $0x8] sm:$0x4] %v2719
    %v2721 = vld [vmem:[%s4 + $0xc] sm:$0x4]
    %v2722 = vsel %vm2711, %v2704, %v2721
    %2723 = vst [vmem:[%s4 + $0xc] sm:$0x4] %v2722
    %v2724 = vld [vmem:[%s4 + $0x10] sm:$0x4]
    %v2725 = vsel %vm2711, %v2705, %v2724
    %2726 = vst [vmem:[%s4 + $0x10] sm:$0x4] %v2725
    %v2727 = vld [vmem:[%s4 + $0x14] sm:$0x4]
    %v2728 = vsel %vm2711, %v2706, %v2727
    %2729 = vst [vmem:[%s4 + $0x14] sm:$0x4] %v2728
    %v2730 = vld [vmem:[%s4 + $0x18] sm:$0x4]
    %v2731 = vsel %vm2711, %v2707, %v2730
    %2732 = vst [vmem:[%s4 + $0x18] sm:$0x4] %v2731
    %v2733 = vld [vmem:[%s4 + $0x1c] sm:$0x4]
    %v2734 = vsel %vm2711, %v2708, %v2733
    %2735 = vst [vmem:[%s4 + $0x1c] sm:$0x4] %v2734
    %v2736 = vld [vmem:[%s0] sm:$0x44]
    %v2737 = vld [vmem:[%s0 + $0x8] sm:$0x44]
    %v2738 = vld [vmem:[%s0 + $0x10] sm:$0x44]
    %v2739 = vld [vmem:[%s0 + $0x18] sm:$0x44]
    %v2740 = vld [vmem:[%s0 + $0x20] sm:$0x44]
    %v2741 = vld [vmem:[%s0 + $0x28] sm:$0x44]
    %v2742 = vld [vmem:[%s0 + $0x30] sm:$0x44]
    %v2743 = vld [vmem:[%s0 + $0x38] sm:$0x44]
    %v2744 = vld [vmem:[%s0 + $0x40] sm:$0x44]
    %v2745 = vld [vmem:[%s0 + $0x48] sm:$0x44]
    %v2746 = vld [vmem:[%s0 + $0x50] sm:$0x44]
    %v2747 = vld [vmem:[%s0 + $0x58] sm:$0x44]
    %v2748 = vld [vmem:[%s0 + $0x60] sm:$0x44]
    %v2749 = vld [vmem:[%s0 + $0x68] sm:$0x44]
    %v2750 = vld [vmem:[%s0 + $0x70] sm:$0x44]
    %v2751 = vld [vmem:[%s0 + $0x78] sm:$0x44]
    %v2752 = vunpack.c.l.bf16 %v2736
    %v2753 = vunpack.c.h.bf16 %v2736
    %v2754 = vunpack.c.l.bf16 %v2737
    %v2755 = vunpack.c.h.bf16 %v2737
    %v2756 = vunpack.c.l.bf16 %v2738
    %v2757 = vunpack.c.h.bf16 %v2738
    %v2758 = vunpack.c.l.bf16 %v2739
    %v2759 = vunpack.c.h.bf16 %v2739
    %v2760 = vunpack.c.l.bf16 %v2740
    %v2761 = vunpack.c.h.bf16 %v2740
    %v2762 = vunpack.c.l.bf16 %v2741
    %v2763 = vunpack.c.h.bf16 %v2741
    %v2764 = vunpack.c.l.bf16 %v2742
    %v2765 = vunpack.c.h.bf16 %v2742
    %v2766 = vunpack.c.l.bf16 %v2743
    %v2767 = vunpack.c.h.bf16 %v2743
    %v2768 = vunpack.c.l.bf16 %v2744
    %v2769 = vunpack.c.h.bf16 %v2744
    %v2770 = vunpack.c.l.bf16 %v2745
    %v2771 = vunpack.c.h.bf16 %v2745
    %v2772 = vunpack.c.l.bf16 %v2746
    %v2773 = vunpack.c.h.bf16 %v2746
    %v2774 = vunpack.c.l.bf16 %v2747
    %v2775 = vunpack.c.h.bf16 %v2747
    %v2776 = vunpack.c.l.bf16 %v2748
    %v2777 = vunpack.c.h.bf16 %v2748
    %v2778 = vunpack.c.l.bf16 %v2749
    %v2779 = vunpack.c.h.bf16 %v2749
    %v2780 = vunpack.c.l.bf16 %v2750
    %v2781 = vunpack.c.h.bf16 %v2750
    %v2782 = vunpack.c.l.bf16 %v2751
    %v2783 = vunpack.c.h.bf16 %v2751
    %v2792 = vunpack.c.l.b16 %v2701
    %v2793 = vunpack.c.l.b16 %v2702
    %v2794 = vunpack.c.l.b16 %v2703
    %v2795 = vunpack.c.l.b16 %v2704
    %v2796 = vunpack.c.l.b16 %v2705
    %v2797 = vunpack.c.l.b16 %v2706
    %v2798 = vunpack.c.l.b16 %v2707
    %v2799 = vunpack.c.l.b16 %v2708
    %v2800 = vrot.slane %v2792, 4
    %v2801 = vrot.slane %v2793, 3
    %v2802 = vsel %vm760, %v2801, %v2800
    %v2803 = vrot.slane %v2794, 2
    %v2804 = vsel %vm763, %v2803, %v2802
    %v2805 = vrot.slane %v2795, 1
    %v2806 = vsel %vm766, %v2805, %v2804
    %v2807 = vsel %vm769, %v2796, %v2806
    %v2808 = vrot.slane %v2797, 7
    %v2809 = vsel %vm772, %v2808, %v2807
    %v2810 = vrot.slane %v2798, 6
    %v2811 = vsel %vm775, %v2810, %v2809
    %v2812 = vrot.slane %v2799, 5
    %v2813 = vsel %vm778, %v2812, %v2811
    %v2814 = vpack.c.b16 %v2813, %v2813
    %2816 = vmatprep.subr.bf16.mxu0 %v211
    %2817 = vmatpush1.bf16.msra.mxu0 %v210
    %2818 = vmatprep.subr.bf16.mxu0 %v215
    %2819 = vmatpush1.bf16.msra.mxu0 %v214
    %2820 = vmatprep.subr.bf16.mxu0 %v219
    %2821 = vmatpush1.bf16.msra.mxu0 %v218
    %2822 = vmatprep.subr.bf16.mxu0 %v223
    %2823 = vmatpush1.bf16.msra.mxu0 %v222
    %2824 = vmatprep.subr.bf16.mxu0 %v227
    %2825 = vmatpush1.bf16.msra.mxu0 %v226
    %2826 = vmatprep.subr.bf16.mxu0 %v231
    %2827 = vmatpush1.bf16.msra.mxu0 %v230
    %2828 = vmatprep.subr.bf16.mxu0 %v235
    %2829 = vmatpush1.bf16.msra.mxu0 %v234
    %2830 = vmatprep.subr.bf16.mxu0 %v239
    %2831 = vmatpush1.bf16.msra.mxu0 %v238
    %2832 = vmatprep.subr.bf16.mxu0 0
    %2833 = vmatpush1.bf16.msra.mxu0 0
    %2834 = vmatprep.subr.bf16.mxu0 0
    %2835 = vmatpush1.bf16.msra.mxu0 0
    %2836 = vmatprep.subr.bf16.mxu0 0
    %2837 = vmatpush1.bf16.msra.mxu0 0
    %2838 = vmatprep.subr.bf16.mxu0 0
    %2839 = vmatpush1.bf16.msra.mxu0 0
    %2840 = vmatprep.subr.bf16.mxu0 0
    %2841 = vmatpush1.bf16.msra.mxu0 0
    %2842 = vmatprep.subr.bf16.mxu0 0
    %2843 = vmatpush1.bf16.msra.mxu0 0
    %2844 = vmatprep.subr.bf16.mxu0 0
    %2845 = vmatpush1.bf16.msra.mxu0 0
    %2846 = vmatprep.subr.bf16.mxu0 0
    %2847 = vmatpush1.bf16.msra.mxu0 0
    %2848 = vmatprep.mubr.bf16.mxu0 0
    %2849 = vmatmul.mubr.bf16.gmra.mrb[0].mxu0 %v2814
    %v2850 = vpop.f32.mrb[0].mxu0
    %v2851 = vadd.f32 0.0, %v2850
    %v2852 = vpop.f32.mrb[0].mxu0
    %v2853 = vadd.f32 0.0, %v2852
    %v2854 = vpop.f32.mrb[0].mxu0
    %v2855 = vpop.f32.mrb[0].mxu0
    %2856 = vdwg.mxu0
    %2857 = vmatprep.subr.bf16.mxu0 %v213
    %2858 = vmatpush1.bf16.msra.mxu0 %v212
    %2859 = vmatprep.subr.bf16.mxu0 %v217
    %2860 = vmatpush1.bf16.msra.mxu0 %v216
    %2861 = vmatprep.subr.bf16.mxu0 %v221
    %2862 = vmatpush1.bf16.msra.mxu0 %v220
    %2863 = vmatprep.subr.bf16.mxu0 %v225
    %2864 = vmatpush1.bf16.msra.mxu0 %v224
    %2865 = vmatprep.subr.bf16.mxu0 %v229
    %2866 = vmatpush1.bf16.msra.mxu0 %v228
    %2867 = vmatprep.subr.bf16.mxu0 %v233
    %2868 = vmatpush1.bf16.msra.mxu0 %v232
    %2869 = vmatprep.subr.bf16.mxu0 %v237
    %2870 = vmatpush1.bf16.msra.mxu0 %v236
    %2871 = vmatprep.subr.bf16.mxu0 %v241
    %2872 = vmatpush1.bf16.msra.mxu0 %v240
    %2873 = vmatprep.subr.bf16.mxu0 0
    %2874 = vmatpush1.bf16.msra.mxu0 0
    %2875 = vmatprep.subr.bf16.mxu0 0
    %2876 = vmatpush1.bf16.msra.mxu0 0
    %2877 = vmatprep.subr.bf16.mxu0 0
    %2878 = vmatpush1.bf16.msra.mxu0 0
    %2879 = vmatprep.subr.bf16.mxu0 0
    %2880 = vmatpush1.bf16.msra.mxu0 0
    %2881 = vmatprep.subr.bf16.mxu0 0
    %2882 = vmatpush1.bf16.msra.mxu0 0
    %2883 = vmatprep.subr.bf16.mxu0 0
    %2884 = vmatpush1.bf16.msra.mxu0 0
    %2885 = vmatprep.subr.bf16.mxu0 0
    %2886 = vmatpush1.bf16.msra.mxu0 0
    %2887 = vmatprep.subr.bf16.mxu0 0
    %2888 = vmatpush1.bf16.msra.mxu0 0
    %2889 = vmatprep.mubr.bf16.mxu0 0
    %2890 = vmatmul.mubr.bf16.gmra.mrb[0].mxu0 %v2814
    %v2891 = vpop.f32.mrb[0].mxu0
    %v2892 = vadd.f32 0.0, %v2891
    %v2893 = vpop.f32.mrb[0].mxu0
    %v2894 = vadd.f32 0.0, %v2893
    %v2895 = vpop.f32.mrb[0].mxu0
    %v2896 = vpop.f32.mrb[0].mxu0
    %2897 = vdwg.mxu0
    %v2902 = vrot.slane %v2851, 3
    %v2903 = vrot.slane %v2853, 3
    %v2904 = vrot.slane %v2892, 3
    %v2905 = vrot.slane %v2894, 3
    %v2906 = vrot.slane %v2851, 4
    %v2907 = vrot.slane %v2853, 4
    %v2908 = vrot.slane %v2892, 4
    %v2909 = vrot.slane %v2894, 4
    %v2910 = vrot.slane %v2851, 5
    %v2911 = vrot.slane %v2853, 5
    %v2912 = vrot.slane %v2892, 5
    %v2913 = vrot.slane %v2894, 5
    %v2914 = vrot.slane %v2851, 6
    %v2915 = vrot.slane %v2853, 6
    %v2916 = vrot.slane %v2892, 6
    %v2917 = vrot.slane %v2894, 6
    %v2918 = vrot.slane %v2851, 7
    %v2919 = vrot.slane %v2853, 7
    %v2920 = vrot.slane %v2892, 7
    %v2921 = vrot.slane %v2894, 7
    %v2922 = vrot.slane %v2851, 1
    %v2923 = vrot.slane %v2853, 1
    %v2924 = vrot.slane %v2892, 1
    %v2925 = vrot.slane %v2894, 1
    %v2926 = vrot.slane %v2851, 2
    %v2927 = vrot.slane %v2853, 2
    %v2928 = vrot.slane %v2892, 2
    %v2929 = vrot.slane %v2894, 2
    %v2962 = vadd.f32 %v2752, %v2902
    %v2963 = vadd.f32 %v2753, %v2903
    %v2964 = vadd.f32 %v2754, %v2904
    %v2965 = vadd.f32 %v2755, %v2905
    %v2966 = vadd.f32 %v2756, %v2906
    %v2967 = vadd.f32 %v2757, %v2907
    %v2968 = vadd.f32 %v2758, %v2908
    %v2969 = vadd.f32 %v2759, %v2909
    %v2970 = vadd.f32 %v2760, %v2910
    %v2971 = vadd.f32 %v2761, %v2911
    %v2972 = vadd.f32 %v2762, %v2912
    %v2973 = vadd.f32 %v2763, %v2913
    %v2974 = vadd.f32 %v2764, %v2914
    %v2975 = vadd.f32 %v2765, %v2915
    %v2976 = vadd.f32 %v2766, %v2916
    %v2977 = vadd.f32 %v2767, %v2917
    %v2978 = vadd.f32 %v2768, %v2918
    %v2979 = vadd.f32 %v2769, %v2919
    %v2980 = vadd.f32 %v2770, %v2920
    %v2981 = vadd.f32 %v2771, %v2921
    %v2982 = vadd.f32 %v2772, %v2851
    %v2983 = vadd.f32 %v2773, %v2853
    %v2984 = vadd.f32 %v2774, %v2892
    %v2985 = vadd.f32 %v2775, %v2894
    %v2986 = vadd.f32 %v2776, %v2922
    %v2987 = vadd.f32 %v2777, %v2923
    %v2988 = vadd.f32 %v2778, %v2924
    %v2989 = vadd.f32 %v2779, %v2925
    %v2990 = vadd.f32 %v2780, %v2926
    %v2991 = vadd.f32 %v2781, %v2927
    %v2992 = vadd.f32 %v2782, %v2928
    %v2993 = vadd.f32 %v2783, %v2929
    %v2994 = vxor.u32 %v2962, 2147483648
    %v2995 = vxor.u32 %v2963, 2147483648
    %v2996 = vxor.u32 %v2964, 2147483648
    %v2997 = vxor.u32 %v2966, 2147483648
    %v2998 = vxor.u32 %v2967, 2147483648
    %v2999 = vxor.u32 %v2968, 2147483648
    %v3000 = vxor.u32 %v2970, 2147483648
    %v3001 = vxor.u32 %v2971, 2147483648
    %v3002 = vxor.u32 %v2972, 2147483648
    %v3003 = vxor.u32 %v2974, 2147483648
    %v3004 = vxor.u32 %v2975, 2147483648
    %v3005 = vxor.u32 %v2976, 2147483648
    %v3006 = vxor.u32 %v2978, 2147483648
    %v3007 = vxor.u32 %v2979, 2147483648
    %v3008 = vxor.u32 %v2980, 2147483648
    %v3009 = vxor.u32 %v2982, 2147483648
    %v3010 = vxor.u32 %v2983, 2147483648
    %v3011 = vxor.u32 %v2984, 2147483648
    %v3012 = vxor.u32 %v2986, 2147483648
    %v3013 = vxor.u32 %v2987, 2147483648
    %v3014 = vxor.u32 %v2988, 2147483648
    %v3015 = vxor.u32 %v2990, 2147483648
    %v3016 = vxor.u32 %v2991, 2147483648
    %v3017 = vxor.u32 %v2992, 2147483648
    %v3018 = vmul.f32 %v2994, 1.442695
    %v3019 = vpow.pop %v3018
    %v3020 = vmul.f32 %v2995, 1.442695
    %v3021 = vpow.pop %v3020
    %v3022 = vmul.f32 %v2996, 1.442695
    %v3023 = vpow.pop %v3022
    %v3024 = vmul.f32 %v2997, 1.442695
    %v3025 = vpow.pop %v3024
    %v3026 = vmul.f32 %v2998, 1.442695
    %v3027 = vpow.pop %v3026
    %v3028 = vmul.f32 %v2999, 1.442695
    %v3029 = vpow.pop %v3028
    %v3030 = vmul.f32 %v3000, 1.442695
    %v3031 = vpow.pop %v3030
    %v3032 = vmul.f32 %v3001, 1.442695
    %v3033 = vpow.pop %v3032
    %v3034 = vmul.f32 %v3002, 1.442695
    %v3035 = vpow.pop %v3034
    %v3036 = vmul.f32 %v3003, 1.442695
    %v3037 = vpow.pop %v3036
    %v3038 = vmul.f32 %v3004, 1.442695
    %v3039 = vpow.pop %v3038
    %v3040 = vmul.f32 %v3005, 1.442695
    %v3041 = vpow.pop %v3040
    %v3042 = vmul.f32 %v3006, 1.442695
    %v3043 = vpow.pop %v3042
    %v3044 = vmul.f32 %v3007, 1.442695
    %v3045 = vpow.pop %v3044
    %v3046 = vmul.f32 %v3008, 1.442695
    %v3047 = vpow.pop %v3046
    %v3048 = vmul.f32 %v3009, 1.442695
    %v3049 = vpow.pop %v3048
    %v3050 = vmul.f32 %v3010, 1.442695
    %v3051 = vpow.pop %v3050
    %v3052 = vmul.f32 %v3011, 1.442695
    %v3053 = vpow.pop %v3052
    %v3054 = vmul.f32 %v3012, 1.442695
    %v3055 = vpow.pop %v3054
    %v3056 = vmul.f32 %v3013, 1.442695
    %v3057 = vpow.pop %v3056
    %v3058 = vmul.f32 %v3014, 1.442695
    %v3059 = vpow.pop %v3058
    %v3060 = vmul.f32 %v3015, 1.442695
    %v3061 = vpow.pop %v3060
    %v3062 = vmul.f32 %v3016, 1.442695
    %v3063 = vpow.pop %v3062
    %v3064 = vmul.f32 %v3017, 1.442695
    %v3065 = vpow.pop %v3064
    %v3066 = vadd.f32 %v3019, 1.0
    %v3067 = vadd.f32 %v3021, 1.0
    %v3068 = vadd.f32 %v3023, 1.0
    %v3069 = vadd.f32 %v3025, 1.0
    %v3070 = vadd.f32 %v3027, 1.0
    %v3071 = vadd.f32 %v3029, 1.0
    %v3072 = vadd.f32 %v3031, 1.0
    %v3073 = vadd.f32 %v3033, 1.0
    %v3074 = vadd.f32 %v3035, 1.0
    %v3075 = vadd.f32 %v3037, 1.0
    %v3076 = vadd.f32 %v3039, 1.0
    %v3077 = vadd.f32 %v3041, 1.0
    %v3078 = vadd.f32 %v3043, 1.0
    %v3079 = vadd.f32 %v3045, 1.0
    %v3080 = vadd.f32 %v3047, 1.0
    %v3081 = vadd.f32 %v3049, 1.0
    %v3082 = vadd.f32 %v3051, 1.0
    %v3083 = vadd.f32 %v3053, 1.0
    %v3084 = vadd.f32 %v3055, 1.0
    %v3085 = vadd.f32 %v3057, 1.0
    %v3086 = vadd.f32 %v3059, 1.0
    %v3087 = vadd.f32 %v3061, 1.0
    %v3088 = vadd.f32 %v3063, 1.0
    %v3089 = vadd.f32 %v3065, 1.0
    %v3090 = vrcp.pop %v3066
    %v3091 = vmul.f32 1.0, %v3090
    %v3092 = vrcp.pop %v3067
    %v3093 = vmul.f32 1.0, %v3092
    %v3094 = vrcp.pop %v3068
    %v3095 = vmul.f32 1.0, %v3094
    %v3096 = vrcp.pop %v3069
    %v3097 = vmul.f32 1.0, %v3096
    %v3098 = vrcp.pop %v3070
    %v3099 = vmul.f32 1.0, %v3098
    %v3100 = vrcp.pop %v3071
    %v3101 = vmul.f32 1.0, %v3100
    %v3102 = vrcp.pop %v3072
    %v3103 = vmul.f32 1.0, %v3102
    %v3104 = vrcp.pop %v3073
    %v3105 = vmul.f32 1.0, %v3104
    %v3106 = vrcp.pop %v3074
    %v3107 = vmul.f32 1.0, %v3106
    %v3108 = vrcp.pop %v3075
    %v3109 = vmul.f32 1.0, %v3108
    %v3110 = vrcp.pop %v3076
    %v3111 = vmul.f32 1.0, %v3110
    %v3112 = vrcp.pop %v3077
    %v3113 = vmul.f32 1.0, %v3112
    %v3114 = vrcp.pop %v3078
    %v3115 = vmul.f32 1.0, %v3114
    %v3116 = vrcp.pop %v3079
    %v3117 = vmul.f32 1.0, %v3116
    %v3118 = vrcp.pop %v3080
    %v3119 = vmul.f32 1.0, %v3118
    %v3120 = vrcp.pop %v3081
    %v3121 = vmul.f32 1.0, %v3120
    %v3122 = vrcp.pop %v3082
    %v3123 = vmul.f32 1.0, %v3122
    %v3124 = vrcp.pop %v3083
    %v3125 = vmul.f32 1.0, %v3124
    %v3126 = vrcp.pop %v3084
    %v3127 = vmul.f32 1.0, %v3126
    %v3128 = vrcp.pop %v3085
    %v3129 = vmul.f32 1.0, %v3128
    %v3130 = vrcp.pop %v3086
    %v3131 = vmul.f32 1.0, %v3130
    %v3132 = vrcp.pop %v3087
    %v3133 = vmul.f32 1.0, %v3132
    %v3134 = vrcp.pop %v3088
    %v3135 = vmul.f32 1.0, %v3134
    %v3136 = vrcp.pop %v3089
    %v3137 = vmul.f32 1.0, %v3136
    %v3138 = vtanh.pop %v2965
    %v3139 = vtanh.pop %v2969
    %v3140 = vtanh.pop %v2973
    %v3141 = vtanh.pop %v2977
    %v3142 = vtanh.pop %v2981
    %v3143 = vtanh.pop %v2985
    %v3144 = vtanh.pop %v2989
    %v3145 = vtanh.pop %v2993
    %v3154 = vrot.slane %v2677, 7
    %v3155 = vrot.slane %v2678, 7
    %v3156 = vrot.slane %v2679, 7
    %v3157 = vrot.slane %v2680, 7
    %v3158 = vrot.slane %v2681, 7
    %v3159 = vrot.slane %v2682, 7
    %v3160 = vrot.slane %v2683, 7
    %v3161 = vrot.slane %v2684, 7
    %v3170 = vmul.f32 %v3093, %v3154
    %v3171 = vmul.f32 %v3099, %v3155
    %v3172 = vmul.f32 %v3105, %v3156
    %v3173 = vmul.f32 %v3111, %v3157
    %v3174 = vmul.f32 %v3117, %v3158
    %v3175 = vmul.f32 %v3123, %v3159
    %v3176 = vmul.f32 %v3129, %v3160
    %v3177 = vmul.f32 %v3135, %v3161
    %v3178 = vmul.f32 %v3091, %v3138
    %v3179 = vmul.f32 %v3097, %v3139
    %v3180 = vmul.f32 %v3103, %v3140
    %v3181 = vmul.f32 %v3109, %v3141
    %v3182 = vmul.f32 %v3115, %v3142
    %v3183 = vmul.f32 %v3121, %v3143
    %v3184 = vmul.f32 %v3127, %v3144
    %v3185 = vmul.f32 %v3133, %v3145
    %v3186 = vadd.f32 %v3170, %v3178
    %v3187 = vadd.f32 %v3171, %v3179
    %v3188 = vadd.f32 %v3172, %v3180
    %v3189 = vadd.f32 %v3173, %v3181
    %v3190 = vadd.f32 %v3174, %v3182
    %v3191 = vadd.f32 %v3175, %v3183
    %v3192 = vadd.f32 %v3176, %v3184
    %v3193 = vadd.f32 %v3177, %v3185
    %v3194 = vtanh.pop %v3186
    %v3195 = vtanh.pop %v3187
    %v3196 = vtanh.pop %v3188
    %v3197 = vtanh.pop %v3189
    %v3198 = vtanh.pop %v3190
    %v3199 = vtanh.pop %v3191
    %v3200 = vtanh.pop %v3192
    %v3201 = vtanh.pop %v3193
    %v3202 = vmul.f32 %v3095, %v3194
    %v3203 = vmul.f32 %v3101, %v3195
    %v3204 = vmul.f32 %v3107, %v3196
    %v3205 = vmul.f32 %v3113, %v3197
    %v3206 = vmul.f32 %v3119, %v3198
    %v3207 = vmul.f32 %v3125, %v3199
    %v3208 = vmul.f32 %v3131, %v3200
    %v3209 = vmul.f32 %v3137, %v3201
    %v3210 = vpack.c.bf16 %v3202, %v3202
    %v3211 = vpack.c.bf16 %v3203, %v3203
    %v3212 = vpack.c.bf16 %v3204, %v3204
    %v3213 = vpack.c.bf16 %v3205, %v3205
    %v3214 = vpack.c.bf16 %v3206, %v3206
    %v3215 = vpack.c.bf16 %v3207, %v3207
    %v3216 = vpack.c.bf16 %v3208, %v3208
    %v3217 = vpack.c.bf16 %v3209, %v3209
    %vm3218 = vsmask.f32 7946
    %vm3219 = vmand %vm2709, %vm3218
    %v3220 = vld [vmem:[%s4] sm:$0x4]
    %v3221 = vsel %vm3219, %v3210, %v3220
    %3222 = vst [vmem:[%s4] sm:$0x4] %v3221
    %v3223 = vld [vmem:[%s4 + $0x4] sm:$0x4]
    %v3224 = vsel %vm3219, %v3211, %v3223
    %3225 = vst [vmem:[%s4 + $0x4] sm:$0x4] %v3224
    %v3226 = vld [vmem:[%s4 + $0x8] sm:$0x4]
    %v3227 = vsel %vm3219, %v3212, %v3226
    %3228 = vst [vmem:[%s4 + $0x8] sm:$0x4] %v3227
    %v3229 = vld [vmem:[%s4 + $0xc] sm:$0x4]
    %v3230 = vsel %vm3219, %v3213, %v3229
    %3231 = vst [vmem:[%s4 + $0xc] sm:$0x4] %v3230
    %v3232 = vld [vmem:[%s4 + $0x10] sm:$0x4]
    %v3233 = vsel %vm3219, %v3214, %v3232
    %3234 = vst [vmem:[%s4 + $0x10] sm:$0x4] %v3233
    %v3235 = vld [vmem:[%s4 + $0x14] sm:$0x4]
    %v3236 = vsel %vm3219, %v3215, %v3235
    %3237 = vst [vmem:[%s4 + $0x14] sm:$0x4] %v3236
    %v3238 = vld [vmem:[%s4 + $0x18] sm:$0x4]
    %v3239 = vsel %vm3219, %v3216, %v3238
    %3240 = vst [vmem:[%s4 + $0x18] sm:$0x4] %v3239
    %v3241 = vld [vmem:[%s4 + $0x1c] sm:$0x4]
    %v3242 = vsel %vm3219, %v3217, %v3241
    %3243 = vst [vmem:[%s4 + $0x1c] sm:$0x4] %v3242
    %v3244 = vld [vmem:[%s0] sm:$0x88]
    %v3245 = vld [vmem:[%s0 + $0x8] sm:$0x88]
    %v3246 = vld [vmem:[%s0 + $0x10] sm:$0x88]
    %v3247 = vld [vmem:[%s0 + $0x18] sm:$0x88]
    %v3248 = vld [vmem:[%s0 + $0x20] sm:$0x88]
    %v3249 = vld [vmem:[%s0 + $0x28] sm:$0x88]
    %v3250 = vld [vmem:[%s0 + $0x30] sm:$0x88]
    %v3251 = vld [vmem:[%s0 + $0x38] sm:$0x88]
    %v3252 = vld [vmem:[%s0 + $0x40] sm:$0x88]
    %v3253 = vld [vmem:[%s0 + $0x48] sm:$0x88]
    %v3254 = vld [vmem:[%s0 + $0x50] sm:$0x88]
    %v3255 = vld [vmem:[%s0 + $0x58] sm:$0x88]
    %v3256 = vld [vmem:[%s0 + $0x60] sm:$0x88]
    %v3257 = vld [vmem:[%s0 + $0x68] sm:$0x88]
    %v3258 = vld [vmem:[%s0 + $0x70] sm:$0x88]
    %v3259 = vld [vmem:[%s0 + $0x78] sm:$0x88]
    %v3260 = vunpack.c.l.bf16 %v3244
    %v3261 = vunpack.c.h.bf16 %v3244
    %v3262 = vunpack.c.l.bf16 %v3245
    %v3263 = vunpack.c.h.bf16 %v3245
    %v3264 = vunpack.c.l.bf16 %v3246
    %v3265 = vunpack.c.h.bf16 %v3246
    %v3266 = vunpack.c.l.bf16 %v3247
    %v3267 = vunpack.c.h.bf16 %v3247
    %v3268 = vunpack.c.l.bf16 %v3248
    %v3269 = vunpack.c.h.bf16 %v3248
    %v3270 = vunpack.c.l.bf16 %v3249
    %v3271 = vunpack.c.h.bf16 %v3249
    %v3272 = vunpack.c.l.bf16 %v3250
    %v3273 = vunpack.c.h.bf16 %v3250
    %v3274 = vunpack.c.l.bf16 %v3251
    %v3275 = vunpack.c.h.bf16 %v3251
    %v3276 = vunpack.c.l.bf16 %v3252
    %v3277 = vunpack.c.h.bf16 %v3252
    %v3278 = vunpack.c.l.bf16 %v3253
    %v3279 = vunpack.c.h.bf16 %v3253
    %v3280 = vunpack.c.l.bf16 %v3254
    %v3281 = vunpack.c.h.bf16 %v3254
    %v3282 = vunpack.c.l.bf16 %v3255
    %v3283 = vunpack.c.h.bf16 %v3255
    %v3284 = vunpack.c.l.bf16 %v3256
    %v3285 = vunpack.c.h.bf16 %v3256
    %v3286 = vunpack.c.l.bf16 %v3257
    %v3287 = vunpack.c.h.bf16 %v3257
    %v3288 = vunpack.c.l.bf16 %v3258
    %v3289 = vunpack.c.h.bf16 %v3258
    %v3290 = vunpack.c.l.bf16 %v3259
    %v3291 = vunpack.c.h.bf16 %v3259
    %v3300 = vunpack.c.l.b16 %v3210
    %v3301 = vunpack.c.l.b16 %v3211
    %v3302 = vunpack.c.l.b16 %v3212
    %v3303 = vunpack.c.l.b16 %v3213
    %v3304 = vunpack.c.l.b16 %v3214
    %v3305 = vunpack.c.l.b16 %v3215
    %v3306 = vunpack.c.l.b16 %v3216
    %v3307 = vunpack.c.l.b16 %v3217
    %v3308 = vrot.slane %v3300, 5
    %v3309 = vrot.slane %v3301, 4
    %v3310 = vsel %vm760, %v3309, %v3308
    %v3311 = vrot.slane %v3302, 3
    %v3312 = vsel %vm763, %v3311, %v3310
    %v3313 = vrot.slane %v3303, 2
    %v3314 = vsel %vm766, %v3313, %v3312
    %v3315 = vrot.slane %v3304, 1
    %v3316 = vsel %vm769, %v3315, %v3314
    %v3317 = vsel %vm772, %v3305, %v3316
    %v3318 = vrot.slane %v3306, 7
    %v3319 = vsel %vm775, %v3318, %v3317
    %v3320 = vrot.slane %v3307, 6
    %v3321 = vsel %vm778, %v3320, %v3319
    %v3322 = vpack.c.b16 %v3321, %v3321
    %3324 = vmatprep.subr.bf16.mxu0 %v211
    %3325 = vmatpush1.bf16.msra.mxu0 %v210
    %3326 = vmatprep.subr.bf16.mxu0 %v215
    %3327 = vmatpush1.bf16.msra.mxu0 %v214
    %3328 = vmatprep.subr.bf16.mxu0 %v219
    %3329 = vmatpush1.bf16.msra.mxu0 %v218
    %3330 = vmatprep.subr.bf16.mxu0 %v223
    %3331 = vmatpush1.bf16.msra.mxu0 %v222
    %3332 = vmatprep.subr.bf16.mxu0 %v227
    %3333 = vmatpush1.bf16.msra.mxu0 %v226
    %3334 = vmatprep.subr.bf16.mxu0 %v231
    %3335 = vmatpush1.bf16.msra.mxu0 %v230
    %3336 = vmatprep.subr.bf16.mxu0 %v235
    %3337 = vmatpush1.bf16.msra.mxu0 %v234
    %3338 = vmatprep.subr.bf16.mxu0 %v239
    %3339 = vmatpush1.bf16.msra.mxu0 %v238
    %3340 = vmatprep.subr.bf16.mxu0 0
    %3341 = vmatpush1.bf16.msra.mxu0 0
    %3342 = vmatprep.subr.bf16.mxu0 0
    %3343 = vmatpush1.bf16.msra.mxu0 0
    %3344 = vmatprep.subr.bf16.mxu0 0
    %3345 = vmatpush1.bf16.msra.mxu0 0
    %3346 = vmatprep.subr.bf16.mxu0 0
    %3347 = vmatpush1.bf16.msra.mxu0 0
    %3348 = vmatprep.subr.bf16.mxu0 0
    %3349 = vmatpush1.bf16.msra.mxu0 0
    %3350 = vmatprep.subr.bf16.mxu0 0
    %3351 = vmatpush1.bf16.msra.mxu0 0
    %3352 = vmatprep.subr.bf16.mxu0 0
    %3353 = vmatpush1.bf16.msra.mxu0 0
    %3354 = vmatprep.subr.bf16.mxu0 0
    %3355 = vmatpush1.bf16.msra.mxu0 0
    %3356 = vmatprep.mubr.bf16.mxu0 0
    %3357 = vmatmul.mubr.bf16.gmra.mrb[0].mxu0 %v3322
    %v3358 = vpop.f32.mrb[0].mxu0
    %v3359 = vadd.f32 0.0, %v3358
    %v3360 = vpop.f32.mrb[0].mxu0
    %v3361 = vadd.f32 0.0, %v3360
    %v3362 = vpop.f32.mrb[0].mxu0
    %v3363 = vpop.f32.mrb[0].mxu0
    %3364 = vdwg.mxu0
    %3365 = vmatprep.subr.bf16.mxu0 %v213
    %3366 = vmatpush1.bf16.msra.mxu0 %v212
    %3367 = vmatprep.subr.bf16.mxu0 %v217
    %3368 = vmatpush1.bf16.msra.mxu0 %v216
    %3369 = vmatprep.subr.bf16.mxu0 %v221
    %3370 = vmatpush1.bf16.msra.mxu0 %v220
    %3371 = vmatprep.subr.bf16.mxu0 %v225
    %3372 = vmatpush1.bf16.msra.mxu0 %v224
    %3373 = vmatprep.subr.bf16.mxu0 %v229
    %3374 = vmatpush1.bf16.msra.mxu0 %v228
    %3375 = vmatprep.subr.bf16.mxu0 %v233
    %3376 = vmatpush1.bf16.msra.mxu0 %v232
    %3377 = vmatprep.subr.bf16.mxu0 %v237
    %3378 = vmatpush1.bf16.msra.mxu0 %v236
    %3379 = vmatprep.subr.bf16.mxu0 %v241
    %3380 = vmatpush1.bf16.msra.mxu0 %v240
    %3381 = vmatprep.subr.bf16.mxu0 0
    %3382 = vmatpush1.bf16.msra.mxu0 0
    %3383 = vmatprep.subr.bf16.mxu0 0
    %3384 = vmatpush1.bf16.msra.mxu0 0
    %3385 = vmatprep.subr.bf16.mxu0 0
    %3386 = vmatpush1.bf16.msra.mxu0 0
    %3387 = vmatprep.subr.bf16.mxu0 0
    %3388 = vmatpush1.bf16.msra.mxu0 0
    %3389 = vmatprep.subr.bf16.mxu0 0
    %3390 = vmatpush1.bf16.msra.mxu0 0
    %3391 = vmatprep.subr.bf16.mxu0 0
    %3392 = vmatpush1.bf16.msra.mxu0 0
    %3393 = vmatprep.subr.bf16.mxu0 0
    %3394 = vmatpush1.bf16.msra.mxu0 0
    %3395 = vmatprep.subr.bf16.mxu0 0
    %3396 = vmatpush1.bf16.msra.mxu0 0
    %3397 = vmatprep.mubr.bf16.mxu0 0
    %3398 = vmatmul.mubr.bf16.gmra.mrb[0].mxu0 %v3322
    %v3399 = vpop.f32.mrb[0].mxu0
    %v3400 = vadd.f32 0.0, %v3399
    %v3401 = vpop.f32.mrb[0].mxu0
    %v3402 = vadd.f32 0.0, %v3401
    %v3403 = vpop.f32.mrb[0].mxu0
    %v3404 = vpop.f32.mrb[0].mxu0
    %3405 = vdwg.mxu0
    %v3410 = vrot.slane %v3359, 2
    %v3411 = vrot.slane %v3361, 2
    %v3412 = vrot.slane %v3400, 2
    %v3413 = vrot.slane %v3402, 2
    %v3414 = vrot.slane %v3359, 3
    %v3415 = vrot.slane %v3361, 3
    %v3416 = vrot.slane %v3400, 3
    %v3417 = vrot.slane %v3402, 3
    %v3418 = vrot.slane %v3359, 4
    %v3419 = vrot.slane %v3361, 4
    %v3420 = vrot.slane %v3400, 4
    %v3421 = vrot.slane %v3402, 4
    %v3422 = vrot.slane %v3359, 5
    %v3423 = vrot.slane %v3361, 5
    %v3424 = vrot.slane %v3400, 5
    %v3425 = vrot.slane %v3402, 5
    %v3426 = vrot.slane %v3359, 6
    %v3427 = vrot.slane %v3361, 6
    %v3428 = vrot.slane %v3400, 6
    %v3429 = vrot.slane %v3402, 6
    %v3430 = vrot.slane %v3359, 7
    %v3431 = vrot.slane %v3361, 7
    %v3432 = vrot.slane %v3400, 7
    %v3433 = vrot.slane %v3402, 7
    %v3434 = vrot.slane %v3359, 1
    %v3435 = vrot.slane %v3361, 1
    %v3436 = vrot.slane %v3400, 1
    %v3437 = vrot.slane %v3402, 1
    %v3470 = vadd.f32 %v3260, %v3410
    %v3471 = vadd.f32 %v3261, %v3411
    %v3472 = vadd.f32 %v3262, %v3412
    %v3473 = vadd.f32 %v3263, %v3413
    %v3474 = vadd.f32 %v3264, %v3414
    %v3475 = vadd.f32 %v3265, %v3415
    %v3476 = vadd.f32 %v3266, %v3416
    %v3477 = vadd.f32 %v3267, %v3417
    %v3478 = vadd.f32 %v3268, %v3418
    %v3479 = vadd.f32 %v3269, %v3419
    %v3480 = vadd.f32 %v3270, %v3420
    %v3481 = vadd.f32 %v3271, %v3421
    %v3482 = vadd.f32 %v3272, %v3422
    %v3483 = vadd.f32 %v3273, %v3423
    %v3484 = vadd.f32 %v3274, %v3424
    %v3485 = vadd.f32 %v3275, %v3425
    %v3486 = vadd.f32 %v3276, %v3426
    %v3487 = vadd.f32 %v3277, %v3427
    %v3488 = vadd.f32 %v3278, %v3428
    %v3489 = vadd.f32 %v3279, %v3429
    %v3490 = vadd.f32 %v3280, %v3430
    %v3491 = vadd.f32 %v3281, %v3431
    %v3492 = vadd.f32 %v3282, %v3432
    %v3493 = vadd.f32 %v3283, %v3433
    %v3494 = vadd.f32 %v3284, %v3359
    %v3495 = vadd.f32 %v3285, %v3361
    %v3496 = vadd.f32 %v3286, %v3400
    %v3497 = vadd.f32 %v3287, %v3402
    %v3498 = vadd.f32 %v3288, %v3434
    %v3499 = vadd.f32 %v3289, %v3435
    %v3500 = vadd.f32 %v3290, %v3436
    %v3501 = vadd.f32 %v3291, %v3437
    %v3502 = vxor.u32 %v3470, 2147483648
    %v3503 = vxor.u32 %v3471, 2147483648
    %v3504 = vxor.u32 %v3472, 2147483648
    %v3505 = vxor.u32 %v3474, 2147483648
    %v3506 = vxor.u32 %v3475, 2147483648
    %v3507 = vxor.u32 %v3476, 2147483648
    %v3508 = vxor.u32 %v3478, 2147483648
    %v3509 = vxor.u32 %v3479, 2147483648
    %v3510 = vxor.u32 %v3480, 2147483648
    %v3511 = vxor.u32 %v3482, 2147483648
    %v3512 = vxor.u32 %v3483, 2147483648
    %v3513 = vxor.u32 %v3484, 2147483648
    %v3514 = vxor.u32 %v3486, 2147483648
    %v3515 = vxor.u32 %v3487, 2147483648
    %v3516 = vxor.u32 %v3488, 2147483648
    %v3517 = vxor.u32 %v3490, 2147483648
    %v3518 = vxor.u32 %v3491, 2147483648
    %v3519 = vxor.u32 %v3492, 2147483648
    %v3520 = vxor.u32 %v3494, 2147483648
    %v3521 = vxor.u32 %v3495, 2147483648
    %v3522 = vxor.u32 %v3496, 2147483648
    %v3523 = vxor.u32 %v3498, 2147483648
    %v3524 = vxor.u32 %v3499, 2147483648
    %v3525 = vxor.u32 %v3500, 2147483648
    %v3526 = vmul.f32 %v3502, 1.442695
    %v3527 = vpow.pop %v3526
    %v3528 = vmul.f32 %v3503, 1.442695
    %v3529 = vpow.pop %v3528
    %v3530 = vmul.f32 %v3504, 1.442695
    %v3531 = vpow.pop %v3530
    %v3532 = vmul.f32 %v3505, 1.442695
    %v3533 = vpow.pop %v3532
    %v3534 = vmul.f32 %v3506, 1.442695
    %v3535 = vpow.pop %v3534
    %v3536 = vmul.f32 %v3507, 1.442695
    %v3537 = vpow.pop %v3536
    %v3538 = vmul.f32 %v3508, 1.442695
    %v3539 = vpow.pop %v3538
    %v3540 = vmul.f32 %v3509, 1.442695
    %v3541 = vpow.pop %v3540
    %v3542 = vmul.f32 %v3510, 1.442695
    %v3543 = vpow.pop %v3542
    %v3544 = vmul.f32 %v3511, 1.442695
    %v3545 = vpow.pop %v3544
    %v3546 = vmul.f32 %v3512, 1.442695
    %v3547 = vpow.pop %v3546
    %v3548 = vmul.f32 %v3513, 1.442695
    %v3549 = vpow.pop %v3548
    %v3550 = vmul.f32 %v3514, 1.442695
    %v3551 = vpow.pop %v3550
    %v3552 = vmul.f32 %v3515, 1.442695
    %v3553 = vpow.pop %v3552
    %v3554 = vmul.f32 %v3516, 1.442695
    %v3555 = vpow.pop %v3554
    %v3556 = vmul.f32 %v3517, 1.442695
    %v3557 = vpow.pop %v3556
    %v3558 = vmul.f32 %v3518, 1.442695
    %v3559 = vpow.pop %v3558
    %v3560 = vmul.f32 %v3519, 1.442695
    %v3561 = vpow.pop %v3560
    %v3562 = vmul.f32 %v3520, 1.442695
    %v3563 = vpow.pop %v3562
    %v3564 = vmul.f32 %v3521, 1.442695
    %v3565 = vpow.pop %v3564
    %v3566 = vmul.f32 %v3522, 1.442695
    %v3567 = vpow.pop %v3566
    %v3568 = vmul.f32 %v3523, 1.442695
    %v3569 = vpow.pop %v3568
    %v3570 = vmul.f32 %v3524, 1.442695
    %v3571 = vpow.pop %v3570
    %v3572 = vmul.f32 %v3525, 1.442695
    %v3573 = vpow.pop %v3572
    %v3574 = vadd.f32 %v3527, 1.0
    %v3575 = vadd.f32 %v3529, 1.0
    %v3576 = vadd.f32 %v3531, 1.0
    %v3577 = vadd.f32 %v3533, 1.0
    %v3578 = vadd.f32 %v3535, 1.0
    %v3579 = vadd.f32 %v3537, 1.0
    %v3580 = vadd.f32 %v3539, 1.0
    %v3581 = vadd.f32 %v3541, 1.0
    %v3582 = vadd.f32 %v3543, 1.0
    %v3583 = vadd.f32 %v3545, 1.0
    %v3584 = vadd.f32 %v3547, 1.0
    %v3585 = vadd.f32 %v3549, 1.0
    %v3586 = vadd.f32 %v3551, 1.0
    %v3587 = vadd.f32 %v3553, 1.0
    %v3588 = vadd.f32 %v3555, 1.0
    %v3589 = vadd.f32 %v3557, 1.0
    %v3590 = vadd.f32 %v3559, 1.0
    %v3591 = vadd.f32 %v3561, 1.0
    %v3592 = vadd.f32 %v3563, 1.0
    %v3593 = vadd.f32 %v3565, 1.0
    %v3594 = vadd.f32 %v3567, 1.0
    %v3595 = vadd.f32 %v3569, 1.0
    %v3596 = vadd.f32 %v3571, 1.0
    %v3597 = vadd.f32 %v3573, 1.0
    %v3598 = vrcp.pop %v3574
    %v3599 = vmul.f32 1.0, %v3598
    %v3600 = vrcp.pop %v3575
    %v3601 = vmul.f32 1.0, %v3600
    %v3602 = vrcp.pop %v3576
    %v3603 = vmul.f32 1.0, %v3602
    %v3604 = vrcp.pop %v3577
    %v3605 = vmul.f32 1.0, %v3604
    %v3606 = vrcp.pop %v3578
    %v3607 = vmul.f32 1.0, %v3606
    %v3608 = vrcp.pop %v3579
    %v3609 = vmul.f32 1.0, %v3608
    %v3610 = vrcp.pop %v3580
    %v3611 = vmul.f32 1.0, %v3610
    %v3612 = vrcp.pop %v3581
    %v3613 = vmul.f32 1.0, %v3612
    %v3614 = vrcp.pop %v3582
    %v3615 = vmul.f32 1.0, %v3614
    %v3616 = vrcp.pop %v3583
    %v3617 = vmul.f32 1.0, %v3616
    %v3618 = vrcp.pop %v3584
    %v3619 = vmul.f32 1.0, %v3618
    %v3620 = vrcp.pop %v3585
    %v3621 = vmul.f32 1.0, %v3620
    %v3622 = vrcp.pop %v3586
    %v3623 = vmul.f32 1.0, %v3622
    %v3624 = vrcp.pop %v3587
    %v3625 = vmul.f32 1.0, %v3624
    %v3626 = vrcp.pop %v3588
    %v3627 = vmul.f32 1.0, %v3626
    %v3628 = vrcp.pop %v3589
    %v3629 = vmul.f32 1.0, %v3628
    %v3630 = vrcp.pop %v3590
    %v3631 = vmul.f32 1.0, %v3630
    %v3632 = vrcp.pop %v3591
    %v3633 = vmul.f32 1.0, %v3632
    %v3634 = vrcp.pop %v3592
    %v3635 = vmul.f32 1.0, %v3634
    %v3636 = vrcp.pop %v3593
    %v3637 = vmul.f32 1.0, %v3636
    %v3638 = vrcp.pop %v3594
    %v3639 = vmul.f32 1.0, %v3638
    %v3640 = vrcp.pop %v3595
    %v3641 = vmul.f32 1.0, %v3640
    %v3642 = vrcp.pop %v3596
    %v3643 = vmul.f32 1.0, %v3642
    %v3644 = vrcp.pop %v3597
    %v3645 = vmul.f32 1.0, %v3644
    %v3646 = vtanh.pop %v3473
    %v3647 = vtanh.pop %v3477
    %v3648 = vtanh.pop %v3481
    %v3649 = vtanh.pop %v3485
    %v3650 = vtanh.pop %v3489
    %v3651 = vtanh.pop %v3493
    %v3652 = vtanh.pop %v3497
    %v3653 = vtanh.pop %v3501
    %v3662 = vrot.slane %v3186, 7
    %v3663 = vrot.slane %v3187, 7
    %v3664 = vrot.slane %v3188, 7
    %v3665 = vrot.slane %v3189, 7
    %v3666 = vrot.slane %v3190, 7
    %v3667 = vrot.slane %v3191, 7
    %v3668 = vrot.slane %v3192, 7
    %v3669 = vrot.slane %v3193, 7
    %v3678 = vmul.f32 %v3601, %v3662
    %v3679 = vmul.f32 %v3607, %v3663
    %v3680 = vmul.f32 %v3613, %v3664
    %v3681 = vmul.f32 %v3619, %v3665
    %v3682 = vmul.f32 %v3625, %v3666
    %v3683 = vmul.f32 %v3631, %v3667
    %v3684 = vmul.f32 %v3637, %v3668
    %v3685 = vmul.f32 %v3643, %v3669
    %v3686 = vmul.f32 %v3599, %v3646
    %v3687 = vmul.f32 %v3605, %v3647
    %v3688 = vmul.f32 %v3611, %v3648
    %v3689 = vmul.f32 %v3617, %v3649
    %v3690 = vmul.f32 %v3623, %v3650
    %v3691 = vmul.f32 %v3629, %v3651
    %v3692 = vmul.f32 %v3635, %v3652
    %v3693 = vmul.f32 %v3641, %v3653
    %v3694 = vadd.f32 %v3678, %v3686
    %v3695 = vadd.f32 %v3679, %v3687
    %v3696 = vadd.f32 %v3680, %v3688
    %v3697 = vadd.f32 %v3681, %v3689
    %v3698 = vadd.f32 %v3682, %v3690
    %v3699 = vadd.f32 %v3683, %v3691
    %v3700 = vadd.f32 %v3684, %v3692
    %v3701 = vadd.f32 %v3685, %v3693
    %v3702 = vtanh.pop %v3694
    %v3703 = vtanh.pop %v3695
    %v3704 = vtanh.pop %v3696
    %v3705 = vtanh.pop %v3697
    %v3706 = vtanh.pop %v3698
    %v3707 = vtanh.pop %v3699
    %v3708 = vtanh.pop %v3700
    %v3709 = vtanh.pop %v3701
    %v3710 = vmul.f32 %v3603, %v3702
    %v3711 = vmul.f32 %v3609, %v3703
    %v3712 = vmul.f32 %v3615, %v3704
    %v3713 = vmul.f32 %v3621, %v3705
    %v3714 = vmul.f32 %v3627, %v3706
    %v3715 = vmul.f32 %v3633, %v3707
    %v3716 = vmul.f32 %v3639, %v3708
    %v3717 = vmul.f32 %v3645, %v3709
    %v3718 = vpack.c.bf16 %v3710, %v3710
    %v3719 = vpack.c.bf16 %v3711, %v3711
    %v3720 = vpack.c.bf16 %v3712, %v3712
    %v3721 = vpack.c.bf16 %v3713, %v3713
    %v3722 = vpack.c.bf16 %v3714, %v3714
    %v3723 = vpack.c.bf16 %v3715, %v3715
    %v3724 = vpack.c.bf16 %v3716, %v3716
    %v3725 = vpack.c.bf16 %v3717, %v3717
    %vm3726 = vcmask 1043459
    %vm3727 = vsmask.f32 3328
    %vm3728 = vmand %vm3726, %vm3727
    %v3729 = vld [vmem:[%s4] sm:$0x8]
    %v3730 = vsel %vm3728, %v3718, %v3729
    %3731 = vst [vmem:[%s4] sm:$0x8] %v3730
    %v3732 = vld [vmem:[%s4 + $0x4] sm:$0x8]
    %v3733 = vsel %vm3728, %v3719, %v3732
    %3734 = vst [vmem:[%s4 + $0x4] sm:$0x8] %v3733
    %v3735 = vld [vmem:[%s4 + $0x8] sm:$0x8]
    %v3736 = vsel %vm3728, %v3720, %v3735
    %3737 = vst [vmem:[%s4 + $0x8] sm:$0x8] %v3736
    %v3738 = vld [vmem:[%s4 + $0xc] sm:$0x8]
    %v3739 = vsel %vm3728, %v3721, %v3738
    %3740 = vst [vmem:[%s4 + $0xc] sm:$0x8] %v3739
    %v3741 = vld [vmem:[%s4 + $0x10] sm:$0x8]
    %v3742 = vsel %vm3728, %v3722, %v3741
    %3743 = vst [vmem:[%s4 + $0x10] sm:$0x8] %v3742
    %v3744 = vld [vmem:[%s4 + $0x14] sm:$0x8]
    %v3745 = vsel %vm3728, %v3723, %v3744
    %3746 = vst [vmem:[%s4 + $0x14] sm:$0x8] %v3745
    %v3747 = vld [vmem:[%s4 + $0x18] sm:$0x8]
    %v3748 = vsel %vm3728, %v3724, %v3747
    %3749 = vst [vmem:[%s4 + $0x18] sm:$0x8] %v3748
    %v3750 = vld [vmem:[%s4 + $0x1c] sm:$0x8]
    %v3751 = vsel %vm3728, %v3725, %v3750
    %3752 = vst [vmem:[%s4 + $0x1c] sm:$0x8] %v3751
    %v3753 = vld [vmem:[%s0] sm:$0x88]
    %v3754 = vld [vmem:[%s0 + $0x8] sm:$0x88]
    %v3755 = vld [vmem:[%s0 + $0x10] sm:$0x88]
    %v3756 = vld [vmem:[%s0 + $0x18] sm:$0x88]
    %v3757 = vld [vmem:[%s0 + $0x20] sm:$0x88]
    %v3758 = vld [vmem:[%s0 + $0x28] sm:$0x88]
    %v3759 = vld [vmem:[%s0 + $0x30] sm:$0x88]
    %v3760 = vld [vmem:[%s0 + $0x38] sm:$0x88]
    %v3761 = vld [vmem:[%s0 + $0x40] sm:$0x88]
    %v3762 = vld [vmem:[%s0 + $0x48] sm:$0x88]
    %v3763 = vld [vmem:[%s0 + $0x50] sm:$0x88]
    %v3764 = vld [vmem:[%s0 + $0x58] sm:$0x88]
    %v3765 = vld [vmem:[%s0 + $0x60] sm:$0x88]
    %v3766 = vld [vmem:[%s0 + $0x68] sm:$0x88]
    %v3767 = vld [vmem:[%s0 + $0x70] sm:$0x88]
    %v3768 = vld [vmem:[%s0 + $0x78] sm:$0x88]
    %v3769 = vunpack.c.l.bf16 %v3753
    %v3770 = vunpack.c.h.bf16 %v3753
    %v3771 = vunpack.c.l.bf16 %v3754
    %v3772 = vunpack.c.h.bf16 %v3754
    %v3773 = vunpack.c.l.bf16 %v3755
    %v3774 = vunpack.c.h.bf16 %v3755
    %v3775 = vunpack.c.l.bf16 %v3756
    %v3776 = vunpack.c.h.bf16 %v3756
    %v3777 = vunpack.c.l.bf16 %v3757
    %v3778 = vunpack.c.h.bf16 %v3757
    %v3779 = vunpack.c.l.bf16 %v3758
    %v3780 = vunpack.c.h.bf16 %v3758
    %v3781 = vunpack.c.l.bf16 %v3759
    %v3782 = vunpack.c.h.bf16 %v3759
    %v3783 = vunpack.c.l.bf16 %v3760
    %v3784 = vunpack.c.h.bf16 %v3760
    %v3785 = vunpack.c.l.bf16 %v3761
    %v3786 = vunpack.c.h.bf16 %v3761
    %v3787 = vunpack.c.l.bf16 %v3762
    %v3788 = vunpack.c.h.bf16 %v3762
    %v3789 = vunpack.c.l.bf16 %v3763
    %v3790 = vunpack.c.h.bf16 %v3763
    %v3791 = vunpack.c.l.bf16 %v3764
    %v3792 = vunpack.c.h.bf16 %v3764
    %v3793 = vunpack.c.l.bf16 %v3765
    %v3794 = vunpack.c.h.bf16 %v3765
    %v3795 = vunpack.c.l.bf16 %v3766
    %v3796 = vunpack.c.h.bf16 %v3766
    %v3797 = vunpack.c.l.bf16 %v3767
    %v3798 = vunpack.c.h.bf16 %v3767
    %v3799 = vunpack.c.l.bf16 %v3768
    %v3800 = vunpack.c.h.bf16 %v3768
    %v3809 = vunpack.c.l.b16 %v3718
    %v3810 = vunpack.c.l.b16 %v3719
    %v3811 = vunpack.c.l.b16 %v3720
    %v3812 = vunpack.c.l.b16 %v3721
    %v3813 = vunpack.c.l.b16 %v3722
    %v3814 = vunpack.c.l.b16 %v3723
    %v3815 = vunpack.c.l.b16 %v3724
    %v3816 = vunpack.c.l.b16 %v3725
    %v3817 = vrot.slane %v3809, 6
    %v3818 = vrot.slane %v3810, 5
    %v3819 = vsel %vm760, %v3818, %v3817
    %v3820 = vrot.slane %v3811, 4
    %v3821 = vsel %vm763, %v3820, %v3819
    %v3822 = vrot.slane %v3812, 3
    %v3823 = vsel %vm766, %v3822, %v3821
    %v3824 = vrot.slane %v3813, 2
    %v3825 = vsel %vm769, %v3824, %v3823
    %v3826 = vrot.slane %v3814, 1
    %v3827 = vsel %vm772, %v3826, %v3825
    %v3828 = vsel %vm775, %v3815, %v3827
    %v3829 = vrot.slane %v3816, 7
    %v3830 = vsel %vm778, %v3829, %v3828
    %v3831 = vpack.c.b16 %v3830, %v3830
    %3833 = vmatprep.subr.bf16.mxu0 %v211
    %3834 = vmatpush1.bf16.msra.mxu0 %v210
    %3835 = vmatprep.subr.bf16.mxu0 %v215
    %3836 = vmatpush1.bf16.msra.mxu0 %v214
    %3837 = vmatprep.subr.bf16.mxu0 %v219
    %3838 = vmatpush1.bf16.msra.mxu0 %v218
    %3839 = vmatprep.subr.bf16.mxu0 %v223
    %3840 = vmatpush1.bf16.msra.mxu0 %v222
    %3841 = vmatprep.subr.bf16.mxu0 %v227
    %3842 = vmatpush1.bf16.msra.mxu0 %v226
    %3843 = vmatprep.subr.bf16.mxu0 %v231
    %3844 = vmatpush1.bf16.msra.mxu0 %v230
    %3845 = vmatprep.subr.bf16.mxu0 %v235
    %3846 = vmatpush1.bf16.msra.mxu0 %v234
    %3847 = vmatprep.subr.bf16.mxu0 %v239
    %3848 = vmatpush1.bf16.msra.mxu0 %v238
    %3849 = vmatprep.subr.bf16.mxu0 0
    %3850 = vmatpush1.bf16.msra.mxu0 0
    %3851 = vmatprep.subr.bf16.mxu0 0
    %3852 = vmatpush1.bf16.msra.mxu0 0
    %3853 = vmatprep.subr.bf16.mxu0 0
    %3854 = vmatpush1.bf16.msra.mxu0 0
    %3855 = vmatprep.subr.bf16.mxu0 0
    %3856 = vmatpush1.bf16.msra.mxu0 0
    %3857 = vmatprep.subr.bf16.mxu0 0
    %3858 = vmatpush1.bf16.msra.mxu0 0
    %3859 = vmatprep.subr.bf16.mxu0 0
    %3860 = vmatpush1.bf16.msra.mxu0 0
    %3861 = vmatprep.subr.bf16.mxu0 0
    %3862 = vmatpush1.bf16.msra.mxu0 0
    %3863 = vmatprep.subr.bf16.mxu0 0
    %3864 = vmatpush1.bf16.msra.mxu0 0
    %3865 = vmatprep.mubr.bf16.mxu0 0
    %3866 = vmatmul.mubr.bf16.gmra.mrb[0].mxu0 %v3831
    %v3867 = vpop.f32.mrb[0].mxu0
    %v3868 = vadd.f32 0.0, %v3867
    %v3869 = vpop.f32.mrb[0].mxu0
    %v3870 = vadd.f32 0.0, %v3869
    %v3871 = vpop.f32.mrb[0].mxu0
    %v3872 = vpop.f32.mrb[0].mxu0
    %3873 = vdwg.mxu0
    %3874 = vmatprep.subr.bf16.mxu0 %v213
    %3875 = vmatpush1.bf16.msra.mxu0 %v212
    %3876 = vmatprep.subr.bf16.mxu0 %v217
    %3877 = vmatpush1.bf16.msra.mxu0 %v216
    %3878 = vmatprep.subr.bf16.mxu0 %v221
    %3879 = vmatpush1.bf16.msra.mxu0 %v220
    %3880 = vmatprep.subr.bf16.mxu0 %v225
    %3881 = vmatpush1.bf16.msra.mxu0 %v224
    %3882 = vmatprep.subr.bf16.mxu0 %v229
    %3883 = vmatpush1.bf16.msra.mxu0 %v228
    %3884 = vmatprep.subr.bf16.mxu0 %v233
    %3885 = vmatpush1.bf16.msra.mxu0 %v232
    %3886 = vmatprep.subr.bf16.mxu0 %v237
    %3887 = vmatpush1.bf16.msra.mxu0 %v236
    %3888 = vmatprep.subr.bf16.mxu0 %v241
    %3889 = vmatpush1.bf16.msra.mxu0 %v240
    %3890 = vmatprep.subr.bf16.mxu0 0
    %3891 = vmatpush1.bf16.msra.mxu0 0
    %3892 = vmatprep.subr.bf16.mxu0 0
    %3893 = vmatpush1.bf16.msra.mxu0 0
    %3894 = vmatprep.subr.bf16.mxu0 0
    %3895 = vmatpush1.bf16.msra.mxu0 0
    %3896 = vmatprep.subr.bf16.mxu0 0
    %3897 = vmatpush1.bf16.msra.mxu0 0
    %3898 = vmatprep.subr.bf16.mxu0 0
    %3899 = vmatpush1.bf16.msra.mxu0 0
    %3900 = vmatprep.subr.bf16.mxu0 0
    %3901 = vmatpush1.bf16.msra.mxu0 0
    %3902 = vmatprep.subr.bf16.mxu0 0
    %3903 = vmatpush1.bf16.msra.mxu0 0
    %3904 = vmatprep.subr.bf16.mxu0 0
    %3905 = vmatpush1.bf16.msra.mxu0 0
    %3906 = vmatprep.mubr.bf16.mxu0 0
    %3907 = vmatmul.mubr.bf16.gmra.mrb[0].mxu0 %v3831
    %v3908 = vpop.f32.mrb[0].mxu0
    %v3909 = vadd.f32 0.0, %v3908
    %v3910 = vpop.f32.mrb[0].mxu0
    %v3911 = vadd.f32 0.0, %v3910
    %v3912 = vpop.f32.mrb[0].mxu0
    %v3913 = vpop.f32.mrb[0].mxu0
    %3914 = vdwg.mxu0
    %v3919 = vrot.slane %v3868, 1
    %v3920 = vrot.slane %v3870, 1
    %v3921 = vrot.slane %v3909, 1
    %v3922 = vrot.slane %v3911, 1
    %v3923 = vrot.slane %v3868, 2
    %v3924 = vrot.slane %v3870, 2
    %v3925 = vrot.slane %v3909, 2
    %v3926 = vrot.slane %v3911, 2
    %v3927 = vrot.slane %v3868, 3
    %v3928 = vrot.slane %v3870, 3
    %v3929 = vrot.slane %v3909, 3
    %v3930 = vrot.slane %v3911, 3
    %v3931 = vrot.slane %v3868, 4
    %v3932 = vrot.slane %v3870, 4
    %v3933 = vrot.slane %v3909, 4
    %v3934 = vrot.slane %v3911, 4
    %v3935 = vrot.slane %v3868, 5
    %v3936 = vrot.slane %v3870, 5
    %v3937 = vrot.slane %v3909, 5
    %v3938 = vrot.slane %v3911, 5
    %v3939 = vrot.slane %v3868, 6
    %v3940 = vrot.slane %v3870, 6
    %v3941 = vrot.slane %v3909, 6
    %v3942 = vrot.slane %v3911, 6
    %v3943 = vrot.slane %v3868, 7
    %v3944 = vrot.slane %v3870, 7
    %v3945 = vrot.slane %v3909, 7
    %v3946 = vrot.slane %v3911, 7
    %v3979 = vadd.f32 %v3769, %v3919
    %v3980 = vadd.f32 %v3770, %v3920
    %v3981 = vadd.f32 %v3771, %v3921
    %v3982 = vadd.f32 %v3772, %v3922
    %v3983 = vadd.f32 %v3773, %v3923
    %v3984 = vadd.f32 %v3774, %v3924
    %v3985 = vadd.f32 %v3775, %v3925
    %v3986 = vadd.f32 %v3776, %v3926
    %v3987 = vadd.f32 %v3777, %v3927
    %v3988 = vadd.f32 %v3778, %v3928
    %v3989 = vadd.f32 %v3779, %v3929
    %v3990 = vadd.f32 %v3780, %v3930
    %v3991 = vadd.f32 %v3781, %v3931
    %v3992 = vadd.f32 %v3782, %v3932
    %v3993 = vadd.f32 %v3783, %v3933
    %v3994 = vadd.f32 %v3784, %v3934
    %v3995 = vadd.f32 %v3785, %v3935
    %v3996 = vadd.f32 %v3786, %v3936
    %v3997 = vadd.f32 %v3787, %v3937
    %v3998 = vadd.f32 %v3788, %v3938
    %v3999 = vadd.f32 %v3789, %v3939
    %v4000 = vadd.f32 %v3790, %v3940
    %v4001 = vadd.f32 %v3791, %v3941
    %v4002 = vadd.f32 %v3792, %v3942
    %v4003 = vadd.f32 %v3793, %v3943
    %v4004 = vadd.f32 %v3794, %v3944
    %v4005 = vadd.f32 %v3795, %v3945
    %v4006 = vadd.f32 %v3796, %v3946
    %v4007 = vadd.f32 %v3797, %v3868
    %v4008 = vadd.f32 %v3798, %v3870
    %v4009 = vadd.f32 %v3799, %v3909
    %v4010 = vadd.f32 %v3800, %v3911
    %v4011 = vxor.u32 %v3979, 2147483648
    %v4012 = vxor.u32 %v3980, 2147483648
    %v4013 = vxor.u32 %v3981, 2147483648
    %v4014 = vxor.u32 %v3983, 2147483648
    %v4015 = vxor.u32 %v3984, 2147483648
    %v4016 = vxor.u32 %v3985, 2147483648
    %v4017 = vxor.u32 %v3987, 2147483648
    %v4018 = vxor.u32 %v3988, 2147483648
    %v4019 = vxor.u32 %v3989, 2147483648
    %v4020 = vxor.u32 %v3991, 2147483648
    %v4021 = vxor.u32 %v3992, 2147483648
    %v4022 = vxor.u32 %v3993, 2147483648
    %v4023 = vxor.u32 %v3995, 2147483648
    %v4024 = vxor.u32 %v3996, 2147483648
    %v4025 = vxor.u32 %v3997, 2147483648
    %v4026 = vxor.u32 %v3999, 2147483648
    %v4027 = vxor.u32 %v4000, 2147483648
    %v4028 = vxor.u32 %v4001, 2147483648
    %v4029 = vxor.u32 %v4003, 2147483648
    %v4030 = vxor.u32 %v4004, 2147483648
    %v4031 = vxor.u32 %v4005, 2147483648
    %v4032 = vxor.u32 %v4007, 2147483648
    %v4033 = vxor.u32 %v4008, 2147483648
    %v4034 = vxor.u32 %v4009, 2147483648
    %v4035 = vmul.f32 %v4011, 1.442695
    %v4036 = vpow.pop %v4035
    %v4037 = vmul.f32 %v4012, 1.442695
    %v4038 = vpow.pop %v4037
    %v4039 = vmul.f32 %v4013, 1.442695
    %v4040 = vpow.pop %v4039
    %v4041 = vmul.f32 %v4014, 1.442695
    %v4042 = vpow.pop %v4041
    %v4043 = vmul.f32 %v4015, 1.442695
    %v4044 = vpow.pop %v4043
    %v4045 = vmul.f32 %v4016, 1.442695
    %v4046 = vpow.pop %v4045
    %v4047 = vmul.f32 %v4017, 1.442695
    %v4048 = vpow.pop %v4047
    %v4049 = vmul.f32 %v4018, 1.442695
    %v4050 = vpow.pop %v4049
    %v4051 = vmul.f32 %v4019, 1.442695
    %v4052 = vpow.pop %v4051
    %v4053 = vmul.f32 %v4020, 1.442695
    %v4054 = vpow.pop %v4053
    %v4055 = vmul.f32 %v4021, 1.442695
    %v4056 = vpow.pop %v4055
    %v4057 = vmul.f32 %v4022, 1.442695
    %v4058 = vpow.pop %v4057
    %v4059 = vmul.f32 %v4023, 1.442695
    %v4060 = vpow.pop %v4059
    %v4061 = vmul.f32 %v4024, 1.442695
    %v4062 = vpow.pop %v4061
    %v4063 = vmul.f32 %v4025, 1.442695
    %v4064 = vpow.pop %v4063
    %v4065 = vmul.f32 %v4026, 1.442695
    %v4066 = vpow.pop %v4065
    %v4067 = vmul.f32 %v4027, 1.442695
    %v4068 = vpow.pop %v4067
    %v4069 = vmul.f32 %v4028, 1.442695
    %v4070 = vpow.pop %v4069
    %v4071 = vmul.f32 %v4029, 1.442695
    %v4072 = vpow.pop %v4071
    %v4073 = vmul.f32 %v4030, 1.442695
    %v4074 = vpow.pop %v4073
    %v4075 = vmul.f32 %v4031, 1.442695
    %v4076 = vpow.pop %v4075
    %v4077 = vmul.f32 %v4032, 1.442695
    %v4078 = vpow.pop %v4077
    %v4079 = vmul.f32 %v4033, 1.442695
    %v4080 = vpow.pop %v4079
    %v4081 = vmul.f32 %v4034, 1.442695
    %v4082 = vpow.pop %v4081
    %v4083 = vadd.f32 %v4036, 1.0
    %v4084 = vadd.f32 %v4038, 1.0
    %v4085 = vadd.f32 %v4040, 1.0
    %v4086 = vadd.f32 %v4042, 1.0
    %v4087 = vadd.f32 %v4044, 1.0
    %v4088 = vadd.f32 %v4046, 1.0
    %v4089 = vadd.f32 %v4048, 1.0
    %v4090 = vadd.f32 %v4050, 1.0
    %v4091 = vadd.f32 %v4052, 1.0
    %v4092 = vadd.f32 %v4054, 1.0
    %v4093 = vadd.f32 %v4056, 1.0
    %v4094 = vadd.f32 %v4058, 1.0
    %v4095 = vadd.f32 %v4060, 1.0
    %v4096 = vadd.f32 %v4062, 1.0
    %v4097 = vadd.f32 %v4064, 1.0
    %v4098 = vadd.f32 %v4066, 1.0
    %v4099 = vadd.f32 %v4068, 1.0
    %v4100 = vadd.f32 %v4070, 1.0
    %v4101 = vadd.f32 %v4072, 1.0
    %v4102 = vadd.f32 %v4074, 1.0
    %v4103 = vadd.f32 %v4076, 1.0
    %v4104 = vadd.f32 %v4078, 1.0
    %v4105 = vadd.f32 %v4080, 1.0
    %v4106 = vadd.f32 %v4082, 1.0
    %v4107 = vrcp.pop %v4083
    %v4108 = vmul.f32 1.0, %v4107
    %v4109 = vrcp.pop %v4084
    %v4110 = vmul.f32 1.0, %v4109
    %v4111 = vrcp.pop %v4085
    %v4112 = vmul.f32 1.0, %v4111
    %v4113 = vrcp.pop %v4086
    %v4114 = vmul.f32 1.0, %v4113
    %v4115 = vrcp.pop %v4087
    %v4116 = vmul.f32 1.0, %v4115
    %v4117 = vrcp.pop %v4088
    %v4118 = vmul.f32 1.0, %v4117
    %v4119 = vrcp.pop %v4089
    %v4120 = vmul.f32 1.0, %v4119
    %v4121 = vrcp.pop %v4090
    %v4122 = vmul.f32 1.0, %v4121
    %v4123 = vrcp.pop %v4091
    %v4124 = vmul.f32 1.0, %v4123
    %v4125 = vrcp.pop %v4092
    %v4126 = vmul.f32 1.0, %v4125
    %v4127 = vrcp.pop %v4093
    %v4128 = vmul.f32 1.0, %v4127
    %v4129 = vrcp.pop %v4094
    %v4130 = vmul.f32 1.0, %v4129
    %v4131 = vrcp.pop %v4095
    %v4132 = vmul.f32 1.0, %v4131
    %v4133 = vrcp.pop %v4096
    %v4134 = vmul.f32 1.0, %v4133
    %v4135 = vrcp.pop %v4097
    %v4136 = vmul.f32 1.0, %v4135
    %v4137 = vrcp.pop %v4098
    %v4138 = vmul.f32 1.0, %v4137
    %v4139 = vrcp.pop %v4099
    %v4140 = vmul.f32 1.0, %v4139
    %v4141 = vrcp.pop %v4100
    %v4142 = vmul.f32 1.0, %v4141
    %v4143 = vrcp.pop %v4101
    %v4144 = vmul.f32 1.0, %v4143
    %v4145 = vrcp.pop %v4102
    %v4146 = vmul.f32 1.0, %v4145
    %v4147 = vrcp.pop %v4103
    %v4148 = vmul.f32 1.0, %v4147
    %v4149 = vrcp.pop %v4104
    %v4150 = vmul.f32 1.0, %v4149
    %v4151 = vrcp.pop %v4105
    %v4152 = vmul.f32 1.0, %v4151
    %v4153 = vrcp.pop %v4106
    %v4154 = vmul.f32 1.0, %v4153
    %v4155 = vtanh.pop %v3982
    %v4156 = vtanh.pop %v3986
    %v4157 = vtanh.pop %v3990
    %v4158 = vtanh.pop %v3994
    %v4159 = vtanh.pop %v3998
    %v4160 = vtanh.pop %v4002
    %v4161 = vtanh.pop %v4006
    %v4162 = vtanh.pop %v4010
    %v4171 = vrot.slane %v3694, 7
    %v4172 = vrot.slane %v3695, 7
    %v4173 = vrot.slane %v3696, 7
    %v4174 = vrot.slane %v3697, 7
    %v4175 = vrot.slane %v3698, 7
    %v4176 = vrot.slane %v3699, 7
    %v4177 = vrot.slane %v3700, 7
    %v4178 = vrot.slane %v3701, 7
    %v4187 = vmul.f32 %v4110, %v4171
    %v4188 = vmul.f32 %v4116, %v4172
    %v4189 = vmul.f32 %v4122, %v4173
    %v4190 = vmul.f32 %v4128, %v4174
    %v4191 = vmul.f32 %v4134, %v4175
    %v4192 = vmul.f32 %v4140, %v4176
    %v4193 = vmul.f32 %v4146, %v4177
    %v4194 = vmul.f32 %v4152, %v4178
    %v4195 = vmul.f32 %v4108, %v4155
    %v4196 = vmul.f32 %v4114, %v4156
    %v4197 = vmul.f32 %v4120, %v4157
    %v4198 = vmul.f32 %v4126, %v4158
    %v4199 = vmul.f32 %v4132, %v4159
    %v4200 = vmul.f32 %v4138, %v4160
    %v4201 = vmul.f32 %v4144, %v4161
    %v4202 = vmul.f32 %v4150, %v4162
    %v4203 = vadd.f32 %v4187, %v4195
    %v4204 = vadd.f32 %v4188, %v4196
    %v4205 = vadd.f32 %v4189, %v4197
    %v4206 = vadd.f32 %v4190, %v4198
    %v4207 = vadd.f32 %v4191, %v4199
    %v4208 = vadd.f32 %v4192, %v4200
    %v4209 = vadd.f32 %v4193, %v4201
    %v4210 = vadd.f32 %v4194, %v4202
    %v4211 = vtanh.pop %v4203
    %v4212 = vtanh.pop %v4204
    %v4213 = vtanh.pop %v4205
    %v4214 = vtanh.pop %v4206
    %v4215 = vtanh.pop %v4207
    %v4216 = vtanh.pop %v4208
    %v4217 = vtanh.pop %v4209
    %v4218 = vtanh.pop %v4210
    %v4219 = vmul.f32 %v4112, %v4211
    %v4220 = vmul.f32 %v4118, %v4212
    %v4221 = vmul.f32 %v4124, %v4213
    %v4222 = vmul.f32 %v4130, %v4214
    %v4223 = vmul.f32 %v4136, %v4215
    %v4224 = vmul.f32 %v4142, %v4216
    %v4225 = vmul.f32 %v4148, %v4217
    %v4226 = vmul.f32 %v4154, %v4218
    %v4227 = vpack.c.bf16 %v4219, %v4219
    %v4228 = vpack.c.bf16 %v4220, %v4220
    %v4229 = vpack.c.bf16 %v4221, %v4221
    %v4230 = vpack.c.bf16 %v4222, %v4222
    %v4231 = vpack.c.bf16 %v4223, %v4223
    %v4232 = vpack.c.bf16 %v4224, %v4224
    %v4233 = vpack.c.bf16 %v4225, %v4225
    %v4234 = vpack.c.bf16 %v4226, %v4226
    %vm4235 = vsmask.f32 7950
    %vm4236 = vmand %vm3726, %vm4235
    %v4237 = vld [vmem:[%s4] sm:$0x8]
    %v4238 = vsel %vm4236, %v4227, %v4237
    %4239 = vst [vmem:[%s4] sm:$0x8] %v4238
    %v4240 = vld [vmem:[%s4 + $0x4] sm:$0x8]
    %v4241 = vsel %vm4236, %v4228, %v4240
    %4242 = vst [vmem:[%s4 + $0x4] sm:$0x8] %v4241
    %v4243 = vld [vmem:[%s4 + $0x8] sm:$0x8]
    %v4244 = vsel %vm4236, %v4229, %v4243
    %4245 = vst [vmem:[%s4 + $0x8] sm:$0x8] %v4244
    %v4246 = vld [vmem:[%s4 + $0xc] sm:$0x8]
    %v4247 = vsel %vm4236, %v4230, %v4246
    %4248 = vst [vmem:[%s4 + $0xc] sm:$0x8] %v4247
    %v4249 = vld [vmem:[%s4 + $0x10] sm:$0x8]
    %v4250 = vsel %vm4236, %v4231, %v4249
    %4251 = vst [vmem:[%s4 + $0x10] sm:$0x8] %v4250
    %v4252 = vld [vmem:[%s4 + $0x14] sm:$0x8]
    %v4253 = vsel %vm4236, %v4232, %v4252
    %4254 = vst [vmem:[%s4 + $0x14] sm:$0x8] %v4253
    %v4255 = vld [vmem:[%s4 + $0x18] sm:$0x8]
    %v4256 = vsel %vm4236, %v4233, %v4255
    %4257 = vst [vmem:[%s4 + $0x18] sm:$0x8] %v4256
    %v4258 = vld [vmem:[%s4 + $0x1c] sm:$0x8]
    %v4259 = vsel %vm4236, %v4234, %v4258
    %4260 = vst [vmem:[%s4 + $0x1c] sm:$0x8] %v4259
    %v4269 = vrot.slane %v4220, 7
    %v4270 = vrot.slane %v4221, 6
    %v4271 = vsel %vm760, %v4270, %v4269
    %v4272 = vrot.slane %v4222, 5
    %v4273 = vsel %vm763, %v4272, %v4271
    %v4274 = vrot.slane %v4223, 4
    %v4275 = vsel %vm766, %v4274, %v4273
    %v4276 = vrot.slane %v4224, 3
    %v4277 = vsel %vm769, %v4276, %v4275
    %v4278 = vrot.slane %v4225, 2
    %v4279 = vsel %vm772, %v4278, %v4277
    %v4280 = vrot.slane %v4226, 1
    %v4281 = vsel %vm775, %v4280, %v4279
    %4284 = vst [vmem:[#allocation2 - $0x7] sm:$0x80] %v4219
    %4285 = vst [vmem:[#allocation2 + $0x1] sm:$0x7f] %v4281
    %v4294 = vrot.slane %v4204, 7
    %v4295 = vrot.slane %v4205, 6
    %v4296 = vsel %vm760, %v4295, %v4294
    %v4297 = vrot.slane %v4206, 5
    %v4298 = vsel %vm763, %v4297, %v4296
    %v4299 = vrot.slane %v4207, 4
    %v4300 = vsel %vm766, %v4299, %v4298
    %v4301 = vrot.slane %v4208, 3
    %v4302 = vsel %vm769, %v4301, %v4300
    %v4303 = vrot.slane %v4209, 2
    %v4304 = vsel %vm772, %v4303, %v4302
    %v4305 = vrot.slane %v4210, 1
    %v4306 = vsel %vm775, %v4305, %v4304
    %4309 = vst [vmem:[#allocation3 - $0x7] sm:$0x80] %v4203
    %4310 = vst [vmem:[#allocation3 + $0x1] sm:$0x7f] %v4306
    // Predicated region
    $region22: #{rnn_module_forward.4} parent=1 // pred_check
      %p4311 = pneg %p23
    $region23: #{rnn_module_forward.4} parent=1 // pred_check_branch
      %4313 = sbr.rel (%p4311) target = $region25
    $region24: #{rnn_module_forward.4} parent=1 // pred_region
      %4314 = vst [vmem:[#allocation4 - $0x7] sm:$0x80] %v4219
      %4315 = vst [vmem:[#allocation4 + $0x1] sm:$0x7f] %v4281
      %4316 = vst [vmem:[#allocation6 - $0x7] sm:$0x80] %v4203
      %4317 = vst [vmem:[#allocation6 + $0x1] sm:$0x7f] %v4306
    $region25: #{rnn_module_forward.4} parent=1 // pred_fallthru
      _
    // Predicated region
    $region26: #{rnn_module_forward.4} parent=1 // pred_check
      _
    $region27: #{rnn_module_forward.4} parent=1 // pred_check_branch
      %4319 = sbr.rel (0) target = $region29
    $region28: #{rnn_module_forward.4} parent=1 // pred_region
      _
    $region29: #{rnn_module_forward.4} parent=1 // pred_fallthru
      _
    // Predicated region
    $region30: #{rnn_module_forward.4} parent=1 // pred_check
      _
    $region31: #{rnn_module_forward.4} parent=1 // pred_check_branch
      %4321 = sbr.rel (0) target = $region33
    $region32: #{rnn_module_forward.4} parent=1 // pred_region
      %s4323 = ssub.s32 128, 128
      %4324 = vsyncadd [#allocation5], %s4323
      %s4326 = sshll.u32 [#allocation4], 4
      %s4327 = int_to_ptr.vmem [resolvable:$true] %s4326
      %4329 = dma.vmem_to_hbm [thread:$0]  %s4327, 128, %s5, [#allocation5]
    $region33: #{rnn_module_forward.4} parent=1 // pred_fallthru
      _
    // Predicated region
    $region34: #{rnn_module_forward.4} parent=1 // pred_check
      _
    $region35: #{rnn_module_forward.4} parent=1 // pred_check_branch
      %4331 = sbr.rel (0) target = $region37
    $region36: #{rnn_module_forward.4} parent=1 // pred_region
      %s4333 = ssub.s32 128, 128
      %4334 = vsyncadd [#allocation7], %s4333
      %s4336 = sshll.u32 [#allocation6], 4
      %s4337 = int_to_ptr.vmem [resolvable:$true] %s4336
      %4339 = dma.vmem_to_hbm [thread:$0]  %s4337, 128, %s6, [#allocation7]
    $region37: #{rnn_module_forward.4} parent=1 // pred_fallthru
      _
    // Predicated region
    $region38: #{rnn_module_forward.4} parent=1 // pred_check
      _
    $region39: #{rnn_module_forward.4} parent=1 // pred_check_branch
      %4341 = sbr.rel (0) target = $region41
    $region40: #{rnn_module_forward.4} parent=1 // pred_region
      _
    $region41: #{rnn_module_forward.4} parent=1 // pred_fallthru
      _
    // Predicated region
    $region42: #{rnn_module_forward.4} parent=1 // pred_check
      _
    $region43: #{rnn_module_forward.4} parent=1 // pred_check_branch
      %4343 = sbr.rel (0) target = $region45
    $region44: #{rnn_module_forward.4} parent=1 // pred_region
      %4344 = dma.done [#allocation5], 128
    $region45: #{rnn_module_forward.4} parent=1 // pred_fallthru
      _
    // Predicated region
    $region46: #{rnn_module_forward.4} parent=1 // pred_check
      _
    $region47: #{rnn_module_forward.4} parent=1 // pred_check_branch
      %4346 = sbr.rel (0) target = $region49
    $region48: #{rnn_module_forward.4} parent=1 // pred_region
      %4347 = dma.done [#allocation7], 128
    $region49: #{rnn_module_forward.4} parent=1 // pred_fallthru
      _
    %4348 = vsyncpa [#allocation5], 1
    %4349 = vsyncpa [#allocation7], 1

</llo_original>
